<compile_context>
chip_gen: v7x
topology: tpu7x:2x2x1
jax: 0.10.0
libtpu: 0.0.40
codegen_flags: <defaults>
</compile_context>

<pallas_src>
import functools
import math

import jax
import jax.numpy as jnp
from jax import lax
from jax.experimental import pallas as pl
from jax.experimental.pallas import tpu as pltpu

# ---- small synthetic BERT config (config.hidden_size -> HIDDEN, len(self.act) -> NUM_ACTS) ----
VOCAB = 100
HIDDEN = 32
HEADS = 4
HEAD_DIM = HIDDEN // HEADS
INTER = 64
LAYERS = 2
MAX_POS = 64
NUM_ACTS = 8           # len(sorted(act['esc'].keys())) — ESConv-style strategy set
CLS_PAD = 128          # classifier logits padded to one full 128-lane row (lane-dense store)
LN_EPS = 1e-12


def _ln(x, g, b):
    mu = jnp.mean(x, axis=-1, keepdims=True)
    xc = x - mu
    var = jnp.mean(xc * xc, axis=-1, keepdims=True)
    return xc * lax.rsqrt(var + LN_EPS) * g + b


def _gelu(x):
    # TODO(synk): HF BERT/RoBERTa default to exact erf GELU; tanh approximation diverges slightly.
    return 0.5 * x * (1.0 + jnp.tanh(0.7978845608028654 * (x + 0.044715 * x * x * x)))


def _bf16(x):
    return x.astype(jnp.bfloat16)


# ---------------- fused whole-forward Pallas kernel (one grid step = one batch item) ----------
def _ppdpp_kernel(ids_ref, negmask_ref, pos_ref, type_ref, wemb_ref, eg_ref, eb_ref,
                  wq_ref, wk_ref, wv_ref, bq_ref, bk_ref, bv_ref,
                  wo_ref, bo_ref, ln1g_ref, ln1b_ref,
                  f1w_ref, f1b_ref, f2w_ref, f2b_ref, ln2g_ref, ln2b_ref,
                  pw_ref, pb_ref, cw_ref, cb_ref,
                  *rest, seq, mode):
    if mode == "loss":
        labels_ref, out_ref, tok_ref = rest
    else:
        out_ref, tok_ref = rest

    b = pl.program_id(0)
    scale = 1.0 / math.sqrt(HEAD_DIM)

    # ---- fused BERT embedding: word-row gather (+ position + token-type) + LayerNorm ----
    for i in range(seq):                                     # S dynamic row loads from VMEM table
        tok_ref[pl.ds(i, 1), :] = wemb_ref[ids_ref[b, i]]    # (1, H)
    h = tok_ref[...] + pos_ref[...] + type_ref[...]          # (S, H) f32
    h = _ln(h, eg_ref[...], eb_ref[...])

    add_mask = negmask_ref[...]                              # (1, 1, S): 0 valid / -10000 padded

    for l in range(LAYERS):                                  # static unroll
        # ---- self-attention: heads batched on a leading axis, canonical batched matmuls ----
        hb = jnp.broadcast_to(_bf16(h), (HEADS, seq, HIDDEN))               # (N, S, H) bf16
        q = lax.dot_general(hb, wq_ref[l], (((2,), (1,)), ((0,), (0,))),
                            preferred_element_type=jnp.float32) + bq_ref[l]  # (N, S, D)
        k = lax.dot_general(hb, wk_ref[l], (((2,), (1,)), ((0,), (0,))),
                            preferred_element_type=jnp.float32) + bk_ref[l]
        v = lax.dot_general(hb, wv_ref[l], (((2,), (1,)), ((0,), (0,))),
                            preferred_element_type=jnp.float32) + bv_ref[l]
        # scores: 'nqd,nkd->nqk'  (mask in f32, HF-style -10000 additive)
        s = lax.dot_general(_bf16(q), _bf16(k), (((2,), (2,)), ((0,), (0,))),
                            preferred_element_type=jnp.float32) * scale + add_mask
        s = s - jnp.max(s, axis=-1, keepdims=True)
        e = jnp.exp(s)
        p = e * pl.reciprocal(jnp.sum(e, axis=-1, keepdims=True), approx=True)
        # context: 'nqk,nkd->nqd'
        ctx = lax.dot_general(_bf16(p), _bf16(v), (((2,), (1,)), ((0,), (0,))),
                              preferred_element_type=jnp.float32)            # (N, S, D)
        # per-head output projection 'nsd,ndh->nsh', then sum over heads (no concat/slices)
        out_h = lax.dot_general(_bf16(ctx), wo_ref[l], (((2,), (1,)), ((0,), (0,))),
                                preferred_element_type=jnp.float32)          # (N, S, H)
        attn = jnp.sum(out_h, axis=0) + bo_ref[l]                            # (S, H)
        h = _ln(attn + h, ln1g_ref[l], ln1b_ref[l])

        # ---- feed-forward ----
        ff = jnp.dot(_bf16(h), f1w_ref[l], preferred_element_type=jnp.float32) + f1b_ref[l]
        ff = _gelu(ff)
        ff = jnp.dot(_bf16(ff), f2w_ref[l], preferred_element_type=jnp.float32) + f2b_ref[l]
        h = _ln(ff + h, ln2g_ref[l], ln2b_ref[l])

    # ---- BertPooler: [CLS] is statically row 0 of this batch item ----
    cls = h[0:1, :]                                                          # (1, H)
    pooled = jnp.tanh(jnp.dot(_bf16(cls), pw_ref[...],
                              preferred_element_type=jnp.float32) + pb_ref[...])
    # nn.Dropout(0.5): eval-mode identity.
    # TODO(synk): training-mode dropout mask sampling intentionally not modeled.
    logits = jnp.dot(_bf16(pooled), cw_ref[...],
                     preferred_element_type=jnp.float32) + cb_ref[...]       # (1, 128) lane-dense

    lane = lax.broadcasted_iota(jnp.int32, (1, CLS_PAD), 1)
    z = jnp.where(lane < NUM_ACTS, logits, -1e30)            # mask padded classifier lanes

    if mode == "loss":
        # per-item NLL; CrossEntropyLoss mean-reduction happens outside the kernel
        m = jnp.max(z, axis=-1, keepdims=True)
        lse = jnp.log(jnp.sum(jnp.exp(z - m), axis=-1, keepdims=True)) + m
        logp = logits - lse
        picked = jnp.sum(jnp.where(lane == labels_ref[b], logp, 0.0),
                         axis=-1, keepdims=True)             # (1, 1)
        out_ref[...] = jnp.broadcast_to(-picked, (1, 1, CLS_PAD))
    else:
        # F.softmax(logits, dim=-1); exact divide keeps sum-to-1 tight, padded lanes underflow to 0
        z = z - jnp.max(z, axis=-1, keepdims=True)
        e = jnp.exp(z)
        out_ref[...] = (e / jnp.sum(e, axis=-1, keepdims=True)).reshape(1, 1, CLS_PAD)


# ---------------- deterministic parameter init (per-layer / per-head stacks) ----------------
def init_params(key):
    def w(k, shape):
        return jax.random.normal(k, shape, jnp.float32) * 0.02

    ks = iter(jax.random.split(key, 12))
    cls_w = jnp.zeros((HIDDEN, CLS_PAD), jnp.float32).at[:, :NUM_ACTS].set(
        w(next(ks), (HIDDEN, NUM_ACTS)))
    return {
        # embeddings + LayerNorm params stay f32 (elementwise math kept in f32)
        "word_emb": w(next(ks), (VOCAB, 1, HIDDEN)),       # (V, 1, H): leading-axis row gather
        "pos_emb": w(next(ks), (MAX_POS, HIDDEN)),
        "type_emb": w(next(ks), (1, HIDDEN)),              # token_type_ids == 0 row
        "emb_ln_g": jnp.ones((1, HIDDEN), jnp.float32),
        "emb_ln_b": jnp.zeros((1, HIDDEN), jnp.float32),
        # per-layer, per-head weight stacks; MXU operands pre-cast to bf16
        "wq": _bf16(w(next(ks), (LAYERS, HEADS, HIDDEN, HEAD_DIM))),
        "wk": _bf16(w(next(ks), (LAYERS, HEADS, HIDDEN, HEAD_DIM))),
        "wv": _bf16(w(next(ks), (LAYERS, HEADS, HIDDEN, HEAD_DIM))),
        "bq": jnp.zeros((LAYERS, HEADS, 1, HEAD_DIM), jnp.float32),
        "bk": jnp.zeros((LAYERS, HEADS, 1, HEAD_DIM), jnp.float32),
        "bv": jnp.zeros((LAYERS, HEADS, 1, HEAD_DIM), jnp.float32),
        "wo": _bf16(w(next(ks), (LAYERS, HEADS, HEAD_DIM, HIDDEN))),
        "bo": jnp.zeros((LAYERS, 1, HIDDEN), jnp.float32),
        "ln1_g": jnp.ones((LAYERS, 1, HIDDEN), jnp.float32),
        "ln1_b": jnp.zeros((LAYERS, 1, HIDDEN), jnp.float32),
        "ff1_w": _bf16(w(next(ks), (LAYERS, HIDDEN, INTER))),
        "ff1_b": jnp.zeros((LAYERS, 1, INTER), jnp.float32),
        "ff2_w": _bf16(w(next(ks), (LAYERS, INTER, HIDDEN))),
        "ff2_b": jnp.zeros((LAYERS, 1, HIDDEN), jnp.float32),
        "ln2_g": jnp.ones((LAYERS, 1, HIDDEN), jnp.float32),
        "ln2_b": jnp.zeros((LAYERS, 1, HIDDEN), jnp.float32),
        "pool_w": _bf16(w(next(ks), (HIDDEN, HIDDEN))),
        "pool_b": jnp.zeros((1, HIDDEN), jnp.float32),
        # classifier padded lane-dense to 128 output lanes (real classes = NUM_ACTS)
        "cls_w": _bf16(cls_w),
        "cls_b": jnp.zeros((1, CLS_PAD), jnp.float32),
    }


# ---------------- PPDPP.forward(input_ids, attention_mask, labels=None) ----------------
def ppdpp_forward(params, input_ids, attention_mask, labels=None):
    B, S = input_ids.shape
    ids = input_ids.astype(jnp.int32)
    # HF-style additive key mask, precomputed host-side (tiny, input-independent given the mask)
    neg_mask = ((1.0 - attention_mask.astype(jnp.float32)) * -10000.0).reshape(B, 1, S)
    pos = params["pos_emb"][:S]

    inputs = [ids, neg_mask, pos, params["type_emb"], params["word_emb"],
              params["emb_ln_g"], params["emb_ln_b"],
              params["wq"], params["wk"], params["wv"],
              params["bq"], params["bk"], params["bv"],
              params["wo"], params["bo"], params["ln1_g"], params["ln1_b"],
              params["ff1_w"], params["ff1_b"], params["ff2_w"], params["ff2_b"],
              params["ln2_g"], params["ln2_b"],
              params["pool_w"], params["pool_b"], params["cls_w"], params["cls_b"]]

    vmem = pl.BlockSpec(memory_space=pltpu.MemorySpace.VMEM)
    smem = pl.BlockSpec(memory_space=pltpu.MemorySpace.SMEM)
    in_specs = ([smem,                                             # input_ids -> SMEM scalars
                 pl.BlockSpec((1, 1, S), lambda b: (b, 0, 0))]     # per-item additive key mask
                + [vmem] * (len(inputs) - 2))                      # weights: whole-array VMEM

    mode = "probs" if labels is None else "loss"
    if mode == "loss":
        inputs.append(labels.astype(jnp.int32).reshape(B))
        in_specs.append(smem)                                      # labels -> SMEM scalars

    out = pl.pallas_call(
        functools.partial(_ppdpp_kernel, seq=S, mode=mode),
        grid=(B,),
        in_specs=in_specs,
        out_specs=pl.BlockSpec((1, 1, CLS_PAD), lambda b: (b, 0, 0)),
        out_shape=jax.ShapeDtypeStruct((B, 1, CLS_PAD), jnp.float32),
        scratch_shapes=[pltpu.VMEM((S, HIDDEN), jnp.float32)],     # gathered token embeddings
        compiler_params=pltpu.CompilerParams(
            dimension_semantics=("parallel",)),                    # v7x: batch across both TCs
    )(*inputs)

    out = out.reshape(B, CLS_PAD)
    if mode == "loss":
        return jnp.mean(out[:, 0])                # CrossEntropyLoss(reduction='mean')
    return out[:, :NUM_ACTS]                      # softmax over the NUM_ACTS real classes


if __name__ == "__main__":
    key = jax.random.PRNGKey(0)
    kp, kid = jax.random.split(key)
    params = init_params(kp)

    B, S = 2, 8
    input_ids = jax.random.randint(kid, (B, S), 0, VOCAB, dtype=jnp.int32)
    attention_mask = jnp.ones((B, S), jnp.int32).at[1, 6:].set(0)

    fwd = jax.jit(ppdpp_forward)

    probs = jax.block_until_ready(fwd(params, input_ids, attention_mask))
    assert probs.shape == (B, NUM_ACTS)
    assert bool(jnp.all(jnp.isfinite(probs)))
    assert bool(jnp.all(jnp.abs(jnp.sum(probs, axis=-1) - 1.0) < 1e-4))

    loss = jax.block_until_ready(
        fwd(params, input_ids, attention_mask, jnp.array([1, 3], dtype=jnp.int32)))
    assert bool(jnp.isfinite(loss))

    print("KERNEL_OK")
</pallas_src>

<mosaic_0001>
module attributes {stable_mosaic.version = 11 : i64} {
  func.func @_ppdpp_kernel(%arg0: i32, %arg1: memref<2x8xi32, #tpu.memory_space<smem>>, %arg2: memref<1x1x8xf32, #tpu.memory_space<vmem>>, %arg3: memref<8x32xf32, #tpu.memory_space<vmem>>, %arg4: memref<1x32xf32, #tpu.memory_space<vmem>>, %arg5: memref<100x1x32xf32, #tpu.memory_space<vmem>>, %arg6: memref<1x32xf32, #tpu.memory_space<vmem>>, %arg7: memref<1x32xf32, #tpu.memory_space<vmem>>, %arg8: memref<2x4x32x8xbf16, #tpu.memory_space<vmem>>, %arg9: memref<2x4x32x8xbf16, #tpu.memory_space<vmem>>, %arg10: memref<2x4x32x8xbf16, #tpu.memory_space<vmem>>, %arg11: memref<2x4x1x8xf32, #tpu.memory_space<vmem>>, %arg12: memref<2x4x1x8xf32, #tpu.memory_space<vmem>>, %arg13: memref<2x4x1x8xf32, #tpu.memory_space<vmem>>, %arg14: memref<2x4x8x32xbf16, #tpu.memory_space<vmem>>, %arg15: memref<2x1x32xf32, #tpu.memory_space<vmem>>, %arg16: memref<2x1x32xf32, #tpu.memory_space<vmem>>, %arg17: memref<2x1x32xf32, #tpu.memory_space<vmem>>, %arg18: memref<2x32x64xbf16, #tpu.memory_space<vmem>>, %arg19: memref<2x1x64xf32, #tpu.memory_space<vmem>>, %arg20: memref<2x64x32xbf16, #tpu.memory_space<vmem>>, %arg21: memref<2x1x32xf32, #tpu.memory_space<vmem>>, %arg22: memref<2x1x32xf32, #tpu.memory_space<vmem>>, %arg23: memref<2x1x32xf32, #tpu.memory_space<vmem>>, %arg24: memref<32x32xbf16, #tpu.memory_space<vmem>>, %arg25: memref<1x32xf32, #tpu.memory_space<vmem>>, %arg26: memref<32x128xbf16, #tpu.memory_space<vmem>>, %arg27: memref<1x128xf32, #tpu.memory_space<vmem>>, %arg28: memref<1x1x128xf32, #tpu.memory_space<vmem>>, %arg29: memref<8x32xf32, #tpu.memory_space<vmem>>) attributes {dimension_semantics = [#tpu.dimension_semantics<parallel>], iteration_bounds = array<i64: 2>, scalar_prefetch = 0 : i64, scratch_operands = 1 : i64, tpu.core_type = #tpu.core_type<tc>, window_params = [{transform_indices = @transform_0, window_bounds = array<i64: 2, 8>}, {transform_indices = @transform_1, window_bounds = array<i64: 1, 1, 8>}, {pipeline_mode = #tpu.pipeline_mode<synchronous>, transform_indices = @transform_2, window_bounds = array<i64: 8, 32>}, {pipeline_mode = #tpu.pipeline_mode<synchronous>, transform_indices = @transform_3, window_bounds = array<i64: 1, 32>}, {pipeline_mode = #tpu.pipeline_mode<synchronous>, transform_indices = @transform_4, window_bounds = array<i64: 100, 1, 32>}, {pipeline_mode = #tpu.pipeline_mode<synchronous>, transform_indices = @transform_5, window_bounds = array<i64: 1, 32>}, {pipeline_mode = #tpu.pipeline_mode<synchronous>, transform_indices = @transform_6, window_bounds = array<i64: 1, 32>}, {pipeline_mode = #tpu.pipeline_mode<synchronous>, transform_indices = @transform_7, window_bounds = array<i64: 2, 4, 32, 8>}, {pipeline_mode = #tpu.pipeline_mode<synchronous>, transform_indices = @transform_8, window_bounds = array<i64: 2, 4, 32, 8>}, {pipeline_mode = #tpu.pipeline_mode<synchronous>, transform_indices = @transform_9, window_bounds = array<i64: 2, 4, 32, 8>}, {pipeline_mode = #tpu.pipeline_mode<synchronous>, transform_indices = @transform_10, window_bounds = array<i64: 2, 4, 1, 8>}, {pipeline_mode = #tpu.pipeline_mode<synchronous>, transform_indices = @transform_11, window_bounds = array<i64: 2, 4, 1, 8>}, {pipeline_mode = #tpu.pipeline_mode<synchronous>, transform_indices = @transform_12, window_bounds = array<i64: 2, 4, 1, 8>}, {pipeline_mode = #tpu.pipeline_mode<synchronous>, transform_indices = @transform_13, window_bounds = array<i64: 2, 4, 8, 32>}, {pipeline_mode = #tpu.pipeline_mode<synchronous>, transform_indices = @transform_14, window_bounds = array<i64: 2, 1, 32>}, {pipeline_mode = #tpu.pipeline_mode<synchronous>, transform_indices = @transform_15, window_bounds = array<i64: 2, 1, 32>}, {pipeline_mode = #tpu.pipeline_mode<synchronous>, transform_indices = @transform_16, window_bounds = array<i64: 2, 1, 32>}, {pipeline_mode = #tpu.pipeline_mode<synchronous>, transform_indices = @transform_17, window_bounds = array<i64: 2, 32, 64>}, {pipeline_mode = #tpu.pipeline_mode<synchronous>, transform_indices = @transform_18, window_bounds = array<i64: 2, 1, 64>}, {pipeline_mode = #tpu.pipeline_mode<synchronous>, transform_indices = @transform_19, window_bounds = array<i64: 2, 64, 32>}, {pipeline_mode = #tpu.pipeline_mode<synchronous>, transform_indices = @transform_20, window_bounds = array<i64: 2, 1, 32>}, {pipeline_mode = #tpu.pipeline_mode<synchronous>, transform_indices = @transform_21, window_bounds = array<i64: 2, 1, 32>}, {pipeline_mode = #tpu.pipeline_mode<synchronous>, transform_indices = @transform_22, window_bounds = array<i64: 2, 1, 32>}, {pipeline_mode = #tpu.pipeline_mode<synchronous>, transform_indices = @transform_23, window_bounds = array<i64: 32, 32>}, {pipeline_mode = #tpu.pipeline_mode<synchronous>, transform_indices = @transform_24, window_bounds = array<i64: 1, 32>}, {pipeline_mode = #tpu.pipeline_mode<synchronous>, transform_indices = @transform_25, window_bounds = array<i64: 32, 128>}, {pipeline_mode = #tpu.pipeline_mode<synchronous>, transform_indices = @transform_26, window_bounds = array<i64: 1, 128>}, {transform_indices = @transform_27, window_bounds = array<i64: 1, 1, 128>}]} {
    %0 = arith.index_cast %arg0 : i32 to index
    %c0 = arith.constant 0 : index
    %1 = memref.load %arg1[%0, %c0] : memref<2x8xi32, #tpu.memory_space<smem>>
    %2 = arith.index_cast %1 : i32 to index
    %c0_0 = arith.constant 0 : index
    %c0_1 = arith.constant 0 : index
    %3 = vector.load %arg5[%2, %c0_0, %c0_1] : memref<100x1x32xf32, #tpu.memory_space<vmem>>, vector<1x1x32xf32>
    %4 = vector.shape_cast %3 : vector<1x1x32xf32> to vector<1x32xf32>
    %c0_2 = arith.constant 0 : index
    %c0_3 = arith.constant 0 : index
    %5 = vector.load %arg29[%c0_2, %c0_3] : memref<8x32xf32, #tpu.memory_space<vmem>>, vector<1x32xf32>
    tpu.vector_store %arg29[%c0_2, %c0_3], %4 {strides = array<i32>} : memref<8x32xf32, #tpu.memory_space<vmem>>, vector<1x32xf32>,
    %6 = arith.index_cast %arg0 : i32 to index
    %c1 = arith.constant 1 : index
    %7 = memref.load %arg1[%6, %c1] : memref<2x8xi32, #tpu.memory_space<smem>>
    %8 = arith.index_cast %7 : i32 to index
    %c0_4 = arith.constant 0 : index
    %c0_5 = arith.constant 0 : index
    %9 = vector.load %arg5[%8, %c0_4, %c0_5] : memref<100x1x32xf32, #tpu.memory_space<vmem>>, vector<1x1x32xf32>
    %10 = vector.shape_cast %9 : vector<1x1x32xf32> to vector<1x32xf32>
    %c1_6 = arith.constant 1 : index
    %c0_7 = arith.constant 0 : index
    %11 = vector.load %arg29[%c1_6, %c0_7] : memref<8x32xf32, #tpu.memory_space<vmem>>, vector<1x32xf32>
    tpu.vector_store %arg29[%c1_6, %c0_7], %10 {strides = array<i32>} : memref<8x32xf32, #tpu.memory_space<vmem>>, vector<1x32xf32>,
    %12 = arith.index_cast %arg0 : i32 to index
    %c2 = arith.constant 2 : index
    %13 = memref.load %arg1[%12, %c2] : memref<2x8xi32, #tpu.memory_space<smem>>
    %14 = arith.index_cast %13 : i32 to index
    %c0_8 = arith.constant 0 : index
    %c0_9 = arith.constant 0 : index
    %15 = vector.load %arg5[%14, %c0_8, %c0_9] : memref<100x1x32xf32, #tpu.memory_space<vmem>>, vector<1x1x32xf32>
    %16 = vector.shape_cast %15 : vector<1x1x32xf32> to vector<1x32xf32>
    %c2_10 = arith.constant 2 : index
    %c0_11 = arith.constant 0 : index
    %17 = vector.load %arg29[%c2_10, %c0_11] : memref<8x32xf32, #tpu.memory_space<vmem>>, vector<1x32xf32>
    tpu.vector_store %arg29[%c2_10, %c0_11], %16 {strides = array<i32>} : memref<8x32xf32, #tpu.memory_space<vmem>>, vector<1x32xf32>,
    %18 = arith.index_cast %arg0 : i32 to index
    %c3 = arith.constant 3 : index
    %19 = memref.load %arg1[%18, %c3] : memref<2x8xi32, #tpu.memory_space<smem>>
    %20 = arith.index_cast %19 : i32 to index
    %c0_12 = arith.constant 0 : index
    %c0_13 = arith.constant 0 : index
    %21 = vector.load %arg5[%20, %c0_12, %c0_13] : memref<100x1x32xf32, #tpu.memory_space<vmem>>, vector<1x1x32xf32>
    %22 = vector.shape_cast %21 : vector<1x1x32xf32> to vector<1x32xf32>
    %c3_14 = arith.constant 3 : index
    %c0_15 = arith.constant 0 : index
    %23 = vector.load %arg29[%c3_14, %c0_15] : memref<8x32xf32, #tpu.memory_space<vmem>>, vector<1x32xf32>
    tpu.vector_store %arg29[%c3_14, %c0_15], %22 {strides = array<i32>} : memref<8x32xf32, #tpu.memory_space<vmem>>, vector<1x32xf32>,
    %24 = arith.index_cast %arg0 : i32 to index
    %c4 = arith.constant 4 : index
    %25 = memref.load %arg1[%24, %c4] : memref<2x8xi32, #tpu.memory_space<smem>>
    %26 = arith.index_cast %25 : i32 to index
    %c0_16 = arith.constant 0 : index
    %c0_17 = arith.constant 0 : index
    %27 = vector.load %arg5[%26, %c0_16, %c0_17] : memref<100x1x32xf32, #tpu.memory_space<vmem>>, vector<1x1x32xf32>
    %28 = vector.shape_cast %27 : vector<1x1x32xf32> to vector<1x32xf32>
    %c4_18 = arith.constant 4 : index
    %c0_19 = arith.constant 0 : index
    %29 = vector.load %arg29[%c4_18, %c0_19] : memref<8x32xf32, #tpu.memory_space<vmem>>, vector<1x32xf32>
    tpu.vector_store %arg29[%c4_18, %c0_19], %28 {strides = array<i32>} : memref<8x32xf32, #tpu.memory_space<vmem>>, vector<1x32xf32>,
    %30 = arith.index_cast %arg0 : i32 to index
    %c5 = arith.constant 5 : index
    %31 = memref.load %arg1[%30, %c5] : memref<2x8xi32, #tpu.memory_space<smem>>
    %32 = arith.index_cast %31 : i32 to index
    %c0_20 = arith.constant 0 : index
    %c0_21 = arith.constant 0 : index
    %33 = vector.load %arg5[%32, %c0_20, %c0_21] : memref<100x1x32xf32, #tpu.memory_space<vmem>>, vector<1x1x32xf32>
    %34 = vector.shape_cast %33 : vector<1x1x32xf32> to vector<1x32xf32>
    %c5_22 = arith.constant 5 : index
    %c0_23 = arith.constant 0 : index
    %35 = vector.load %arg29[%c5_22, %c0_23] : memref<8x32xf32, #tpu.memory_space<vmem>>, vector<1x32xf32>
    tpu.vector_store %arg29[%c5_22, %c0_23], %34 {strides = array<i32>} : memref<8x32xf32, #tpu.memory_space<vmem>>, vector<1x32xf32>,
    %36 = arith.index_cast %arg0 : i32 to index
    %c6 = arith.constant 6 : index
    %37 = memref.load %arg1[%36, %c6] : memref<2x8xi32, #tpu.memory_space<smem>>
    %38 = arith.index_cast %37 : i32 to index
    %c0_24 = arith.constant 0 : index
    %c0_25 = arith.constant 0 : index
    %39 = vector.load %arg5[%38, %c0_24, %c0_25] : memref<100x1x32xf32, #tpu.memory_space<vmem>>, vector<1x1x32xf32>
    %40 = vector.shape_cast %39 : vector<1x1x32xf32> to vector<1x32xf32>
    %c6_26 = arith.constant 6 : index
    %c0_27 = arith.constant 0 : index
    %41 = vector.load %arg29[%c6_26, %c0_27] : memref<8x32xf32, #tpu.memory_space<vmem>>, vector<1x32xf32>
    tpu.vector_store %arg29[%c6_26, %c0_27], %40 {strides = array<i32>} : memref<8x32xf32, #tpu.memory_space<vmem>>, vector<1x32xf32>,
    %42 = arith.index_cast %arg0 : i32 to index
    %c7 = arith.constant 7 : index
    %43 = memref.load %arg1[%42, %c7] : memref<2x8xi32, #tpu.memory_space<smem>>
    %44 = arith.index_cast %43 : i32 to index
    %c0_28 = arith.constant 0 : index
    %c0_29 = arith.constant 0 : index
    %45 = vector.load %arg5[%44, %c0_28, %c0_29] : memref<100x1x32xf32, #tpu.memory_space<vmem>>, vector<1x1x32xf32>
    %46 = vector.shape_cast %45 : vector<1x1x32xf32> to vector<1x32xf32>
    %c7_30 = arith.constant 7 : index
    %c0_31 = arith.constant 0 : index
    %47 = vector.load %arg29[%c7_30, %c0_31] : memref<8x32xf32, #tpu.memory_space<vmem>>, vector<1x32xf32>
    tpu.vector_store %arg29[%c7_30, %c0_31], %46 {strides = array<i32>} : memref<8x32xf32, #tpu.memory_space<vmem>>, vector<1x32xf32>,
    %c0_32 = arith.constant 0 : index
    %c0_33 = arith.constant 0 : index
    %48 = vector.load %arg29[%c0_32, %c0_33] : memref<8x32xf32, #tpu.memory_space<vmem>>, vector<8x32xf32>
    %c0_34 = arith.constant 0 : index
    %c0_35 = arith.constant 0 : index
    %49 = vector.load %arg3[%c0_34, %c0_35] : memref<8x32xf32, #tpu.memory_space<vmem>>, vector<8x32xf32>
    %50 = arith.addf %48, %49 : vector<8x32xf32>
    %c0_36 = arith.constant 0 : index
    %c0_37 = arith.constant 0 : index
    %51 = vector.load %arg4[%c0_36, %c0_37] : memref<1x32xf32, #tpu.memory_space<vmem>>, vector<1x32xf32>
    %52 = vector.broadcast %51 : vector<1x32xf32> to vector<8x32xf32>
    %53 = arith.addf %50, %52 : vector<8x32xf32>
    %c0_38 = arith.constant 0 : index
    %c0_39 = arith.constant 0 : index
    %54 = vector.load %arg6[%c0_38, %c0_39] : memref<1x32xf32, #tpu.memory_space<vmem>>, vector<1x32xf32>
    %c0_40 = arith.constant 0 : index
    %c0_41 = arith.constant 0 : index
    %55 = vector.load %arg7[%c0_40, %c0_41] : memref<1x32xf32, #tpu.memory_space<vmem>>, vector<1x32xf32>
    %cst = arith.constant dense<0.000000e+00> : vector<8xf32>
    %56 = vector.multi_reduction <add>, %53, %cst [1] : vector<8x32xf32> to vector<8xf32>
    %57 = vector.shape_cast %56 : vector<8xf32> to vector<8x1xf32>
    %cst_42 = arith.constant 3.200000e+01 : f32
    %58 = vector.broadcast %cst_42 : f32 to vector<8x1xf32>
    %59 = arith.divf %57, %58 : vector<8x1xf32>
    %60 = vector.broadcast %59 : vector<8x1xf32> to vector<8x32xf32>
    %61 = arith.subf %53, %60 : vector<8x32xf32>
    %62 = arith.mulf %61, %61 : vector<8x32xf32>
    %cst_43 = arith.constant dense<0.000000e+00> : vector<8xf32>
    %63 = vector.multi_reduction <add>, %62, %cst_43 [1] : vector<8x32xf32> to vector<8xf32>
    %64 = vector.shape_cast %63 : vector<8xf32> to vector<8x1xf32>
    %cst_44 = arith.constant 3.200000e+01 : f32
    %65 = vector.broadcast %cst_44 : f32 to vector<8x1xf32>
    %66 = arith.divf %64, %65 : vector<8x1xf32>
    %cst_45 = arith.constant 9.99999996E-13 : f32
    %67 = vector.broadcast %cst_45 : f32 to vector<8x1xf32>
    %68 = arith.addf %66, %67 : vector<8x1xf32>
    %69 = math.rsqrt %68 : vector<8x1xf32>
    %70 = vector.broadcast %69 : vector<8x1xf32> to vector<8x32xf32>
    %71 = arith.mulf %61, %70 : vector<8x32xf32>
    %72 = vector.broadcast %54 : vector<1x32xf32> to vector<8x32xf32>
    %73 = arith.mulf %71, %72 : vector<8x32xf32>
    %74 = vector.broadcast %55 : vector<1x32xf32> to vector<8x32xf32>
    %75 = arith.addf %73, %74 : vector<8x32xf32>
    %c0_46 = arith.constant 0 : index
    %c0_47 = arith.constant 0 : index
    %c0_48 = arith.constant 0 : index
    %76 = vector.load %arg2[%c0_46, %c0_47, %c0_48] : memref<1x1x8xf32, #tpu.memory_space<vmem>>, vector<1x1x8xf32>
    %77 = arith.truncf %75 : vector<8x32xf32> to vector<8x32xbf16>
    %78 = vector.shape_cast %77 : vector<8x32xbf16> to vector<1x8x32xbf16>
    %79 = vector.broadcast %78 : vector<1x8x32xbf16> to vector<4x8x32xbf16>
    %c0_49 = arith.constant 0 : index
    %c0_50 = arith.constant 0 : index
    %c0_51 = arith.constant 0 : index
    %c0_52 = arith.constant 0 : index
    %80 = vector.load %arg8[%c0_49, %c0_50, %c0_51, %c0_52] : memref<2x4x32x8xbf16, #tpu.memory_space<vmem>>, vector<1x4x32x8xbf16>
    %81 = vector.shape_cast %80 : vector<1x4x32x8xbf16> to vector<4x32x8xbf16>
    %cst_53 = arith.constant dense<0.000000e+00> : vector<4x8x8xf32>
    %82 = tpu.matmul %79, %81, %cst_53 {dimension_numbers = #tpu.dot_dimension_numbers<[2], [1], [1], [2], [0, 0, 0, 1, 1, 2], [0], [0]>} : vector<4x8x32xbf16>, vector<4x32x8xbf16>, vector<4x8x8xf32> -> vector<4x8x8xf32>
    %c0_54 = arith.constant 0 : index
    %c0_55 = arith.constant 0 : index
    %c0_56 = arith.constant 0 : index
    %c0_57 = arith.constant 0 : index
    %83 = vector.load %arg11[%c0_54, %c0_55, %c0_56, %c0_57] : memref<2x4x1x8xf32, #tpu.memory_space<vmem>>, vector<1x4x1x8xf32>
    %84 = vector.shape_cast %83 : vector<1x4x1x8xf32> to vector<4x1x8xf32>
    %85 = vector.broadcast %84 : vector<4x1x8xf32> to vector<4x8x8xf32>
    %86 = arith.addf %82, %85 : vector<4x8x8xf32>
    %c0_58 = arith.constant 0 : index
    %c0_59 = arith.constant 0 : index
    %c0_60 = arith.constant 0 : index
    %c0_61 = arith.constant 0 : index
    %87 = vector.load %arg9[%c0_58, %c0_59, %c0_60, %c0_61] : memref<2x4x32x8xbf16, #tpu.memory_space<vmem>>, vector<1x4x32x8xbf16>
    %88 = vector.shape_cast %87 : vector<1x4x32x8xbf16> to vector<4x32x8xbf16>
    %cst_62 = arith.constant dense<0.000000e+00> : vector<4x8x8xf32>
    %89 = tpu.matmul %79, %88, %cst_62 {dimension_numbers = #tpu.dot_dimension_numbers<[2], [1], [1], [2], [0, 0, 0, 1, 1, 2], [0], [0]>} : vector<4x8x32xbf16>, vector<4x32x8xbf16>, vector<4x8x8xf32> -> vector<4x8x8xf32>
    %c0_63 = arith.constant 0 : index
    %c0_64 = arith.constant 0 : index
    %c0_65 = arith.constant 0 : index
    %c0_66 = arith.constant 0 : index
    %90 = vector.load %arg12[%c0_63, %c0_64, %c0_65, %c0_66] : memref<2x4x1x8xf32, #tpu.memory_space<vmem>>, vector<1x4x1x8xf32>
    %91 = vector.shape_cast %90 : vector<1x4x1x8xf32> to vector<4x1x8xf32>
    %92 = vector.broadcast %91 : vector<4x1x8xf32> to vector<4x8x8xf32>
    %93 = arith.addf %89, %92 : vector<4x8x8xf32>
    %c0_67 = arith.constant 0 : index
    %c0_68 = arith.constant 0 : index
    %c0_69 = arith.constant 0 : index
    %c0_70 = arith.constant 0 : index
    %94 = vector.load %arg10[%c0_67, %c0_68, %c0_69, %c0_70] : memref<2x4x32x8xbf16, #tpu.memory_space<vmem>>, vector<1x4x32x8xbf16>
    %95 = vector.shape_cast %94 : vector<1x4x32x8xbf16> to vector<4x32x8xbf16>
    %cst_71 = arith.constant dense<0.000000e+00> : vector<4x8x8xf32>
    %96 = tpu.matmul %79, %95, %cst_71 {dimension_numbers = #tpu.dot_dimension_numbers<[2], [1], [1], [2], [0, 0, 0, 1, 1, 2], [0], [0]>} : vector<4x8x32xbf16>, vector<4x32x8xbf16>, vector<4x8x8xf32> -> vector<4x8x8xf32>
    %c0_72 = arith.constant 0 : index
    %c0_73 = arith.constant 0 : index
    %c0_74 = arith.constant 0 : index
    %c0_75 = arith.constant 0 : index
    %97 = vector.load %arg13[%c0_72, %c0_73, %c0_74, %c0_75] : memref<2x4x1x8xf32, #tpu.memory_space<vmem>>, vector<1x4x1x8xf32>
    %98 = vector.shape_cast %97 : vector<1x4x1x8xf32> to vector<4x1x8xf32>
    %99 = vector.broadcast %98 : vector<4x1x8xf32> to vector<4x8x8xf32>
    %100 = arith.addf %96, %99 : vector<4x8x8xf32>
    %101 = arith.truncf %86 : vector<4x8x8xf32> to vector<4x8x8xbf16>
    %102 = arith.truncf %93 : vector<4x8x8xf32> to vector<4x8x8xbf16>
    %cst_76 = arith.constant dense<0.000000e+00> : vector<4x8x8xf32>
    %103 = tpu.matmul %101, %102, %cst_76 {dimension_numbers = #tpu.dot_dimension_numbers<[2], [2], [1], [1], [0, 0, 0, 1, 1, 1], [0], [0]>} : vector<4x8x8xbf16>, vector<4x8x8xbf16>, vector<4x8x8xf32> -> vector<4x8x8xf32>
    %cst_77 = arith.constant 0.353553385 : f32
    %104 = vector.broadcast %cst_77 : f32 to vector<4x8x8xf32>
    %105 = arith.mulf %103, %104 : vector<4x8x8xf32>
    %106 = vector.broadcast %76 : vector<1x1x8xf32> to vector<4x8x8xf32>
    %107 = arith.addf %105, %106 : vector<4x8x8xf32>
    %cst_78 = arith.constant dense<0xFF800000> : vector<4x8xf32>
    %108 = vector.multi_reduction <maximumf>, %107, %cst_78 [2] : vector<4x8x8xf32> to vector<4x8xf32>
    %109 = vector.shape_cast %108 : vector<4x8xf32> to vector<4x8x1xf32>
    %110 = vector.broadcast %109 : vector<4x8x1xf32> to vector<4x8x8xf32>
    %111 = arith.subf %107, %110 : vector<4x8x8xf32>
    %112 = math.exp %111 : vector<4x8x8xf32>
    %cst_79 = arith.constant dense<0.000000e+00> : vector<4x8xf32>
    %113 = vector.multi_reduction <add>, %112, %cst_79 [2] : vector<4x8x8xf32> to vector<4x8xf32>
    %114 = vector.shape_cast %113 : vector<4x8xf32> to vector<4x8x1xf32>
    %115 = tpu.reciprocal %114 {approx = true} : vector<4x8x1xf32> -> vector<4x8x1xf32>
    %116 = vector.broadcast %115 : vector<4x8x1xf32> to vector<4x8x8xf32>
    %117 = arith.mulf %112, %116 : vector<4x8x8xf32>
    %118 = arith.truncf %117 : vector<4x8x8xf32> to vector<4x8x8xbf16>
    %119 = arith.truncf %100 : vector<4x8x8xf32> to vector<4x8x8xbf16>
    %cst_80 = arith.constant dense<0.000000e+00> : vector<4x8x8xf32>
    %120 = tpu.matmul %118, %119, %cst_80 {dimension_numbers = #tpu.dot_dimension_numbers<[2], [1], [1], [2], [0, 0, 0, 1, 1, 2], [0], [0]>} : vector<4x8x8xbf16>, vector<4x8x8xbf16>, vector<4x8x8xf32> -> vector<4x8x8xf32>
    %121 = arith.truncf %120 : vector<4x8x8xf32> to vector<4x8x8xbf16>
    %c0_81 = arith.constant 0 : index
    %c0_82 = arith.constant 0 : index
    %c0_83 = arith.constant 0 : index
    %c0_84 = arith.constant 0 : index
    %122 = vector.load %arg14[%c0_81, %c0_82, %c0_83, %c0_84] : memref<2x4x8x32xbf16, #tpu.memory_space<vmem>>, vector<1x4x8x32xbf16>
    %123 = vector.shape_cast %122 : vector<1x4x8x32xbf16> to vector<4x8x32xbf16>
    %cst_85 = arith.constant dense<0.000000e+00> : vector<4x8x32xf32>
    %124 = tpu.matmul %121, %123, %cst_85 {dimension_numbers = #tpu.dot_dimension_numbers<[2], [1], [1], [2], [0, 0, 0, 1, 1, 2], [0], [0]>} : vector<4x8x8xbf16>, vector<4x8x32xbf16>, vector<4x8x32xf32> -> vector<4x8x32xf32>
    %cst_86 = arith.constant dense<0.000000e+00> : vector<8x32xf32>
    %125 = vector.multi_reduction <add>, %124, %cst_86 [0] : vector<4x8x32xf32> to vector<8x32xf32>
    %c0_87 = arith.constant 0 : index
    %c0_88 = arith.constant 0 : index
    %c0_89 = arith.constant 0 : index
    %126 = vector.load %arg15[%c0_87, %c0_88, %c0_89] : memref<2x1x32xf32, #tpu.memory_space<vmem>>, vector<1x1x32xf32>
    %127 = vector.shape_cast %126 : vector<1x1x32xf32> to vector<1x32xf32>
    %128 = vector.broadcast %127 : vector<1x32xf32> to vector<8x32xf32>
    %129 = arith.addf %125, %128 : vector<8x32xf32>
    %130 = arith.addf %129, %75 : vector<8x32xf32>
    %c0_90 = arith.constant 0 : index
    %c0_91 = arith.constant 0 : index
    %c0_92 = arith.constant 0 : index
    %131 = vector.load %arg16[%c0_90, %c0_91, %c0_92] : memref<2x1x32xf32, #tpu.memory_space<vmem>>, vector<1x1x32xf32>
    %132 = vector.shape_cast %131 : vector<1x1x32xf32> to vector<1x32xf32>
    %c0_93 = arith.constant 0 : index
    %c0_94 = arith.constant 0 : index
    %c0_95 = arith.constant 0 : index
    %133 = vector.load %arg17[%c0_93, %c0_94, %c0_95] : memref<2x1x32xf32, #tpu.memory_space<vmem>>, vector<1x1x32xf32>
    %134 = vector.shape_cast %133 : vector<1x1x32xf32> to vector<1x32xf32>
    %cst_96 = arith.constant dense<0.000000e+00> : vector<8xf32>
    %135 = vector.multi_reduction <add>, %130, %cst_96 [1] : vector<8x32xf32> to vector<8xf32>
    %136 = vector.shape_cast %135 : vector<8xf32> to vector<8x1xf32>
    %cst_97 = arith.constant 3.200000e+01 : f32
    %137 = vector.broadcast %cst_97 : f32 to vector<8x1xf32>
    %138 = arith.divf %136, %137 : vector<8x1xf32>
    %139 = vector.broadcast %138 : vector<8x1xf32> to vector<8x32xf32>
    %140 = arith.subf %130, %139 : vector<8x32xf32>
    %141 = arith.mulf %140, %140 : vector<8x32xf32>
    %cst_98 = arith.constant dense<0.000000e+00> : vector<8xf32>
    %142 = vector.multi_reduction <add>, %141, %cst_98 [1] : vector<8x32xf32> to vector<8xf32>
    %143 = vector.shape_cast %142 : vector<8xf32> to vector<8x1xf32>
    %cst_99 = arith.constant 3.200000e+01 : f32
    %144 = vector.broadcast %cst_99 : f32 to vector<8x1xf32>
    %145 = arith.divf %143, %144 : vector<8x1xf32>
    %cst_100 = arith.constant 9.99999996E-13 : f32
    %146 = vector.broadcast %cst_100 : f32 to vector<8x1xf32>
    %147 = arith.addf %145, %146 : vector<8x1xf32>
    %148 = math.rsqrt %147 : vector<8x1xf32>
    %149 = vector.broadcast %148 : vector<8x1xf32> to vector<8x32xf32>
    %150 = arith.mulf %140, %149 : vector<8x32xf32>
    %151 = vector.broadcast %132 : vector<1x32xf32> to vector<8x32xf32>
    %152 = arith.mulf %150, %151 : vector<8x32xf32>
    %153 = vector.broadcast %134 : vector<1x32xf32> to vector<8x32xf32>
    %154 = arith.addf %152, %153 : vector<8x32xf32>
    %155 = arith.truncf %154 : vector<8x32xf32> to vector<8x32xbf16>
    %c0_101 = arith.constant 0 : index
    %c0_102 = arith.constant 0 : index
    %c0_103 = arith.constant 0 : index
    %156 = vector.load %arg18[%c0_101, %c0_102, %c0_103] : memref<2x32x64xbf16, #tpu.memory_space<vmem>>, vector<1x32x64xbf16>
    %157 = vector.shape_cast %156 : vector<1x32x64xbf16> to vector<32x64xbf16>
    %cst_104 = arith.constant dense<0.000000e+00> : vector<8x64xf32>
    %158 = tpu.matmul %155, %157, %cst_104 {dimension_numbers = #tpu.dot_dimension_numbers<[1], [0], [0], [1], [0, 0, 1, 1], [], []>} : vector<8x32xbf16>, vector<32x64xbf16>, vector<8x64xf32> -> vector<8x64xf32>
    %c0_105 = arith.constant 0 : index
    %c0_106 = arith.constant 0 : index
    %c0_107 = arith.constant 0 : index
    %159 = vector.load %arg19[%c0_105, %c0_106, %c0_107] : memref<2x1x64xf32, #tpu.memory_space<vmem>>, vector<1x1x64xf32>
    %160 = vector.shape_cast %159 : vector<1x1x64xf32> to vector<1x64xf32>
    %161 = vector.broadcast %160 : vector<1x64xf32> to vector<8x64xf32>
    %162 = arith.addf %158, %161 : vector<8x64xf32>
    %cst_108 = arith.constant 5.000000e-01 : f32
    %163 = vector.broadcast %cst_108 : f32 to vector<8x64xf32>
    %164 = arith.mulf %163, %162 : vector<8x64xf32>
    %cst_109 = arith.constant 4.471500e-02 : f32
    %165 = vector.broadcast %cst_109 : f32 to vector<8x64xf32>
    %166 = arith.mulf %165, %162 : vector<8x64xf32>
    %167 = arith.mulf %166, %162 : vector<8x64xf32>
    %168 = arith.mulf %167, %162 : vector<8x64xf32>
    %169 = arith.addf %162, %168 : vector<8x64xf32>
    %cst_110 = arith.constant 0.797884583 : f32
    %170 = vector.broadcast %cst_110 : f32 to vector<8x64xf32>
    %171 = arith.mulf %170, %169 : vector<8x64xf32>
    %172 = math.tanh %171 : vector<8x64xf32>
    %cst_111 = arith.constant 1.000000e+00 : f32
    %173 = vector.broadcast %cst_111 : f32 to vector<8x64xf32>
    %174 = arith.addf %173, %172 : vector<8x64xf32>
    %175 = arith.mulf %164, %174 : vector<8x64xf32>
    %176 = arith.truncf %175 : vector<8x64xf32> to vector<8x64xbf16>
    %c0_112 = arith.constant 0 : index
    %c0_113 = arith.constant 0 : index
    %c0_114 = arith.constant 0 : index
    %177 = vector.load %arg20[%c0_112, %c0_113, %c0_114] : memref<2x64x32xbf16, #tpu.memory_space<vmem>>, vector<1x64x32xbf16>
    %178 = vector.shape_cast %177 : vector<1x64x32xbf16> to vector<64x32xbf16>
    %cst_115 = arith.constant dense<0.000000e+00> : vector<8x32xf32>
    %179 = tpu.matmul %176, %178, %cst_115 {dimension_numbers = #tpu.dot_dimension_numbers<[1], [0], [0], [1], [0, 0, 1, 1], [], []>} : vector<8x64xbf16>, vector<64x32xbf16>, vector<8x32xf32> -> vector<8x32xf32>
    %c0_116 = arith.constant 0 : index
    %c0_117 = arith.constant 0 : index
    %c0_118 = arith.constant 0 : index
    %180 = vector.load %arg21[%c0_116, %c0_117, %c0_118] : memref<2x1x32xf32, #tpu.memory_space<vmem>>, vector<1x1x32xf32>
    %181 = vector.shape_cast %180 : vector<1x1x32xf32> to vector<1x32xf32>
    %182 = vector.broadcast %181 : vector<1x32xf32> to vector<8x32xf32>
    %183 = arith.addf %179, %182 : vector<8x32xf32>
    %184 = arith.addf %183, %154 : vector<8x32xf32>
    %c0_119 = arith.constant 0 : index
    %c0_120 = arith.constant 0 : index
    %c0_121 = arith.constant 0 : index
    %185 = vector.load %arg22[%c0_119, %c0_120, %c0_121] : memref<2x1x32xf32, #tpu.memory_space<vmem>>, vector<1x1x32xf32>
    %186 = vector.shape_cast %185 : vector<1x1x32xf32> to vector<1x32xf32>
    %c0_122 = arith.constant 0 : index
    %c0_123 = arith.constant 0 : index
    %c0_124 = arith.constant 0 : index
    %187 = vector.load %arg23[%c0_122, %c0_123, %c0_124] : memref<2x1x32xf32, #tpu.memory_space<vmem>>, vector<1x1x32xf32>
    %188 = vector.shape_cast %187 : vector<1x1x32xf32> to vector<1x32xf32>
    %cst_125 = arith.constant dense<0.000000e+00> : vector<8xf32>
    %189 = vector.multi_reduction <add>, %184, %cst_125 [1] : vector<8x32xf32> to vector<8xf32>
    %190 = vector.shape_cast %189 : vector<8xf32> to vector<8x1xf32>
    %cst_126 = arith.constant 3.200000e+01 : f32
    %191 = vector.broadcast %cst_126 : f32 to vector<8x1xf32>
    %192 = arith.divf %190, %191 : vector<8x1xf32>
    %193 = vector.broadcast %192 : vector<8x1xf32> to vector<8x32xf32>
    %194 = arith.subf %184, %193 : vector<8x32xf32>
    %195 = arith.mulf %194, %194 : vector<8x32xf32>
    %cst_127 = arith.constant dense<0.000000e+00> : vector<8xf32>
    %196 = vector.multi_reduction <add>, %195, %cst_127 [1] : vector<8x32xf32> to vector<8xf32>
    %197 = vector.shape_cast %196 : vector<8xf32> to vector<8x1xf32>
    %cst_128 = arith.constant 3.200000e+01 : f32
    %198 = vector.broadcast %cst_128 : f32 to vector<8x1xf32>
    %199 = arith.divf %197, %198 : vector<8x1xf32>
    %cst_129 = arith.constant 9.99999996E-13 : f32
    %200 = vector.broadcast %cst_129 : f32 to vector<8x1xf32>
    %201 = arith.addf %199, %200 : vector<8x1xf32>
    %202 = math.rsqrt %201 : vector<8x1xf32>
    %203 = vector.broadcast %202 : vector<8x1xf32> to vector<8x32xf32>
    %204 = arith.mulf %194, %203 : vector<8x32xf32>
    %205 = vector.broadcast %186 : vector<1x32xf32> to vector<8x32xf32>
    %206 = arith.mulf %204, %205 : vector<8x32xf32>
    %207 = vector.broadcast %188 : vector<1x32xf32> to vector<8x32xf32>
    %208 = arith.addf %206, %207 : vector<8x32xf32>
    %209 = arith.truncf %208 : vector<8x32xf32> to vector<8x32xbf16>
    %210 = vector.shape_cast %209 : vector<8x32xbf16> to vector<1x8x32xbf16>
    %211 = vector.broadcast %210 : vector<1x8x32xbf16> to vector<4x8x32xbf16>
    %c1_130 = arith.constant 1 : index
    %c0_131 = arith.constant 0 : index
    %c0_132 = arith.constant 0 : index
    %c0_133 = arith.constant 0 : index
    %212 = vector.load %arg8[%c1_130, %c0_131, %c0_132, %c0_133] : memref<2x4x32x8xbf16, #tpu.memory_space<vmem>>, vector<1x4x32x8xbf16>
    %213 = vector.shape_cast %212 : vector<1x4x32x8xbf16> to vector<4x32x8xbf16>
    %cst_134 = arith.constant dense<0.000000e+00> : vector<4x8x8xf32>
    %214 = tpu.matmul %211, %213, %cst_134 {dimension_numbers = #tpu.dot_dimension_numbers<[2], [1], [1], [2], [0, 0, 0, 1, 1, 2], [0], [0]>} : vector<4x8x32xbf16>, vector<4x32x8xbf16>, vector<4x8x8xf32> -> vector<4x8x8xf32>
    %c1_135 = arith.constant 1 : index
    %c0_136 = arith.constant 0 : index
    %c0_137 = arith.constant 0 : index
    %c0_138 = arith.constant 0 : index
    %215 = vector.load %arg11[%c1_135, %c0_136, %c0_137, %c0_138] : memref<2x4x1x8xf32, #tpu.memory_space<vmem>>, vector<1x4x1x8xf32>
    %216 = vector.shape_cast %215 : vector<1x4x1x8xf32> to vector<4x1x8xf32>
    %217 = vector.broadcast %216 : vector<4x1x8xf32> to vector<4x8x8xf32>
    %218 = arith.addf %214, %217 : vector<4x8x8xf32>
    %c1_139 = arith.constant 1 : index
    %c0_140 = arith.constant 0 : index
    %c0_141 = arith.constant 0 : index
    %c0_142 = arith.constant 0 : index
    %219 = vector.load %arg9[%c1_139, %c0_140, %c0_141, %c0_142] : memref<2x4x32x8xbf16, #tpu.memory_space<vmem>>, vector<1x4x32x8xbf16>
    %220 = vector.shape_cast %219 : vector<1x4x32x8xbf16> to vector<4x32x8xbf16>
    %cst_143 = arith.constant dense<0.000000e+00> : vector<4x8x8xf32>
    %221 = tpu.matmul %211, %220, %cst_143 {dimension_numbers = #tpu.dot_dimension_numbers<[2], [1], [1], [2], [0, 0, 0, 1, 1, 2], [0], [0]>} : vector<4x8x32xbf16>, vector<4x32x8xbf16>, vector<4x8x8xf32> -> vector<4x8x8xf32>
    %c1_144 = arith.constant 1 : index
    %c0_145 = arith.constant 0 : index
    %c0_146 = arith.constant 0 : index
    %c0_147 = arith.constant 0 : index
    %222 = vector.load %arg12[%c1_144, %c0_145, %c0_146, %c0_147] : memref<2x4x1x8xf32, #tpu.memory_space<vmem>>, vector<1x4x1x8xf32>
    %223 = vector.shape_cast %222 : vector<1x4x1x8xf32> to vector<4x1x8xf32>
    %224 = vector.broadcast %223 : vector<4x1x8xf32> to vector<4x8x8xf32>
    %225 = arith.addf %221, %224 : vector<4x8x8xf32>
    %c1_148 = arith.constant 1 : index
    %c0_149 = arith.constant 0 : index
    %c0_150 = arith.constant 0 : index
    %c0_151 = arith.constant 0 : index
    %226 = vector.load %arg10[%c1_148, %c0_149, %c0_150, %c0_151] : memref<2x4x32x8xbf16, #tpu.memory_space<vmem>>, vector<1x4x32x8xbf16>
    %227 = vector.shape_cast %226 : vector<1x4x32x8xbf16> to vector<4x32x8xbf16>
    %cst_152 = arith.constant dense<0.000000e+00> : vector<4x8x8xf32>
    %228 = tpu.matmul %211, %227, %cst_152 {dimension_numbers = #tpu.dot_dimension_numbers<[2], [1], [1], [2], [0, 0, 0, 1, 1, 2], [0], [0]>} : vector<4x8x32xbf16>, vector<4x32x8xbf16>, vector<4x8x8xf32> -> vector<4x8x8xf32>
    %c1_153 = arith.constant 1 : index
    %c0_154 = arith.constant 0 : index
    %c0_155 = arith.constant 0 : index
    %c0_156 = arith.constant 0 : index
    %229 = vector.load %arg13[%c1_153, %c0_154, %c0_155, %c0_156] : memref<2x4x1x8xf32, #tpu.memory_space<vmem>>, vector<1x4x1x8xf32>
    %230 = vector.shape_cast %229 : vector<1x4x1x8xf32> to vector<4x1x8xf32>
    %231 = vector.broadcast %230 : vector<4x1x8xf32> to vector<4x8x8xf32>
    %232 = arith.addf %228, %231 : vector<4x8x8xf32>
    %233 = arith.truncf %218 : vector<4x8x8xf32> to vector<4x8x8xbf16>
    %234 = arith.truncf %225 : vector<4x8x8xf32> to vector<4x8x8xbf16>
    %cst_157 = arith.constant dense<0.000000e+00> : vector<4x8x8xf32>
    %235 = tpu.matmul %233, %234, %cst_157 {dimension_numbers = #tpu.dot_dimension_numbers<[2], [2], [1], [1], [0, 0, 0, 1, 1, 1], [0], [0]>} : vector<4x8x8xbf16>, vector<4x8x8xbf16>, vector<4x8x8xf32> -> vector<4x8x8xf32>
    %cst_158 = arith.constant 0.353553385 : f32
    %236 = vector.broadcast %cst_158 : f32 to vector<4x8x8xf32>
    %237 = arith.mulf %235, %236 : vector<4x8x8xf32>
    %238 = vector.broadcast %76 : vector<1x1x8xf32> to vector<4x8x8xf32>
    %239 = arith.addf %237, %238 : vector<4x8x8xf32>
    %cst_159 = arith.constant dense<0xFF800000> : vector<4x8xf32>
    %240 = vector.multi_reduction <maximumf>, %239, %cst_159 [2] : vector<4x8x8xf32> to vector<4x8xf32>
    %241 = vector.shape_cast %240 : vector<4x8xf32> to vector<4x8x1xf32>
    %242 = vector.broadcast %241 : vector<4x8x1xf32> to vector<4x8x8xf32>
    %243 = arith.subf %239, %242 : vector<4x8x8xf32>
    %244 = math.exp %243 : vector<4x8x8xf32>
    %cst_160 = arith.constant dense<0.000000e+00> : vector<4x8xf32>
    %245 = vector.multi_reduction <add>, %244, %cst_160 [2] : vector<4x8x8xf32> to vector<4x8xf32>
    %246 = vector.shape_cast %245 : vector<4x8xf32> to vector<4x8x1xf32>
    %247 = tpu.reciprocal %246 {approx = true} : vector<4x8x1xf32> -> vector<4x8x1xf32>
    %248 = vector.broadcast %247 : vector<4x8x1xf32> to vector<4x8x8xf32>
    %249 = arith.mulf %244, %248 : vector<4x8x8xf32>
    %250 = arith.truncf %249 : vector<4x8x8xf32> to vector<4x8x8xbf16>
    %251 = arith.truncf %232 : vector<4x8x8xf32> to vector<4x8x8xbf16>
    %cst_161 = arith.constant dense<0.000000e+00> : vector<4x8x8xf32>
    %252 = tpu.matmul %250, %251, %cst_161 {dimension_numbers = #tpu.dot_dimension_numbers<[2], [1], [1], [2], [0, 0, 0, 1, 1, 2], [0], [0]>} : vector<4x8x8xbf16>, vector<4x8x8xbf16>, vector<4x8x8xf32> -> vector<4x8x8xf32>
    %253 = arith.truncf %252 : vector<4x8x8xf32> to vector<4x8x8xbf16>
    %c1_162 = arith.constant 1 : index
    %c0_163 = arith.constant 0 : index
    %c0_164 = arith.constant 0 : index
    %c0_165 = arith.constant 0 : index
    %254 = vector.load %arg14[%c1_162, %c0_163, %c0_164, %c0_165] : memref<2x4x8x32xbf16, #tpu.memory_space<vmem>>, vector<1x4x8x32xbf16>
    %255 = vector.shape_cast %254 : vector<1x4x8x32xbf16> to vector<4x8x32xbf16>
    %cst_166 = arith.constant dense<0.000000e+00> : vector<4x8x32xf32>
    %256 = tpu.matmul %253, %255, %cst_166 {dimension_numbers = #tpu.dot_dimension_numbers<[2], [1], [1], [2], [0, 0, 0, 1, 1, 2], [0], [0]>} : vector<4x8x8xbf16>, vector<4x8x32xbf16>, vector<4x8x32xf32> -> vector<4x8x32xf32>
    %cst_167 = arith.constant dense<0.000000e+00> : vector<8x32xf32>
    %257 = vector.multi_reduction <add>, %256, %cst_167 [0] : vector<4x8x32xf32> to vector<8x32xf32>
    %c1_168 = arith.constant 1 : index
    %c0_169 = arith.constant 0 : index
    %c0_170 = arith.constant 0 : index
    %258 = vector.load %arg15[%c1_168, %c0_169, %c0_170] : memref<2x1x32xf32, #tpu.memory_space<vmem>>, vector<1x1x32xf32>
    %259 = vector.shape_cast %258 : vector<1x1x32xf32> to vector<1x32xf32>
    %260 = vector.broadcast %259 : vector<1x32xf32> to vector<8x32xf32>
    %261 = arith.addf %257, %260 : vector<8x32xf32>
    %262 = arith.addf %261, %208 : vector<8x32xf32>
    %c1_171 = arith.constant 1 : index
    %c0_172 = arith.constant 0 : index
    %c0_173 = arith.constant 0 : index
    %263 = vector.load %arg16[%c1_171, %c0_172, %c0_173] : memref<2x1x32xf32, #tpu.memory_space<vmem>>, vector<1x1x32xf32>
    %264 = vector.shape_cast %263 : vector<1x1x32xf32> to vector<1x32xf32>
    %c1_174 = arith.constant 1 : index
    %c0_175 = arith.constant 0 : index
    %c0_176 = arith.constant 0 : index
    %265 = vector.load %arg17[%c1_174, %c0_175, %c0_176] : memref<2x1x32xf32, #tpu.memory_space<vmem>>, vector<1x1x32xf32>
    %266 = vector.shape_cast %265 : vector<1x1x32xf32> to vector<1x32xf32>
    %cst_177 = arith.constant dense<0.000000e+00> : vector<8xf32>
    %267 = vector.multi_reduction <add>, %262, %cst_177 [1] : vector<8x32xf32> to vector<8xf32>
    %268 = vector.shape_cast %267 : vector<8xf32> to vector<8x1xf32>
    %cst_178 = arith.constant 3.200000e+01 : f32
    %269 = vector.broadcast %cst_178 : f32 to vector<8x1xf32>
    %270 = arith.divf %268, %269 : vector<8x1xf32>
    %271 = vector.broadcast %270 : vector<8x1xf32> to vector<8x32xf32>
    %272 = arith.subf %262, %271 : vector<8x32xf32>
    %273 = arith.mulf %272, %272 : vector<8x32xf32>
    %cst_179 = arith.constant dense<0.000000e+00> : vector<8xf32>
    %274 = vector.multi_reduction <add>, %273, %cst_179 [1] : vector<8x32xf32> to vector<8xf32>
    %275 = vector.shape_cast %274 : vector<8xf32> to vector<8x1xf32>
    %cst_180 = arith.constant 3.200000e+01 : f32
    %276 = vector.broadcast %cst_180 : f32 to vector<8x1xf32>
    %277 = arith.divf %275, %276 : vector<8x1xf32>
    %cst_181 = arith.constant 9.99999996E-13 : f32
    %278 = vector.broadcast %cst_181 : f32 to vector<8x1xf32>
    %279 = arith.addf %277, %278 : vector<8x1xf32>
    %280 = math.rsqrt %279 : vector<8x1xf32>
    %281 = vector.broadcast %280 : vector<8x1xf32> to vector<8x32xf32>
    %282 = arith.mulf %272, %281 : vector<8x32xf32>
    %283 = vector.broadcast %264 : vector<1x32xf32> to vector<8x32xf32>
    %284 = arith.mulf %282, %283 : vector<8x32xf32>
    %285 = vector.broadcast %266 : vector<1x32xf32> to vector<8x32xf32>
    %286 = arith.addf %284, %285 : vector<8x32xf32>
    %287 = arith.truncf %286 : vector<8x32xf32> to vector<8x32xbf16>
    %c1_182 = arith.constant 1 : index
    %c0_183 = arith.constant 0 : index
    %c0_184 = arith.constant 0 : index
    %288 = vector.load %arg18[%c1_182, %c0_183, %c0_184] : memref<2x32x64xbf16, #tpu.memory_space<vmem>>, vector<1x32x64xbf16>
    %289 = vector.shape_cast %288 : vector<1x32x64xbf16> to vector<32x64xbf16>
    %cst_185 = arith.constant dense<0.000000e+00> : vector<8x64xf32>
    %290 = tpu.matmul %287, %289, %cst_185 {dimension_numbers = #tpu.dot_dimension_numbers<[1], [0], [0], [1], [0, 0, 1, 1], [], []>} : vector<8x32xbf16>, vector<32x64xbf16>, vector<8x64xf32> -> vector<8x64xf32>
    %c1_186 = arith.constant 1 : index
    %c0_187 = arith.constant 0 : index
    %c0_188 = arith.constant 0 : index
    %291 = vector.load %arg19[%c1_186, %c0_187, %c0_188] : memref<2x1x64xf32, #tpu.memory_space<vmem>>, vector<1x1x64xf32>
    %292 = vector.shape_cast %291 : vector<1x1x64xf32> to vector<1x64xf32>
    %293 = vector.broadcast %292 : vector<1x64xf32> to vector<8x64xf32>
    %294 = arith.addf %290, %293 : vector<8x64xf32>
    %cst_189 = arith.constant 5.000000e-01 : f32
    %295 = vector.broadcast %cst_189 : f32 to vector<8x64xf32>
    %296 = arith.mulf %295, %294 : vector<8x64xf32>
    %cst_190 = arith.constant 4.471500e-02 : f32
    %297 = vector.broadcast %cst_190 : f32 to vector<8x64xf32>
    %298 = arith.mulf %297, %294 : vector<8x64xf32>
    %299 = arith.mulf %298, %294 : vector<8x64xf32>
    %300 = arith.mulf %299, %294 : vector<8x64xf32>
    %301 = arith.addf %294, %300 : vector<8x64xf32>
    %cst_191 = arith.constant 0.797884583 : f32
    %302 = vector.broadcast %cst_191 : f32 to vector<8x64xf32>
    %303 = arith.mulf %302, %301 : vector<8x64xf32>
    %304 = math.tanh %303 : vector<8x64xf32>
    %cst_192 = arith.constant 1.000000e+00 : f32
    %305 = vector.broadcast %cst_192 : f32 to vector<8x64xf32>
    %306 = arith.addf %305, %304 : vector<8x64xf32>
    %307 = arith.mulf %296, %306 : vector<8x64xf32>
    %308 = arith.truncf %307 : vector<8x64xf32> to vector<8x64xbf16>
    %c1_193 = arith.constant 1 : index
    %c0_194 = arith.constant 0 : index
    %c0_195 = arith.constant 0 : index
    %309 = vector.load %arg20[%c1_193, %c0_194, %c0_195] : memref<2x64x32xbf16, #tpu.memory_space<vmem>>, vector<1x64x32xbf16>
    %310 = vector.shape_cast %309 : vector<1x64x32xbf16> to vector<64x32xbf16>
    %cst_196 = arith.constant dense<0.000000e+00> : vector<8x32xf32>
    %311 = tpu.matmul %308, %310, %cst_196 {dimension_numbers = #tpu.dot_dimension_numbers<[1], [0], [0], [1], [0, 0, 1, 1], [], []>} : vector<8x64xbf16>, vector<64x32xbf16>, vector<8x32xf32> -> vector<8x32xf32>
    %c1_197 = arith.constant 1 : index
    %c0_198 = arith.constant 0 : index
    %c0_199 = arith.constant 0 : index
    %312 = vector.load %arg21[%c1_197, %c0_198, %c0_199] : memref<2x1x32xf32, #tpu.memory_space<vmem>>, vector<1x1x32xf32>
    %313 = vector.shape_cast %312 : vector<1x1x32xf32> to vector<1x32xf32>
    %314 = vector.broadcast %313 : vector<1x32xf32> to vector<8x32xf32>
    %315 = arith.addf %311, %314 : vector<8x32xf32>
    %316 = arith.addf %315, %286 : vector<8x32xf32>
    %c1_200 = arith.constant 1 : index
    %c0_201 = arith.constant 0 : index
    %c0_202 = arith.constant 0 : index
    %317 = vector.load %arg22[%c1_200, %c0_201, %c0_202] : memref<2x1x32xf32, #tpu.memory_space<vmem>>, vector<1x1x32xf32>
    %318 = vector.shape_cast %317 : vector<1x1x32xf32> to vector<1x32xf32>
    %c1_203 = arith.constant 1 : index
    %c0_204 = arith.constant 0 : index
    %c0_205 = arith.constant 0 : index
    %319 = vector.load %arg23[%c1_203, %c0_204, %c0_205] : memref<2x1x32xf32, #tpu.memory_space<vmem>>, vector<1x1x32xf32>
    %320 = vector.shape_cast %319 : vector<1x1x32xf32> to vector<1x32xf32>
    %cst_206 = arith.constant dense<0.000000e+00> : vector<8xf32>
    %321 = vector.multi_reduction <add>, %316, %cst_206 [1] : vector<8x32xf32> to vector<8xf32>
    %322 = vector.shape_cast %321 : vector<8xf32> to vector<8x1xf32>
    %cst_207 = arith.constant 3.200000e+01 : f32
    %323 = vector.broadcast %cst_207 : f32 to vector<8x1xf32>
    %324 = arith.divf %322, %323 : vector<8x1xf32>
    %325 = vector.broadcast %324 : vector<8x1xf32> to vector<8x32xf32>
    %326 = arith.subf %316, %325 : vector<8x32xf32>
    %327 = arith.mulf %326, %326 : vector<8x32xf32>
    %cst_208 = arith.constant dense<0.000000e+00> : vector<8xf32>
    %328 = vector.multi_reduction <add>, %327, %cst_208 [1] : vector<8x32xf32> to vector<8xf32>
    %329 = vector.shape_cast %328 : vector<8xf32> to vector<8x1xf32>
    %cst_209 = arith.constant 3.200000e+01 : f32
    %330 = vector.broadcast %cst_209 : f32 to vector<8x1xf32>
    %331 = arith.divf %329, %330 : vector<8x1xf32>
    %cst_210 = arith.constant 9.99999996E-13 : f32
    %332 = vector.broadcast %cst_210 : f32 to vector<8x1xf32>
    %333 = arith.addf %331, %332 : vector<8x1xf32>
    %334 = math.rsqrt %333 : vector<8x1xf32>
    %335 = vector.broadcast %334 : vector<8x1xf32> to vector<8x32xf32>
    %336 = arith.mulf %326, %335 : vector<8x32xf32>
    %337 = vector.broadcast %318 : vector<1x32xf32> to vector<8x32xf32>
    %338 = arith.mulf %336, %337 : vector<8x32xf32>
    %339 = vector.broadcast %320 : vector<1x32xf32> to vector<8x32xf32>
    %340 = arith.addf %338, %339 : vector<8x32xf32>
    %341 = vector.extract_strided_slice %340 {offsets = [0, 0], sizes = [1, 32], strides = [1, 1]} : vector<8x32xf32> to vector<1x32xf32>
    %342 = arith.truncf %341 : vector<1x32xf32> to vector<1x32xbf16>
    %c0_211 = arith.constant 0 : index
    %c0_212 = arith.constant 0 : index
    %343 = vector.load %arg24[%c0_211, %c0_212] : memref<32x32xbf16, #tpu.memory_space<vmem>>, vector<32x32xbf16>
    %cst_213 = arith.constant dense<0.000000e+00> : vector<1x32xf32>
    %344 = tpu.matmul %342, %343, %cst_213 {dimension_numbers = #tpu.dot_dimension_numbers<[1], [0], [0], [1], [0, 0, 1, 1], [], []>} : vector<1x32xbf16>, vector<32x32xbf16>, vector<1x32xf32> -> vector<1x32xf32>
    %c0_214 = arith.constant 0 : index
    %c0_215 = arith.constant 0 : index
    %345 = vector.load %arg25[%c0_214, %c0_215] : memref<1x32xf32, #tpu.memory_space<vmem>>, vector<1x32xf32>
    %346 = arith.addf %344, %345 : vector<1x32xf32>
    %347 = math.tanh %346 : vector<1x32xf32>
    %348 = arith.truncf %347 : vector<1x32xf32> to vector<1x32xbf16>
    %c0_216 = arith.constant 0 : index
    %c0_217 = arith.constant 0 : index
    %349 = vector.load %arg26[%c0_216, %c0_217] : memref<32x128xbf16, #tpu.memory_space<vmem>>, vector<32x128xbf16>
    %cst_218 = arith.constant dense<0.000000e+00> : vector<1x128xf32>
    %350 = tpu.matmul %348, %349, %cst_218 {dimension_numbers = #tpu.dot_dimension_numbers<[1], [0], [0], [1], [0, 0, 1, 1], [], []>} : vector<1x32xbf16>, vector<32x128xbf16>, vector<1x128xf32> -> vector<1x128xf32>
    %c0_219 = arith.constant 0 : index
    %c0_220 = arith.constant 0 : index
    %351 = vector.load %arg27[%c0_219, %c0_220] : memref<1x128xf32, #tpu.memory_space<vmem>>, vector<1x128xf32>
    %352 = arith.addf %350, %351 : vector<1x128xf32>
    %353 = tpu.iota {dimensions = array<i32: 1>} : vector<1x128xi32>
    %c8_i32 = arith.constant 8 : i32
    %354 = vector.broadcast %c8_i32 : i32 to vector<1x128xi32>
    %355 = arith.cmpi slt, %353, %354 : vector<1x128xi32>
    %cst_221 = arith.constant -1.000000e+30 : f32
    %356 = vector.broadcast %cst_221 : f32 to vector<1x128xf32>
    %357 = arith.select %355, %352, %356 : vector<1x128xi1>, vector<1x128xf32>
    %cst_222 = arith.constant dense<0xFF800000> : vector<1xf32>
    %358 = vector.multi_reduction <maximumf>, %357, %cst_222 [1] : vector<1x128xf32> to vector<1xf32>
    %359 = vector.shape_cast %358 : vector<1xf32> to vector<1x1xf32>
    %360 = vector.broadcast %359 : vector<1x1xf32> to vector<1x128xf32>
    %361 = arith.subf %357, %360 : vector<1x128xf32>
    %362 = math.exp %361 : vector<1x128xf32>
    %cst_223 = arith.constant dense<0.000000e+00> : vector<1xf32>
    %363 = vector.multi_reduction <add>, %362, %cst_223 [1] : vector<1x128xf32> to vector<1xf32>
    %364 = vector.shape_cast %363 : vector<1xf32> to vector<1x1xf32>
    %365 = vector.broadcast %364 : vector<1x1xf32> to vector<1x128xf32>
    %366 = arith.divf %362, %365 : vector<1x128xf32>
    %367 = vector.shape_cast %366 : vector<1x128xf32> to vector<1x1x128xf32>
    %c0_224 = arith.constant 0 : index
    %c0_225 = arith.constant 0 : index
    %c0_226 = arith.constant 0 : index
    %368 = vector.load %arg28[%c0_224, %c0_225, %c0_226] : memref<1x1x128xf32, #tpu.memory_space<vmem>>, vector<1x1x128xf32>
    tpu.vector_store %arg28[%c0_224, %c0_225, %c0_226], %367 {strides = array<i32>} : memref<1x1x128xf32, #tpu.memory_space<vmem>>, vector<1x1x128xf32>,
    return
  }
  func.func @transform_0(%arg0: i32) -> (i32, i32) {
    %c0_i32 = arith.constant 0 : i32
    %c0_i32_0 = arith.constant 0 : i32
    %c0_i32_1 = arith.constant 0 : i32
    return %c0_i32, %c0_i32_0 : i32, i32
  }
  func.func @transform_1(%arg0: i32) -> (i32, i32, i32) {
    %c0_i32 = arith.constant 0 : i32
    %c0_i32_0 = arith.constant 0 : i32
    %c0_i32_1 = arith.constant 0 : i32
    return %arg0, %c0_i32, %c0_i32_0 : i32, i32, i32
  }
  func.func @transform_2(%arg0: i32) -> (i32, i32) {
    %c0_i32 = arith.constant 0 : i32
    %c0_i32_0 = arith.constant 0 : i32
    %c0_i32_1 = arith.constant 0 : i32
    return %c0_i32, %c0_i32_0 : i32, i32
  }
  func.func @transform_3(%arg0: i32) -> (i32, i32) {
    %c0_i32 = arith.constant 0 : i32
    %c0_i32_0 = arith.constant 0 : i32
    %c0_i32_1 = arith.constant 0 : i32
    return %c0_i32, %c0_i32_0 : i32, i32
  }
  func.func @transform_4(%arg0: i32) -> (i32, i32, i32) {
    %c0_i32 = arith.constant 0 : i32
    %c0_i32_0 = arith.constant 0 : i32
    %c0_i32_1 = arith.constant 0 : i32
    %c0_i32_2 = arith.constant 0 : i32
    return %c0_i32, %c0_i32_0, %c0_i32_1 : i32, i32, i32
  }
  func.func @transform_5(%arg0: i32) -> (i32, i32) {
    %c0_i32 = arith.constant 0 : i32
    %c0_i32_0 = arith.constant 0 : i32
    %c0_i32_1 = arith.constant 0 : i32
    return %c0_i32, %c0_i32_0 : i32, i32
  }
  func.func @transform_6(%arg0: i32) -> (i32, i32) {
    %c0_i32 = arith.constant 0 : i32
    %c0_i32_0 = arith.constant 0 : i32
    %c0_i32_1 = arith.constant 0 : i32
    return %c0_i32, %c0_i32_0 : i32, i32
  }
  func.func @transform_7(%arg0: i32) -> (i32, i32, i32, i32) {
    %c0_i32 = arith.constant 0 : i32
    %c0_i32_0 = arith.constant 0 : i32
    %c0_i32_1 = arith.constant 0 : i32
    %c0_i32_2 = arith.constant 0 : i32
    %c0_i32_3 = arith.constant 0 : i32
    return %c0_i32, %c0_i32_0, %c0_i32_1, %c0_i32_2 : i32, i32, i32, i32
  }
  func.func @transform_8(%arg0: i32) -> (i32, i32, i32, i32) {
    %c0_i32 = arith.constant 0 : i32
    %c0_i32_0 = arith.constant 0 : i32
    %c0_i32_1 = arith.constant 0 : i32
    %c0_i32_2 = arith.constant 0 : i32
    %c0_i32_3 = arith.constant 0 : i32
    return %c0_i32, %c0_i32_0, %c0_i32_1, %c0_i32_2 : i32, i32, i32, i32
  }
  func.func @transform_9(%arg0: i32) -> (i32, i32, i32, i32) {
    %c0_i32 = arith.constant 0 : i32
    %c0_i32_0 = arith.constant 0 : i32
    %c0_i32_1 = arith.constant 0 : i32
    %c0_i32_2 = arith.constant 0 : i32
    %c0_i32_3 = arith.constant 0 : i32
    return %c0_i32, %c0_i32_0, %c0_i32_1, %c0_i32_2 : i32, i32, i32, i32
  }
  func.func @transform_10(%arg0: i32) -> (i32, i32, i32, i32) {
    %c0_i32 = arith.constant 0 : i32
    %c0_i32_0 = arith.constant 0 : i32
    %c0_i32_1 = arith.constant 0 : i32
    %c0_i32_2 = arith.constant 0 : i32
    %c0_i32_3 = arith.constant 0 : i32
    return %c0_i32, %c0_i32_0, %c0_i32_1, %c0_i32_2 : i32, i32, i32, i32
  }
  func.func @transform_11(%arg0: i32) -> (i32, i32, i32, i32) {
    %c0_i32 = arith.constant 0 : i32
    %c0_i32_0 = arith.constant 0 : i32
    %c0_i32_1 = arith.constant 0 : i32
    %c0_i32_2 = arith.constant 0 : i32
    %c0_i32_3 = arith.constant 0 : i32
    return %c0_i32, %c0_i32_0, %c0_i32_1, %c0_i32_2 : i32, i32, i32, i32
  }
  func.func @transform_12(%arg0: i32) -> (i32, i32, i32, i32) {
    %c0_i32 = arith.constant 0 : i32
    %c0_i32_0 = arith.constant 0 : i32
    %c0_i32_1 = arith.constant 0 : i32
    %c0_i32_2 = arith.constant 0 : i32
    %c0_i32_3 = arith.constant 0 : i32
    return %c0_i32, %c0_i32_0, %c0_i32_1, %c0_i32_2 : i32, i32, i32, i32
  }
  func.func @transform_13(%arg0: i32) -> (i32, i32, i32, i32) {
    %c0_i32 = arith.constant 0 : i32
    %c0_i32_0 = arith.constant 0 : i32
    %c0_i32_1 = arith.constant 0 : i32
    %c0_i32_2 = arith.constant 0 : i32
    %c0_i32_3 = arith.constant 0 : i32
    return %c0_i32, %c0_i32_0, %c0_i32_1, %c0_i32_2 : i32, i32, i32, i32
  }
  func.func @transform_14(%arg0: i32) -> (i32, i32, i32) {
    %c0_i32 = arith.constant 0 : i32
    %c0_i32_0 = arith.constant 0 : i32
    %c0_i32_1 = arith.constant 0 : i32
    %c0_i32_2 = arith.constant 0 : i32
    return %c0_i32, %c0_i32_0, %c0_i32_1 : i32, i32, i32
  }
  func.func @transform_15(%arg0: i32) -> (i32, i32, i32) {
    %c0_i32 = arith.constant 0 : i32
    %c0_i32_0 = arith.constant 0 : i32
    %c0_i32_1 = arith.constant 0 : i32
    %c0_i32_2 = arith.constant 0 : i32
    return %c0_i32, %c0_i32_0, %c0_i32_1 : i32, i32, i32
  }
  func.func @transform_16(%arg0: i32) -> (i32, i32, i32) {
    %c0_i32 = arith.constant 0 : i32
    %c0_i32_0 = arith.constant 0 : i32
    %c0_i32_1 = arith.constant 0 : i32
    %c0_i32_2 = arith.constant 0 : i32
    return %c0_i32, %c0_i32_0, %c0_i32_1 : i32, i32, i32
  }
  func.func @transform_17(%arg0: i32) -> (i32, i32, i32) {
    %c0_i32 = arith.constant 0 : i32
    %c0_i32_0 = arith.constant 0 : i32
    %c0_i32_1 = arith.constant 0 : i32
    %c0_i32_2 = arith.constant 0 : i32
    return %c0_i32, %c0_i32_0, %c0_i32_1 : i32, i32, i32
  }
  func.func @transform_18(%arg0: i32) -> (i32, i32, i32) {
    %c0_i32 = arith.constant 0 : i32
    %c0_i32_0 = arith.constant 0 : i32
    %c0_i32_1 = arith.constant 0 : i32
    %c0_i32_2 = arith.constant 0 : i32
    return %c0_i32, %c0_i32_0, %c0_i32_1 : i32, i32, i32
  }
  func.func @transform_19(%arg0: i32) -> (i32, i32, i32) {
    %c0_i32 = arith.constant 0 : i32
    %c0_i32_0 = arith.constant 0 : i32
    %c0_i32_1 = arith.constant 0 : i32
    %c0_i32_2 = arith.constant 0 : i32
    return %c0_i32, %c0_i32_0, %c0_i32_1 : i32, i32, i32
  }
  func.func @transform_20(%arg0: i32) -> (i32, i32, i32) {
    %c0_i32 = arith.constant 0 : i32
    %c0_i32_0 = arith.constant 0 : i32
    %c0_i32_1 = arith.constant 0 : i32
    %c0_i32_2 = arith.constant 0 : i32
    return %c0_i32, %c0_i32_0, %c0_i32_1 : i32, i32, i32
  }
  func.func @transform_21(%arg0: i32) -> (i32, i32, i32) {
    %c0_i32 = arith.constant 0 : i32
    %c0_i32_0 = arith.constant 0 : i32
    %c0_i32_1 = arith.constant 0 : i32
    %c0_i32_2 = arith.constant 0 : i32
    return %c0_i32, %c0_i32_0, %c0_i32_1 : i32, i32, i32
  }
  func.func @transform_22(%arg0: i32) -> (i32, i32, i32) {
    %c0_i32 = arith.constant 0 : i32
    %c0_i32_0 = arith.constant 0 : i32
    %c0_i32_1 = arith.constant 0 : i32
    %c0_i32_2 = arith.constant 0 : i32
    return %c0_i32, %c0_i32_0, %c0_i32_1 : i32, i32, i32
  }
  func.func @transform_23(%arg0: i32) -> (i32, i32) {
    %c0_i32 = arith.constant 0 : i32
    %c0_i32_0 = arith.constant 0 : i32
    %c0_i32_1 = arith.constant 0 : i32
    return %c0_i32, %c0_i32_0 : i32, i32
  }
  func.func @transform_24(%arg0: i32) -> (i32, i32) {
    %c0_i32 = arith.constant 0 : i32
    %c0_i32_0 = arith.constant 0 : i32
    %c0_i32_1 = arith.constant 0 : i32
    return %c0_i32, %c0_i32_0 : i32, i32
  }
  func.func @transform_25(%arg0: i32) -> (i32, i32) {
    %c0_i32 = arith.constant 0 : i32
    %c0_i32_0 = arith.constant 0 : i32
    %c0_i32_1 = arith.constant 0 : i32
    return %c0_i32, %c0_i32_0 : i32, i32
  }
  func.func @transform_26(%arg0: i32) -> (i32, i32) {
    %c0_i32 = arith.constant 0 : i32
    %c0_i32_0 = arith.constant 0 : i32
    %c0_i32_1 = arith.constant 0 : i32
    return %c0_i32, %c0_i32_0 : i32, i32
  }
  func.func @transform_27(%arg0: i32) -> (i32, i32, i32) {
    %c0_i32 = arith.constant 0 : i32
    %c0_i32_0 = arith.constant 0 : i32
    %c0_i32_1 = arith.constant 0 : i32
    return %arg0, %c0_i32, %c0_i32_0 : i32, i32, i32
  }
}

</mosaic_0001>

<llo_original>
// kernel: ppdpp_forward.1
$region0: #{ppdpp_forward.1}
  #allocation0 [shape = 'u32[]', space=smem, size = 0x4, offset = 0x4, fixed_abs, tag = 'smem constant byte address 0x4 - core index']
  #allocation1 [shape = 'u32[144,128]{1,0:T(1,128)}', space=vmem, size = 0x12000, scoped, tag = 'internal scratch']
  #allocation2 [shape = 'f32[8,32]{1,0:T(8,128)}', space=vmem, size = 0x1000, scoped, tag = 'scratch operand']
  %s0 = inlined_call_operand.vmem [shape: s32[2,8], index: 0, kind: input, shape index: {}]
  %s1 = inlined_call_operand.vmem [shape: f32[2,1,8], index: 1, kind: input, shape index: {}]
  %s2 = inlined_call_operand.vmem [shape: f32[8,32], index: 2, kind: input, shape index: {}]
  %s3 = inlined_call_operand.vmem [shape: f32[1,32], index: 3, kind: input, shape index: {}]
  %s4 = inlined_call_operand.vmem [shape: f32[100,1,32], index: 4, kind: input, shape index: {}]
  %s5 = inlined_call_operand.vmem [shape: f32[1,32], index: 5, kind: input, shape index: {}]
  %s6 = inlined_call_operand.vmem [shape: f32[1,32], index: 6, kind: input, shape index: {}]
  %s7 = inlined_call_operand.vmem [shape: bf16[2,4,32,8], index: 7, kind: input, shape index: {}]
  %s8 = inlined_call_operand.vmem [shape: bf16[2,4,32,8], index: 8, kind: input, shape index: {}]
  %s9 = inlined_call_operand.vmem [shape: bf16[2,4,32,8], index: 9, kind: input, shape index: {}]
  %s10 = inlined_call_operand.vmem [shape: f32[2,4,1,8], index: 10, kind: input, shape index: {}]
  %s11 = inlined_call_operand.vmem [shape: f32[2,4,1,8], index: 11, kind: input, shape index: {}]
  %s12 = inlined_call_operand.vmem [shape: f32[2,4,1,8], index: 12, kind: input, shape index: {}]
  %s13 = inlined_call_operand.vmem [shape: bf16[2,4,8,32], index: 13, kind: input, shape index: {}]
  %s14 = inlined_call_operand.vmem [shape: f32[2,1,32], index: 14, kind: input, shape index: {}]
  %s15 = inlined_call_operand.vmem [shape: f32[2,1,32], index: 15, kind: input, shape index: {}]
  %s16 = inlined_call_operand.vmem [shape: f32[2,1,32], index: 16, kind: input, shape index: {}]
  %s17 = inlined_call_operand.vmem [shape: bf16[2,32,64], index: 17, kind: input, shape index: {}]
  %s18 = inlined_call_operand.vmem [shape: f32[2,1,64], index: 18, kind: input, shape index: {}]
  %s19 = inlined_call_operand.vmem [shape: bf16[2,64,32], index: 19, kind: input, shape index: {}]
  %s20 = inlined_call_operand.vmem [shape: f32[2,1,32], index: 20, kind: input, shape index: {}]
  %s21 = inlined_call_operand.vmem [shape: f32[2,1,32], index: 21, kind: input, shape index: {}]
  %s22 = inlined_call_operand.vmem [shape: f32[2,1,32], index: 22, kind: input, shape index: {}]
  %s23 = inlined_call_operand.vmem [shape: bf16[32,32], index: 23, kind: input, shape index: {}]
  %s24 = inlined_call_operand.vmem [shape: f32[1,32], index: 24, kind: input, shape index: {}]
  %s25 = inlined_call_operand.vmem [shape: bf16[32,128], index: 25, kind: input, shape index: {}]
  %s26 = inlined_call_operand.vmem [shape: f32[1,128], index: 26, kind: input, shape index: {}]
  %s27 = inlined_call_operand.hbm [shape: f32[2,1,128], index: 27, kind: output, shape index: {}]
  %s28 = sld [smem:[#allocation0]]
  $region145: #{ppdpp_forward.1} parent=0
    _
  %s30 = ssub.s32 1, %s28
  %s31 = scalar_select 0, %s30, %s28
  $region1: #{ppdpp_forward.1} parent=0
    #allocation3 [shape = 'u8[1024]{0}', space=smem, size = 0x400, scoped, tag = 'input window, operand 0, single buffered']
    #allocation4 [shape = 's32[2]{0}', space=sflag, size = 0x8, scoped, tag = 'scoped memory for ppdpp_forward.1']
    #allocation5 [shape = 's32[2]{0}', space=sflag, size = 0x8, scoped, tag = 'scoped memory for ppdpp_forward.1']
    #allocation6 [shape = 'u8[1024]{0}', space=vmem, size = 0x400, scoped, tag = 'output window, operand 0']
    %32 = vsyncpa [#allocation5], 0
    %33 = vsyncpa [#allocation4], 0
    %s34 = scalar_lea.sflag [#allocation4], 1
    %35 = vsyncpa %s34, 0
    loop: start=0, step=1, limit=4
    $region2: #{ppdpp_forward.1} parent=1 // loop_pre_header
      _
    $region3: #{ppdpp_forward.1} parent=1 // loop_header
      %s37 = sphi 0, %s41
      %p38 = scmp.ge.s32.totalorder %s37, 4
      %s45 = sphi 0, %s45
      %s47 = sphi 0, %s45
      %s48 = sphi 0, %s47
      %s62 = sphi 0, %s48
      %s68 = sphi 0, %s70
      %s71 = sphi 0, %s68
      %s72 = sphi 0, %s71
      %s88 = sphi 0, %s72
      %s92 = sphi 0, %s92
      %s94 = sphi 0, %s92
      %s95 = sphi 0, %s94
      %s109 = sphi 0, %s95
      %s113 = sphi 0, %s113
      %s115 = sphi 0, %s113
      %s116 = sphi 0, %s115
      %s130 = sphi 0, %s116
      %s134 = sphi 0, %s134
      %s136 = sphi 0, %s134
      %s137 = sphi 0, %s136
      %s151 = sphi 0, %s137
      %s155 = sphi 0, %s155
      %s157 = sphi 0, %s155
      %s158 = sphi 0, %s157
      %s172 = sphi 0, %s158
      %s176 = sphi 0, %s176
      %s178 = sphi 0, %s176
      %s179 = sphi 0, %s178
      %s193 = sphi 0, %s179
      %s197 = sphi 0, %s197
      %s199 = sphi 0, %s197
      %s200 = sphi 0, %s199
      %s214 = sphi 0, %s200
      %s218 = sphi 0, %s218
      %s220 = sphi 0, %s218
      %s221 = sphi 0, %s220
      %s235 = sphi 0, %s221
      %s239 = sphi 0, %s239
      %s241 = sphi 0, %s239
      %s242 = sphi 0, %s241
      %s256 = sphi 0, %s242
      %s260 = sphi 0, %s260
      %s262 = sphi 0, %s260
      %s263 = sphi 0, %s262
      %s277 = sphi 0, %s263
      %s281 = sphi 0, %s281
      %s283 = sphi 0, %s281
      %s284 = sphi 0, %s283
      %s298 = sphi 0, %s284
      %s302 = sphi 0, %s302
      %s304 = sphi 0, %s302
      %s305 = sphi 0, %s304
      %s319 = sphi 0, %s305
      %s323 = sphi 0, %s323
      %s325 = sphi 0, %s323
      %s326 = sphi 0, %s325
      %s340 = sphi 0, %s326
      %s344 = sphi 0, %s344
      %s346 = sphi 0, %s344
      %s347 = sphi 0, %s346
      %s361 = sphi 0, %s347
      %s365 = sphi 0, %s365
      %s367 = sphi 0, %s365
      %s368 = sphi 0, %s367
      %s382 = sphi 0, %s368
      %s386 = sphi 0, %s386
      %s388 = sphi 0, %s386
      %s389 = sphi 0, %s388
      %s403 = sphi 0, %s389
      %s407 = sphi 0, %s407
      %s409 = sphi 0, %s407
      %s410 = sphi 0, %s409
      %s424 = sphi 0, %s410
      %s428 = sphi 0, %s428
      %s430 = sphi 0, %s428
      %s431 = sphi 0, %s430
      %s445 = sphi 0, %s431
      %s449 = sphi 0, %s449
      %s451 = sphi 0, %s449
      %s452 = sphi 0, %s451
      %s466 = sphi 0, %s452
      %s470 = sphi 0, %s470
      %s472 = sphi 0, %s470
      %s473 = sphi 0, %s472
      %s487 = sphi 0, %s473
      %s491 = sphi 0, %s491
      %s493 = sphi 0, %s491
      %s494 = sphi 0, %s493
      %s508 = sphi 0, %s494
      %s512 = sphi 0, %s512
      %s514 = sphi 0, %s512
      %s515 = sphi 0, %s514
      %s529 = sphi 0, %s515
      %s533 = sphi 0, %s533
      %s535 = sphi 0, %s533
      %s536 = sphi 0, %s535
      %s550 = sphi 0, %s536
      %s554 = sphi 0, %s554
      %s556 = sphi 0, %s554
      %s557 = sphi 0, %s556
      %s571 = sphi 0, %s557
      %s575 = sphi 0, %s575
      %s577 = sphi 0, %s575
      %s578 = sphi 0, %s577
      %s592 = sphi 0, %s578
      %s596 = sphi 0, %s596
      %s598 = sphi 0, %s596
      %s599 = sphi 0, %s598
      %s613 = sphi 0, %s599
      %s619 = sphi 0, %s621
      %s622 = sphi 0, %s619
      %s623 = sphi 0, %s622
      %s639 = sphi 0, %s623
    $region4: #{ppdpp_forward.1} parent=1 // loop_header_branch
      %40 = sbr.rel (%p38) target = $region8
    $region5: #{ppdpp_forward.1} parent=1 // loop_body
      %s42 = ssub.s32 %s37, 1
      %s43 = ssub.s32 %s37, 2
      %s44 = sadd.s32 %s37, 1
      %s46 = sadd.s32 %s45, 1
      %p49 = scmp.eq.s32.totalorder %s37, 1
      %p50 = scmp.ne.s32.totalorder %s45, %s47
      %p51 = scmp.eq.s32.totalorder %s37, 0
      %p52 = por %p50, %p51
      %p53 = scmp.ne.s32.totalorder %s45, %s47
      %p54 = scmp.eq.s32.totalorder %s42, 1
      %p55 = por %p53, %p54
      %p56 = scmp.ne.s32.totalorder %s47, %s48
      %p57 = scmp.eq.s32.totalorder %s42, 0
      %p58 = por %p56, %p57
      %p59 = scmp.ne.s32.totalorder %s47, %s48
      %p60 = scmp.eq.s32.totalorder %s43, 1
      %p61 = por %p59, %p60
      %p63 = scmp.ne.s32.totalorder %s48, %s62
      %p64 = scmp.eq.s32.totalorder %s43, 0
      %p65 = por %p63, %p64
      %s66 = ssub.s32 %s37, %s44
      %p67 = scmp.eq.s32.totalorder %s66, 0
      %s69 = sadd.s32 %s68, 1
      %s70 = scalar_select %p67, %s68, %s69
      %p73 = pneg %p67
      %p74 = scmp.eq.s32.totalorder %s37, 1
      %p75 = por %p73, %p74
      %p76 = scmp.ne.s32.totalorder %s68, %s71
      %p77 = scmp.eq.s32.totalorder %s37, 0
      %p78 = por %p76, %p77
      %p79 = scmp.ne.s32.totalorder %s68, %s71
      %p80 = scmp.eq.s32.totalorder %s42, 1
      %p81 = por %p79, %p80
      %p82 = scmp.ne.s32.totalorder %s71, %s72
      %p83 = scmp.eq.s32.totalorder %s42, 0
      %p84 = por %p82, %p83
      %p85 = scmp.ne.s32.totalorder %s71, %s72
      %p86 = scmp.eq.s32.totalorder %s43, 1
      %p87 = por %p85, %p86
      %p89 = scmp.ne.s32.totalorder %s72, %s88
      %p90 = scmp.eq.s32.totalorder %s43, 0
      %p91 = por %p89, %p90
      %s93 = sadd.s32 %s92, 1
      %p96 = scmp.eq.s32.totalorder %s37, 1
      %p97 = scmp.ne.s32.totalorder %s92, %s94
      %p98 = scmp.eq.s32.totalorder %s37, 0
      %p99 = por %p97, %p98
      %p100 = scmp.ne.s32.totalorder %s92, %s94
      %p101 = scmp.eq.s32.totalorder %s42, 1
      %p102 = por %p100, %p101
      %p103 = scmp.ne.s32.totalorder %s94, %s95
      %p104 = scmp.eq.s32.totalorder %s42, 0
      %p105 = por %p103, %p104
      %p106 = scmp.ne.s32.totalorder %s94, %s95
      %p107 = scmp.eq.s32.totalorder %s43, 1
      %p108 = por %p106, %p107
      %p110 = scmp.ne.s32.totalorder %s95, %s109
      %p111 = scmp.eq.s32.totalorder %s43, 0
      %p112 = por %p110, %p111
      %s114 = sadd.s32 %s113, 1
      %p117 = scmp.eq.s32.totalorder %s37, 1
      %p118 = scmp.ne.s32.totalorder %s113, %s115
      %p119 = scmp.eq.s32.totalorder %s37, 0
      %p120 = por %p118, %p119
      %p121 = scmp.ne.s32.totalorder %s113, %s115
      %p122 = scmp.eq.s32.totalorder %s42, 1
      %p123 = por %p121, %p122
      %p124 = scmp.ne.s32.totalorder %s115, %s116
      %p125 = scmp.eq.s32.totalorder %s42, 0
      %p126 = por %p124, %p125
      %p127 = scmp.ne.s32.totalorder %s115, %s116
      %p128 = scmp.eq.s32.totalorder %s43, 1
      %p129 = por %p127, %p128
      %p131 = scmp.ne.s32.totalorder %s116, %s130
      %p132 = scmp.eq.s32.totalorder %s43, 0
      %p133 = por %p131, %p132
      %s135 = sadd.s32 %s134, 1
      %p138 = scmp.eq.s32.totalorder %s37, 1
      %p139 = scmp.ne.s32.totalorder %s134, %s136
      %p140 = scmp.eq.s32.totalorder %s37, 0
      %p141 = por %p139, %p140
      %p142 = scmp.ne.s32.totalorder %s134, %s136
      %p143 = scmp.eq.s32.totalorder %s42, 1
      %p144 = por %p142, %p143
      %p145 = scmp.ne.s32.totalorder %s136, %s137
      %p146 = scmp.eq.s32.totalorder %s42, 0
      %p147 = por %p145, %p146
      %p148 = scmp.ne.s32.totalorder %s136, %s137
      %p149 = scmp.eq.s32.totalorder %s43, 1
      %p150 = por %p148, %p149
      %p152 = scmp.ne.s32.totalorder %s137, %s151
      %p153 = scmp.eq.s32.totalorder %s43, 0
      %p154 = por %p152, %p153
      %s156 = sadd.s32 %s155, 1
      %p159 = scmp.eq.s32.totalorder %s37, 1
      %p160 = scmp.ne.s32.totalorder %s155, %s157
      %p161 = scmp.eq.s32.totalorder %s37, 0
      %p162 = por %p160, %p161
      %p163 = scmp.ne.s32.totalorder %s155, %s157
      %p164 = scmp.eq.s32.totalorder %s42, 1
      %p165 = por %p163, %p164
      %p166 = scmp.ne.s32.totalorder %s157, %s158
      %p167 = scmp.eq.s32.totalorder %s42, 0
      %p168 = por %p166, %p167
      %p169 = scmp.ne.s32.totalorder %s157, %s158
      %p170 = scmp.eq.s32.totalorder %s43, 1
      %p171 = por %p169, %p170
      %p173 = scmp.ne.s32.totalorder %s158, %s172
      %p174 = scmp.eq.s32.totalorder %s43, 0
      %p175 = por %p173, %p174
      %s177 = sadd.s32 %s176, 1
      %p180 = scmp.eq.s32.totalorder %s37, 1
      %p181 = scmp.ne.s32.totalorder %s176, %s178
      %p182 = scmp.eq.s32.totalorder %s37, 0
      %p183 = por %p181, %p182
      %p184 = scmp.ne.s32.totalorder %s176, %s178
      %p185 = scmp.eq.s32.totalorder %s42, 1
      %p186 = por %p184, %p185
      %p187 = scmp.ne.s32.totalorder %s178, %s179
      %p188 = scmp.eq.s32.totalorder %s42, 0
      %p189 = por %p187, %p188
      %p190 = scmp.ne.s32.totalorder %s178, %s179
      %p191 = scmp.eq.s32.totalorder %s43, 1
      %p192 = por %p190, %p191
      %p194 = scmp.ne.s32.totalorder %s179, %s193
      %p195 = scmp.eq.s32.totalorder %s43, 0
      %p196 = por %p194, %p195
      %s198 = sadd.s32 %s197, 1
      %p201 = scmp.eq.s32.totalorder %s37, 1
      %p202 = scmp.ne.s32.totalorder %s197, %s199
      %p203 = scmp.eq.s32.totalorder %s37, 0
      %p204 = por %p202, %p203
      %p205 = scmp.ne.s32.totalorder %s197, %s199
      %p206 = scmp.eq.s32.totalorder %s42, 1
      %p207 = por %p205, %p206
      %p208 = scmp.ne.s32.totalorder %s199, %s200
      %p209 = scmp.eq.s32.totalorder %s42, 0
      %p210 = por %p208, %p209
      %p211 = scmp.ne.s32.totalorder %s199, %s200
      %p212 = scmp.eq.s32.totalorder %s43, 1
      %p213 = por %p211, %p212
      %p215 = scmp.ne.s32.totalorder %s200, %s214
      %p216 = scmp.eq.s32.totalorder %s43, 0
      %p217 = por %p215, %p216
      %s219 = sadd.s32 %s218, 1
      %p222 = scmp.eq.s32.totalorder %s37, 1
      %p223 = scmp.ne.s32.totalorder %s218, %s220
      %p224 = scmp.eq.s32.totalorder %s37, 0
      %p225 = por %p223, %p224
      %p226 = scmp.ne.s32.totalorder %s218, %s220
      %p227 = scmp.eq.s32.totalorder %s42, 1
      %p228 = por %p226, %p227
      %p229 = scmp.ne.s32.totalorder %s220, %s221
      %p230 = scmp.eq.s32.totalorder %s42, 0
      %p231 = por %p229, %p230
      %p232 = scmp.ne.s32.totalorder %s220, %s221
      %p233 = scmp.eq.s32.totalorder %s43, 1
      %p234 = por %p232, %p233
      %p236 = scmp.ne.s32.totalorder %s221, %s235
      %p237 = scmp.eq.s32.totalorder %s43, 0
      %p238 = por %p236, %p237
      %s240 = sadd.s32 %s239, 1
      %p243 = scmp.eq.s32.totalorder %s37, 1
      %p244 = scmp.ne.s32.totalorder %s239, %s241
      %p245 = scmp.eq.s32.totalorder %s37, 0
      %p246 = por %p244, %p245
      %p247 = scmp.ne.s32.totalorder %s239, %s241
      %p248 = scmp.eq.s32.totalorder %s42, 1
      %p249 = por %p247, %p248
      %p250 = scmp.ne.s32.totalorder %s241, %s242
      %p251 = scmp.eq.s32.totalorder %s42, 0
      %p252 = por %p250, %p251
      %p253 = scmp.ne.s32.totalorder %s241, %s242
      %p254 = scmp.eq.s32.totalorder %s43, 1
      %p255 = por %p253, %p254
      %p257 = scmp.ne.s32.totalorder %s242, %s256
      %p258 = scmp.eq.s32.totalorder %s43, 0
      %p259 = por %p257, %p258
      %s261 = sadd.s32 %s260, 1
      %p264 = scmp.eq.s32.totalorder %s37, 1
      %p265 = scmp.ne.s32.totalorder %s260, %s262
      %p266 = scmp.eq.s32.totalorder %s37, 0
      %p267 = por %p265, %p266
      %p268 = scmp.ne.s32.totalorder %s260, %s262
      %p269 = scmp.eq.s32.totalorder %s42, 1
      %p270 = por %p268, %p269
      %p271 = scmp.ne.s32.totalorder %s262, %s263
      %p272 = scmp.eq.s32.totalorder %s42, 0
      %p273 = por %p271, %p272
      %p274 = scmp.ne.s32.totalorder %s262, %s263
      %p275 = scmp.eq.s32.totalorder %s43, 1
      %p276 = por %p274, %p275
      %p278 = scmp.ne.s32.totalorder %s263, %s277
      %p279 = scmp.eq.s32.totalorder %s43, 0
      %p280 = por %p278, %p279
      %s282 = sadd.s32 %s281, 1
      %p285 = scmp.eq.s32.totalorder %s37, 1
      %p286 = scmp.ne.s32.totalorder %s281, %s283
      %p287 = scmp.eq.s32.totalorder %s37, 0
      %p288 = por %p286, %p287
      %p289 = scmp.ne.s32.totalorder %s281, %s283
      %p290 = scmp.eq.s32.totalorder %s42, 1
      %p291 = por %p289, %p290
      %p292 = scmp.ne.s32.totalorder %s283, %s284
      %p293 = scmp.eq.s32.totalorder %s42, 0
      %p294 = por %p292, %p293
      %p295 = scmp.ne.s32.totalorder %s283, %s284
      %p296 = scmp.eq.s32.totalorder %s43, 1
      %p297 = por %p295, %p296
      %p299 = scmp.ne.s32.totalorder %s284, %s298
      %p300 = scmp.eq.s32.totalorder %s43, 0
      %p301 = por %p299, %p300
      %s303 = sadd.s32 %s302, 1
      %p306 = scmp.eq.s32.totalorder %s37, 1
      %p307 = scmp.ne.s32.totalorder %s302, %s304
      %p308 = scmp.eq.s32.totalorder %s37, 0
      %p309 = por %p307, %p308
      %p310 = scmp.ne.s32.totalorder %s302, %s304
      %p311 = scmp.eq.s32.totalorder %s42, 1
      %p312 = por %p310, %p311
      %p313 = scmp.ne.s32.totalorder %s304, %s305
      %p314 = scmp.eq.s32.totalorder %s42, 0
      %p315 = por %p313, %p314
      %p316 = scmp.ne.s32.totalorder %s304, %s305
      %p317 = scmp.eq.s32.totalorder %s43, 1
      %p318 = por %p316, %p317
      %p320 = scmp.ne.s32.totalorder %s305, %s319
      %p321 = scmp.eq.s32.totalorder %s43, 0
      %p322 = por %p320, %p321
      %s324 = sadd.s32 %s323, 1
      %p327 = scmp.eq.s32.totalorder %s37, 1
      %p328 = scmp.ne.s32.totalorder %s323, %s325
      %p329 = scmp.eq.s32.totalorder %s37, 0
      %p330 = por %p328, %p329
      %p331 = scmp.ne.s32.totalorder %s323, %s325
      %p332 = scmp.eq.s32.totalorder %s42, 1
      %p333 = por %p331, %p332
      %p334 = scmp.ne.s32.totalorder %s325, %s326
      %p335 = scmp.eq.s32.totalorder %s42, 0
      %p336 = por %p334, %p335
      %p337 = scmp.ne.s32.totalorder %s325, %s326
      %p338 = scmp.eq.s32.totalorder %s43, 1
      %p339 = por %p337, %p338
      %p341 = scmp.ne.s32.totalorder %s326, %s340
      %p342 = scmp.eq.s32.totalorder %s43, 0
      %p343 = por %p341, %p342
      %s345 = sadd.s32 %s344, 1
      %p348 = scmp.eq.s32.totalorder %s37, 1
      %p349 = scmp.ne.s32.totalorder %s344, %s346
      %p350 = scmp.eq.s32.totalorder %s37, 0
      %p351 = por %p349, %p350
      %p352 = scmp.ne.s32.totalorder %s344, %s346
      %p353 = scmp.eq.s32.totalorder %s42, 1
      %p354 = por %p352, %p353
      %p355 = scmp.ne.s32.totalorder %s346, %s347
      %p356 = scmp.eq.s32.totalorder %s42, 0
      %p357 = por %p355, %p356
      %p358 = scmp.ne.s32.totalorder %s346, %s347
      %p359 = scmp.eq.s32.totalorder %s43, 1
      %p360 = por %p358, %p359
      %p362 = scmp.ne.s32.totalorder %s347, %s361
      %p363 = scmp.eq.s32.totalorder %s43, 0
      %p364 = por %p362, %p363
      %s366 = sadd.s32 %s365, 1
      %p369 = scmp.eq.s32.totalorder %s37, 1
      %p370 = scmp.ne.s32.totalorder %s365, %s367
      %p371 = scmp.eq.s32.totalorder %s37, 0
      %p372 = por %p370, %p371
      %p373 = scmp.ne.s32.totalorder %s365, %s367
      %p374 = scmp.eq.s32.totalorder %s42, 1
      %p375 = por %p373, %p374
      %p376 = scmp.ne.s32.totalorder %s367, %s368
      %p377 = scmp.eq.s32.totalorder %s42, 0
      %p378 = por %p376, %p377
      %p379 = scmp.ne.s32.totalorder %s367, %s368
      %p380 = scmp.eq.s32.totalorder %s43, 1
      %p381 = por %p379, %p380
      %p383 = scmp.ne.s32.totalorder %s368, %s382
      %p384 = scmp.eq.s32.totalorder %s43, 0
      %p385 = por %p383, %p384
      %s387 = sadd.s32 %s386, 1
      %p390 = scmp.eq.s32.totalorder %s37, 1
      %p391 = scmp.ne.s32.totalorder %s386, %s388
      %p392 = scmp.eq.s32.totalorder %s37, 0
      %p393 = por %p391, %p392
      %p394 = scmp.ne.s32.totalorder %s386, %s388
      %p395 = scmp.eq.s32.totalorder %s42, 1
      %p396 = por %p394, %p395
      %p397 = scmp.ne.s32.totalorder %s388, %s389
      %p398 = scmp.eq.s32.totalorder %s42, 0
      %p399 = por %p397, %p398
      %p400 = scmp.ne.s32.totalorder %s388, %s389
      %p401 = scmp.eq.s32.totalorder %s43, 1
      %p402 = por %p400, %p401
      %p404 = scmp.ne.s32.totalorder %s389, %s403
      %p405 = scmp.eq.s32.totalorder %s43, 0
      %p406 = por %p404, %p405
      %s408 = sadd.s32 %s407, 1
      %p411 = scmp.eq.s32.totalorder %s37, 1
      %p412 = scmp.ne.s32.totalorder %s407, %s409
      %p413 = scmp.eq.s32.totalorder %s37, 0
      %p414 = por %p412, %p413
      %p415 = scmp.ne.s32.totalorder %s407, %s409
      %p416 = scmp.eq.s32.totalorder %s42, 1
      %p417 = por %p415, %p416
      %p418 = scmp.ne.s32.totalorder %s409, %s410
      %p419 = scmp.eq.s32.totalorder %s42, 0
      %p420 = por %p418, %p419
      %p421 = scmp.ne.s32.totalorder %s409, %s410
      %p422 = scmp.eq.s32.totalorder %s43, 1
      %p423 = por %p421, %p422
      %p425 = scmp.ne.s32.totalorder %s410, %s424
      %p426 = scmp.eq.s32.totalorder %s43, 0
      %p427 = por %p425, %p426
      %s429 = sadd.s32 %s428, 1
      %p432 = scmp.eq.s32.totalorder %s37, 1
      %p433 = scmp.ne.s32.totalorder %s428, %s430
      %p434 = scmp.eq.s32.totalorder %s37, 0
      %p435 = por %p433, %p434
      %p436 = scmp.ne.s32.totalorder %s428, %s430
      %p437 = scmp.eq.s32.totalorder %s42, 1
      %p438 = por %p436, %p437
      %p439 = scmp.ne.s32.totalorder %s430, %s431
      %p440 = scmp.eq.s32.totalorder %s42, 0
      %p441 = por %p439, %p440
      %p442 = scmp.ne.s32.totalorder %s430, %s431
      %p443 = scmp.eq.s32.totalorder %s43, 1
      %p444 = por %p442, %p443
      %p446 = scmp.ne.s32.totalorder %s431, %s445
      %p447 = scmp.eq.s32.totalorder %s43, 0
      %p448 = por %p446, %p447
      %s450 = sadd.s32 %s449, 1
      %p453 = scmp.eq.s32.totalorder %s37, 1
      %p454 = scmp.ne.s32.totalorder %s449, %s451
      %p455 = scmp.eq.s32.totalorder %s37, 0
      %p456 = por %p454, %p455
      %p457 = scmp.ne.s32.totalorder %s449, %s451
      %p458 = scmp.eq.s32.totalorder %s42, 1
      %p459 = por %p457, %p458
      %p460 = scmp.ne.s32.totalorder %s451, %s452
      %p461 = scmp.eq.s32.totalorder %s42, 0
      %p462 = por %p460, %p461
      %p463 = scmp.ne.s32.totalorder %s451, %s452
      %p464 = scmp.eq.s32.totalorder %s43, 1
      %p465 = por %p463, %p464
      %p467 = scmp.ne.s32.totalorder %s452, %s466
      %p468 = scmp.eq.s32.totalorder %s43, 0
      %p469 = por %p467, %p468
      %s471 = sadd.s32 %s470, 1
      %p474 = scmp.eq.s32.totalorder %s37, 1
      %p475 = scmp.ne.s32.totalorder %s470, %s472
      %p476 = scmp.eq.s32.totalorder %s37, 0
      %p477 = por %p475, %p476
      %p478 = scmp.ne.s32.totalorder %s470, %s472
      %p479 = scmp.eq.s32.totalorder %s42, 1
      %p480 = por %p478, %p479
      %p481 = scmp.ne.s32.totalorder %s472, %s473
      %p482 = scmp.eq.s32.totalorder %s42, 0
      %p483 = por %p481, %p482
      %p484 = scmp.ne.s32.totalorder %s472, %s473
      %p485 = scmp.eq.s32.totalorder %s43, 1
      %p486 = por %p484, %p485
      %p488 = scmp.ne.s32.totalorder %s473, %s487
      %p489 = scmp.eq.s32.totalorder %s43, 0
      %p490 = por %p488, %p489
      %s492 = sadd.s32 %s491, 1
      %p495 = scmp.eq.s32.totalorder %s37, 1
      %p496 = scmp.ne.s32.totalorder %s491, %s493
      %p497 = scmp.eq.s32.totalorder %s37, 0
      %p498 = por %p496, %p497
      %p499 = scmp.ne.s32.totalorder %s491, %s493
      %p500 = scmp.eq.s32.totalorder %s42, 1
      %p501 = por %p499, %p500
      %p502 = scmp.ne.s32.totalorder %s493, %s494
      %p503 = scmp.eq.s32.totalorder %s42, 0
      %p504 = por %p502, %p503
      %p505 = scmp.ne.s32.totalorder %s493, %s494
      %p506 = scmp.eq.s32.totalorder %s43, 1
      %p507 = por %p505, %p506
      %p509 = scmp.ne.s32.totalorder %s494, %s508
      %p510 = scmp.eq.s32.totalorder %s43, 0
      %p511 = por %p509, %p510
      %s513 = sadd.s32 %s512, 1
      %p516 = scmp.eq.s32.totalorder %s37, 1
      %p517 = scmp.ne.s32.totalorder %s512, %s514
      %p518 = scmp.eq.s32.totalorder %s37, 0
      %p519 = por %p517, %p518
      %p520 = scmp.ne.s32.totalorder %s512, %s514
      %p521 = scmp.eq.s32.totalorder %s42, 1
      %p522 = por %p520, %p521
      %p523 = scmp.ne.s32.totalorder %s514, %s515
      %p524 = scmp.eq.s32.totalorder %s42, 0
      %p525 = por %p523, %p524
      %p526 = scmp.ne.s32.totalorder %s514, %s515
      %p527 = scmp.eq.s32.totalorder %s43, 1
      %p528 = por %p526, %p527
      %p530 = scmp.ne.s32.totalorder %s515, %s529
      %p531 = scmp.eq.s32.totalorder %s43, 0
      %p532 = por %p530, %p531
      %s534 = sadd.s32 %s533, 1
      %p537 = scmp.eq.s32.totalorder %s37, 1
      %p538 = scmp.ne.s32.totalorder %s533, %s535
      %p539 = scmp.eq.s32.totalorder %s37, 0
      %p540 = por %p538, %p539
      %p541 = scmp.ne.s32.totalorder %s533, %s535
      %p542 = scmp.eq.s32.totalorder %s42, 1
      %p543 = por %p541, %p542
      %p544 = scmp.ne.s32.totalorder %s535, %s536
      %p545 = scmp.eq.s32.totalorder %s42, 0
      %p546 = por %p544, %p545
      %p547 = scmp.ne.s32.totalorder %s535, %s536
      %p548 = scmp.eq.s32.totalorder %s43, 1
      %p549 = por %p547, %p548
      %p551 = scmp.ne.s32.totalorder %s536, %s550
      %p552 = scmp.eq.s32.totalorder %s43, 0
      %p553 = por %p551, %p552
      %s555 = sadd.s32 %s554, 1
      %p558 = scmp.eq.s32.totalorder %s37, 1
      %p559 = scmp.ne.s32.totalorder %s554, %s556
      %p560 = scmp.eq.s32.totalorder %s37, 0
      %p561 = por %p559, %p560
      %p562 = scmp.ne.s32.totalorder %s554, %s556
      %p563 = scmp.eq.s32.totalorder %s42, 1
      %p564 = por %p562, %p563
      %p565 = scmp.ne.s32.totalorder %s556, %s557
      %p566 = scmp.eq.s32.totalorder %s42, 0
      %p567 = por %p565, %p566
      %p568 = scmp.ne.s32.totalorder %s556, %s557
      %p569 = scmp.eq.s32.totalorder %s43, 1
      %p570 = por %p568, %p569
      %p572 = scmp.ne.s32.totalorder %s557, %s571
      %p573 = scmp.eq.s32.totalorder %s43, 0
      %p574 = por %p572, %p573
      %s576 = sadd.s32 %s575, 1
      %p579 = scmp.eq.s32.totalorder %s37, 1
      %p580 = scmp.ne.s32.totalorder %s575, %s577
      %p581 = scmp.eq.s32.totalorder %s37, 0
      %p582 = por %p580, %p581
      %p583 = scmp.ne.s32.totalorder %s575, %s577
      %p584 = scmp.eq.s32.totalorder %s42, 1
      %p585 = por %p583, %p584
      %p586 = scmp.ne.s32.totalorder %s577, %s578
      %p587 = scmp.eq.s32.totalorder %s42, 0
      %p588 = por %p586, %p587
      %p589 = scmp.ne.s32.totalorder %s577, %s578
      %p590 = scmp.eq.s32.totalorder %s43, 1
      %p591 = por %p589, %p590
      %p593 = scmp.ne.s32.totalorder %s578, %s592
      %p594 = scmp.eq.s32.totalorder %s43, 0
      %p595 = por %p593, %p594
      %s597 = sadd.s32 %s596, 1
      %p600 = scmp.eq.s32.totalorder %s37, 1
      %p601 = scmp.ne.s32.totalorder %s596, %s598
      %p602 = scmp.eq.s32.totalorder %s37, 0
      %p603 = por %p601, %p602
      %p604 = scmp.ne.s32.totalorder %s596, %s598
      %p605 = scmp.eq.s32.totalorder %s42, 1
      %p606 = por %p604, %p605
      %p607 = scmp.ne.s32.totalorder %s598, %s599
      %p608 = scmp.eq.s32.totalorder %s42, 0
      %p609 = por %p607, %p608
      %p610 = scmp.ne.s32.totalorder %s598, %s599
      %p611 = scmp.eq.s32.totalorder %s43, 1
      %p612 = por %p610, %p611
      %p614 = scmp.ne.s32.totalorder %s599, %s613
      %p615 = scmp.eq.s32.totalorder %s43, 0
      %p616 = por %p614, %p615
      %s617 = ssub.s32 %s37, %s44
      %p618 = scmp.eq.s32.totalorder %s617, 0
      %s620 = sadd.s32 %s619, 1
      %s621 = scalar_select %p618, %s619, %s620
      %p624 = pneg %p618
      %p625 = scmp.eq.s32.totalorder %s37, 1
      %p626 = por %p624, %p625
      %p627 = scmp.ne.s32.totalorder %s619, %s622
      %p628 = scmp.eq.s32.totalorder %s37, 0
      %p629 = por %p627, %p628
      %p630 = scmp.ne.s32.totalorder %s619, %s622
      %p631 = scmp.eq.s32.totalorder %s42, 1
      %p632 = por %p630, %p631
      %p633 = scmp.ne.s32.totalorder %s622, %s623
      %p634 = scmp.eq.s32.totalorder %s42, 0
      %p635 = por %p633, %p634
      %p636 = scmp.ne.s32.totalorder %s622, %s623
      %p637 = scmp.eq.s32.totalorder %s43, 1
      %p638 = por %p636, %p637
      %p640 = scmp.ne.s32.totalorder %s623, %s639
      %p641 = scmp.eq.s32.totalorder %s43, 0
      %p642 = por %p640, %p641
      %p643 = scmp.le.s32.totalorder 1, %s37
      %p644 = scmp.lt.s32.totalorder %s37, 3
      %p645 = pnand %p643, %p644
      %p646 = pneg %p645
      // Predicated region
      $region9: #{ppdpp_forward.1} parent=5 // pred_check
        _
      $region10: #{ppdpp_forward.1} parent=5 // pred_check_branch
        %648 = sbr.rel (%p645) target = $region12
      $region11: #{ppdpp_forward.1} parent=5 // pred_region
        %s649 = ssub.s32 %s37, 1
        // Predicated region
        $region13: #{ppdpp_forward.1} parent=11 // pred_check
          %p650 = pneg %p58
        $region14: #{ppdpp_forward.1} parent=11 // pred_check_branch
          %652 = sbr.rel (%p650) target = $region16
        $region15: #{ppdpp_forward.1} parent=11 // pred_region
          %s654 = ssub.s32 32, 32
          %655 = vsyncadd [#allocation5], %s654
          %s657 = sshll.u32 %s0, 4
          %s658 = int_to_ptr.vmem [resolvable:$true] %s657
          %660 = dma.vmem_to_smem %s658, 32, [#allocation3], [#allocation5]
        $region16: #{ppdpp_forward.1} parent=11 // pred_fallthru
          _
        // Predicated region
        $region17: #{ppdpp_forward.1} parent=11 // pred_check
          %p661 = pneg %p105
        $region18: #{ppdpp_forward.1} parent=11 // pred_check_branch
          %663 = sbr.rel (%p661) target = $region20
        $region19: #{ppdpp_forward.1} parent=11 // pred_region
          _
        $region20: #{ppdpp_forward.1} parent=11 // pred_fallthru
          _
        // Predicated region
        $region21: #{ppdpp_forward.1} parent=11 // pred_check
          %p664 = pneg %p126
        $region22: #{ppdpp_forward.1} parent=11 // pred_check_branch
          %666 = sbr.rel (%p664) target = $region24
        $region23: #{ppdpp_forward.1} parent=11 // pred_region
          _
        $region24: #{ppdpp_forward.1} parent=11 // pred_fallthru
          _
        // Predicated region
        $region25: #{ppdpp_forward.1} parent=11 // pred_check
          %p667 = pneg %p147
        $region26: #{ppdpp_forward.1} parent=11 // pred_check_branch
          %669 = sbr.rel (%p667) target = $region28
        $region27: #{ppdpp_forward.1} parent=11 // pred_region
          _
        $region28: #{ppdpp_forward.1} parent=11 // pred_fallthru
          _
        // Predicated region
        $region29: #{ppdpp_forward.1} parent=11 // pred_check
          %p670 = pneg %p168
        $region30: #{ppdpp_forward.1} parent=11 // pred_check_branch
          %672 = sbr.rel (%p670) target = $region32
        $region31: #{ppdpp_forward.1} parent=11 // pred_region
          _
        $region32: #{ppdpp_forward.1} parent=11 // pred_fallthru
          _
        // Predicated region
        $region33: #{ppdpp_forward.1} parent=11 // pred_check
          %p673 = pneg %p189
        $region34: #{ppdpp_forward.1} parent=11 // pred_check_branch
          %675 = sbr.rel (%p673) target = $region36
        $region35: #{ppdpp_forward.1} parent=11 // pred_region
          _
        $region36: #{ppdpp_forward.1} parent=11 // pred_fallthru
          _
        // Predicated region
        $region37: #{ppdpp_forward.1} parent=11 // pred_check
          %p676 = pneg %p210
        $region38: #{ppdpp_forward.1} parent=11 // pred_check_branch
          %678 = sbr.rel (%p676) target = $region40
        $region39: #{ppdpp_forward.1} parent=11 // pred_region
          _
        $region40: #{ppdpp_forward.1} parent=11 // pred_fallthru
          _
        // Predicated region
        $region41: #{ppdpp_forward.1} parent=11 // pred_check
          %p679 = pneg %p231
        $region42: #{ppdpp_forward.1} parent=11 // pred_check_branch
          %681 = sbr.rel (%p679) target = $region44
        $region43: #{ppdpp_forward.1} parent=11 // pred_region
          _
        $region44: #{ppdpp_forward.1} parent=11 // pred_fallthru
          _
        // Predicated region
        $region45: #{ppdpp_forward.1} parent=11 // pred_check
          %p682 = pneg %p252
        $region46: #{ppdpp_forward.1} parent=11 // pred_check_branch
          %684 = sbr.rel (%p682) target = $region48
        $region47: #{ppdpp_forward.1} parent=11 // pred_region
          _
        $region48: #{ppdpp_forward.1} parent=11 // pred_fallthru
          _
        // Predicated region
        $region49: #{ppdpp_forward.1} parent=11 // pred_check
          %p685 = pneg %p273
        $region50: #{ppdpp_forward.1} parent=11 // pred_check_branch
          %687 = sbr.rel (%p685) target = $region52
        $region51: #{ppdpp_forward.1} parent=11 // pred_region
          _
        $region52: #{ppdpp_forward.1} parent=11 // pred_fallthru
          _
        // Predicated region
        $region53: #{ppdpp_forward.1} parent=11 // pred_check
          %p688 = pneg %p294
        $region54: #{ppdpp_forward.1} parent=11 // pred_check_branch
          %690 = sbr.rel (%p688) target = $region56
        $region55: #{ppdpp_forward.1} parent=11 // pred_region
          _
        $region56: #{ppdpp_forward.1} parent=11 // pred_fallthru
          _
        // Predicated region
        $region57: #{ppdpp_forward.1} parent=11 // pred_check
          %p691 = pneg %p315
        $region58: #{ppdpp_forward.1} parent=11 // pred_check_branch
          %693 = sbr.rel (%p691) target = $region60
        $region59: #{ppdpp_forward.1} parent=11 // pred_region
          _
        $region60: #{ppdpp_forward.1} parent=11 // pred_fallthru
          _
        // Predicated region
        $region61: #{ppdpp_forward.1} parent=11 // pred_check
          %p694 = pneg %p336
        $region62: #{ppdpp_forward.1} parent=11 // pred_check_branch
          %696 = sbr.rel (%p694) target = $region64
        $region63: #{ppdpp_forward.1} parent=11 // pred_region
          _
        $region64: #{ppdpp_forward.1} parent=11 // pred_fallthru
          _
        // Predicated region
        $region65: #{ppdpp_forward.1} parent=11 // pred_check
          %p697 = pneg %p357
        $region66: #{ppdpp_forward.1} parent=11 // pred_check_branch
          %699 = sbr.rel (%p697) target = $region68
        $region67: #{ppdpp_forward.1} parent=11 // pred_region
          _
        $region68: #{ppdpp_forward.1} parent=11 // pred_fallthru
          _
        // Predicated region
        $region69: #{ppdpp_forward.1} parent=11 // pred_check
          %p700 = pneg %p378
        $region70: #{ppdpp_forward.1} parent=11 // pred_check_branch
          %702 = sbr.rel (%p700) target = $region72
        $region71: #{ppdpp_forward.1} parent=11 // pred_region
          _
        $region72: #{ppdpp_forward.1} parent=11 // pred_fallthru
          _
        // Predicated region
        $region73: #{ppdpp_forward.1} parent=11 // pred_check
          %p703 = pneg %p399
        $region74: #{ppdpp_forward.1} parent=11 // pred_check_branch
          %705 = sbr.rel (%p703) target = $region76
        $region75: #{ppdpp_forward.1} parent=11 // pred_region
          _
        $region76: #{ppdpp_forward.1} parent=11 // pred_fallthru
          _
        // Predicated region
        $region77: #{ppdpp_forward.1} parent=11 // pred_check
          %p706 = pneg %p420
        $region78: #{ppdpp_forward.1} parent=11 // pred_check_branch
          %708 = sbr.rel (%p706) target = $region80
        $region79: #{ppdpp_forward.1} parent=11 // pred_region
          _
        $region80: #{ppdpp_forward.1} parent=11 // pred_fallthru
          _
        // Predicated region
        $region81: #{ppdpp_forward.1} parent=11 // pred_check
          %p709 = pneg %p441
        $region82: #{ppdpp_forward.1} parent=11 // pred_check_branch
          %711 = sbr.rel (%p709) target = $region84
        $region83: #{ppdpp_forward.1} parent=11 // pred_region
          _
        $region84: #{ppdpp_forward.1} parent=11 // pred_fallthru
          _
        // Predicated region
        $region85: #{ppdpp_forward.1} parent=11 // pred_check
          %p712 = pneg %p462
        $region86: #{ppdpp_forward.1} parent=11 // pred_check_branch
          %714 = sbr.rel (%p712) target = $region88
        $region87: #{ppdpp_forward.1} parent=11 // pred_region
          _
        $region88: #{ppdpp_forward.1} parent=11 // pred_fallthru
          _
        // Predicated region
        $region89: #{ppdpp_forward.1} parent=11 // pred_check
          %p715 = pneg %p483
        $region90: #{ppdpp_forward.1} parent=11 // pred_check_branch
          %717 = sbr.rel (%p715) target = $region92
        $region91: #{ppdpp_forward.1} parent=11 // pred_region
          _
        $region92: #{ppdpp_forward.1} parent=11 // pred_fallthru
          _
        // Predicated region
        $region93: #{ppdpp_forward.1} parent=11 // pred_check
          %p718 = pneg %p504
        $region94: #{ppdpp_forward.1} parent=11 // pred_check_branch
          %720 = sbr.rel (%p718) target = $region96
        $region95: #{ppdpp_forward.1} parent=11 // pred_region
          _
        $region96: #{ppdpp_forward.1} parent=11 // pred_fallthru
          _
        // Predicated region
        $region97: #{ppdpp_forward.1} parent=11 // pred_check
          %p721 = pneg %p525
        $region98: #{ppdpp_forward.1} parent=11 // pred_check_branch
          %723 = sbr.rel (%p721) target = $region100
        $region99: #{ppdpp_forward.1} parent=11 // pred_region
          _
        $region100: #{ppdpp_forward.1} parent=11 // pred_fallthru
          _
        // Predicated region
        $region101: #{ppdpp_forward.1} parent=11 // pred_check
          %p724 = pneg %p546
        $region102: #{ppdpp_forward.1} parent=11 // pred_check_branch
          %726 = sbr.rel (%p724) target = $region104
        $region103: #{ppdpp_forward.1} parent=11 // pred_region
          _
        $region104: #{ppdpp_forward.1} parent=11 // pred_fallthru
          _
        // Predicated region
        $region105: #{ppdpp_forward.1} parent=11 // pred_check
          %p727 = pneg %p567
        $region106: #{ppdpp_forward.1} parent=11 // pred_check_branch
          %729 = sbr.rel (%p727) target = $region108
        $region107: #{ppdpp_forward.1} parent=11 // pred_region
          _
        $region108: #{ppdpp_forward.1} parent=11 // pred_fallthru
          _
        // Predicated region
        $region109: #{ppdpp_forward.1} parent=11 // pred_check
          %p730 = pneg %p588
        $region110: #{ppdpp_forward.1} parent=11 // pred_check_branch
          %732 = sbr.rel (%p730) target = $region112
        $region111: #{ppdpp_forward.1} parent=11 // pred_region
          _
        $region112: #{ppdpp_forward.1} parent=11 // pred_fallthru
          _
        // Predicated region
        $region113: #{ppdpp_forward.1} parent=11 // pred_check
          %p733 = pneg %p609
        $region114: #{ppdpp_forward.1} parent=11 // pred_check_branch
          %735 = sbr.rel (%p733) target = $region116
        $region115: #{ppdpp_forward.1} parent=11 // pred_region
          _
        $region116: #{ppdpp_forward.1} parent=11 // pred_fallthru
          _
      $region12: #{ppdpp_forward.1} parent=5 // pred_fallthru
        _
      %p736 = scmp.lt.s32.totalorder %s37, 2
      // Predicated region
      $region117: #{ppdpp_forward.1} parent=5 // pred_check
        %p737 = pneg %p736
      $region118: #{ppdpp_forward.1} parent=5 // pred_check_branch
        %739 = sbr.rel (%p737) target = $region120
      $region119: #{ppdpp_forward.1} parent=5 // pred_region
        // Predicated region
        $region121: #{ppdpp_forward.1} parent=119 // pred_check
          %p740 = pneg %p78
        $region122: #{ppdpp_forward.1} parent=119 // pred_check_branch
          %742 = sbr.rel (%p740) target = $region124
        $region123: #{ppdpp_forward.1} parent=119 // pred_region
          %p743 = scmp.lt.s32.totalorder %s37, 1
          %s744 = scalar_select %p743, %s37, 1
          %s745 = scalar_lea.vmem %s1, %s744
        $region124: #{ppdpp_forward.1} parent=119 // pred_fallthru
          _
      $region120: #{ppdpp_forward.1} parent=5 // pred_fallthru
        _
      %p746 = scmp.le.s32.totalorder 1, %s37
      %p747 = scmp.lt.s32.totalorder %s37, 3
      %p748 = pnand %p746, %p747
      %p749 = pneg %p748
      // Predicated region
      $region125: #{ppdpp_forward.1} parent=5 // pred_check
        _
      $region126: #{ppdpp_forward.1} parent=5 // pred_check_branch
        %751 = sbr.rel (%p748) target = $region128
      $region127: #{ppdpp_forward.1} parent=5 // pred_region
        %s752 = ssub.s32 %s37, 1
        // Predicated region
        $region129: #{ppdpp_forward.1} parent=127 // pred_check
          %p753 = pneg %p58
        $region130: #{ppdpp_forward.1} parent=127 // pred_check_branch
          %755 = sbr.rel (%p753) target = $region132
        $region131: #{ppdpp_forward.1} parent=127 // pred_region
          %756 = dma.done [#allocation5], 32
        $region132: #{ppdpp_forward.1} parent=127 // pred_fallthru
          _
        %757 = sfence
        %p758 = pneg %p58
        %p759 = pneg %p55
        %p760 = scmp.lt.s32.totalorder %s42, 1
        %s761 = scalar_select %p760, %s42, 1
        %s762 = scalar_lea.vmem %s1, %s761
        %p763 = pneg %p84
        %p764 = pneg %p81
        %p765 = pneg %p105
        %p766 = pneg %p102
        %p767 = pneg %p126
        %p768 = pneg %p123
        %p769 = pneg %p147
        %p770 = pneg %p144
        %p771 = pneg %p168
        %p772 = pneg %p165
        %p773 = pneg %p189
        %p774 = pneg %p186
        %p775 = pneg %p210
        %p776 = pneg %p207
        %p777 = pneg %p231
        %p778 = pneg %p228
        %p779 = pneg %p252
        %p780 = pneg %p249
        %p781 = pneg %p273
        %p782 = pneg %p270
        %p783 = pneg %p294
        %p784 = pneg %p291
        %p785 = pneg %p315
        %p786 = pneg %p312
        %p787 = pneg %p336
        %p788 = pneg %p333
        %p789 = pneg %p357
        %p790 = pneg %p354
        %p791 = pneg %p378
        %p792 = pneg %p375
        %p793 = pneg %p399
        %p794 = pneg %p396
        %p795 = pneg %p420
        %p796 = pneg %p417
        %p797 = pneg %p441
        %p798 = pneg %p438
        %p799 = pneg %p462
        %p800 = pneg %p459
        %p801 = pneg %p483
        %p802 = pneg %p480
        %p803 = pneg %p504
        %p804 = pneg %p501
        %p805 = pneg %p525
        %p806 = pneg %p522
        %p807 = pneg %p546
        %p808 = pneg %p543
        %p809 = pneg %p567
        %p810 = pneg %p564
        %p811 = pneg %p588
        %p812 = pneg %p585
        %p813 = pneg %p609
        %p814 = pneg %p606
        %p815 = pneg %p635
        %p816 = pneg %p632
        %s817 = sand.u32 %s622, 1
        %s818 = scalar_lea.sflag [#allocation4], %s817
        %s819 = sand.u32 %s622, 1
        %s820 = scalar_lea.vmem [#allocation6], %s819
        %p821 = scmp.lt.s32.totalorder %s42, 1
        %s822 = scalar_select %p821, %s42, 1
        %s823 = scalar_lea.vmem %s1, %s822
        %s825 = smul.u32 %s42, 128
        %s826 = sld [smem:[#allocation3 + %s825]]
        %s827 = scalar_lea.vmem %s4, %s826
        %v828 = vld [vmem:[%s827] sm:$0x1]
        %vm829 = vcmask 253952
        %830 = vst.msk [vmem:[#allocation2] sm:$0x1] %vm829, %v828
        %s831 = sadd.s32 %s825, 1
        %s832 = sld [smem:[#allocation3 + %s831]]
        %s833 = scalar_lea.vmem %s4, %s832
        %v834 = vld [vmem:[%s833] sm:$0x1]
        %835 = vst.msk [vmem:[#allocation2 + $0x1] sm:$0x1] %vm829, %v834
        %s836 = sadd.s32 %s825, 2
        %s837 = sld [smem:[#allocation3 + %s836]]
        %s838 = scalar_lea.vmem %s4, %s837
        %v839 = vld [vmem:[%s838] sm:$0x1]
        %840 = vst.msk [vmem:[#allocation2 + $0x2] sm:$0x1] %vm829, %v839
        %s841 = sadd.s32 %s825, 3
        %s842 = sld [smem:[#allocation3 + %s841]]
        %s843 = scalar_lea.vmem %s4, %s842
        %v844 = vld [vmem:[%s843] sm:$0x1]
        %845 = vst.msk [vmem:[#allocation2 + $0x3] sm:$0x1] %vm829, %v844
        %s846 = sadd.s32 %s825, 4
        %s847 = sld [smem:[#allocation3 + %s846]]
        %s848 = scalar_lea.vmem %s4, %s847
        %v849 = vld [vmem:[%s848] sm:$0x1]
        %850 = vst.msk [vmem:[#allocation2 + $0x4] sm:$0x1] %vm829, %v849
        %s851 = sadd.s32 %s825, 5
        %s852 = sld [smem:[#allocation3 + %s851]]
        %s853 = scalar_lea.vmem %s4, %s852
        %v854 = vld [vmem:[%s853] sm:$0x1]
        %855 = vst.msk [vmem:[#allocation2 + $0x5] sm:$0x1] %vm829, %v854
        %s856 = sadd.s32 %s825, 6
        %s857 = sld [smem:[#allocation3 + %s856]]
        %s858 = scalar_lea.vmem %s4, %s857
        %v859 = vld [vmem:[%s858] sm:$0x1]
        %860 = vst.msk [vmem:[#allocation2 + $0x6] sm:$0x1] %vm829, %v859
        %s861 = sadd.s32 %s825, 7
        %s862 = sld [smem:[#allocation3 + %s861]]
        %s863 = scalar_lea.vmem %s4, %s862
        %v864 = vld [vmem:[%s863] sm:$0x1]
        %865 = vst.msk [vmem:[#allocation2 + $0x7] sm:$0x1] %vm829, %v864
        %v866 = vld [vmem:[#allocation2] sm:$0xff]
        %v867 = vld [vmem:[%s2] sm:$0xff]
        %v868 = vadd.f32 %v866, %v867
        %v869 = vld [vmem:[%s3] sm:$0x1]
        %v871 = vlaneseq
        %v872 = vshrl.u32 %v871, 7
        %v873 = vsub.s32 0, %v872
        %v874 = vrot.slane %v869, %v873
        %v876 = vadd.f32 %v868, %v874
        %v877 = vld [vmem:[%s5] sm:$0x1]
        %v878 = vld [vmem:[%s6] sm:$0x1]
        %vm879 = vcmask 261120
        %v880 = vsel %vm879, %v876, 0.0
        %881 = vadd.xlane.f32.xlu0 %v880
        %v882 = vpop.xlane.xlu0 %881
        %v883 = vrcp.pop 32.0
        %v884 = vmul.f32 %v882, %v883
        %v885 = vsub.f32 %v876, %v884
        %v886 = vmul.f32 %v885, %v885
        %v887 = vsel %vm879, %v886, 0.0
        %888 = vadd.xlane.f32.xlu0 %v887
        %v889 = vpop.xlane.xlu0 %888
        %v890 = vmul.f32 %v889, %v883
        %v891 = vadd.f32 %v890, 1e-12
        %v892 = vrsqrt.pop %v891
        %v893 = vmul.f32 %v885, %v892
        %v895 = vlaneseq
        %v896 = vshrl.u32 %v895, 7
        %v897 = vsub.s32 0, %v896
        %v898 = vrot.slane %v877, %v897
        %v900 = vmul.f32 %v893, %v898
        %v902 = vlaneseq
        %v903 = vshrl.u32 %v902, 7
        %v904 = vsub.s32 0, %v903
        %v905 = vrot.slane %v878, %v904
        %v907 = vadd.f32 %v900, %v905
        %v908 = vld [vmem:[%s823] sm:$0x1]
        %v909 = vpack.c.bf16 %v907, %v907
        %v910 = vld [vmem:[%s7] sm:$0xf]
        %v911 = vld [vmem:[%s7 + $0x4] sm:$0xf]
        %v912 = vld [vmem:[%s7 + $0x8] sm:$0xf]
        %v913 = vld [vmem:[%s7 + $0xc] sm:$0xf]
        %v914 = vld [vmem:[%s7 + $0x10] sm:$0xf]
        %v915 = vld [vmem:[%s7 + $0x14] sm:$0xf]
        %v916 = vld [vmem:[%s7 + $0x18] sm:$0xf]
        %v917 = vld [vmem:[%s7 + $0x1c] sm:$0xf]
        %v918 = vld [vmem:[%s7 + $0x20] sm:$0xf]
        %v919 = vld [vmem:[%s7 + $0x24] sm:$0xf]
        %v920 = vld [vmem:[%s7 + $0x28] sm:$0xf]
        %v921 = vld [vmem:[%s7 + $0x2c] sm:$0xf]
        %v922 = vld [vmem:[%s7 + $0x30] sm:$0xf]
        %v923 = vld [vmem:[%s7 + $0x34] sm:$0xf]
        %v924 = vld [vmem:[%s7 + $0x38] sm:$0xf]
        %v925 = vld [vmem:[%s7 + $0x3c] sm:$0xf]
        %v926 = vld [vmem:[%s10] sm:$0x1]
        %v927 = vld [vmem:[%s10 + $0x1] sm:$0x1]
        %v928 = vld [vmem:[%s10 + $0x2] sm:$0x1]
        %v929 = vld [vmem:[%s10 + $0x3] sm:$0x1]
        %v934 = vlaneseq
        %v935 = vshrl.u32 %v934, 7
        %v936 = vsub.s32 0, %v935
        %v937 = vrot.slane %v926, %v936
        %v938 = vlaneseq
        %v939 = vshrl.u32 %v938, 7
        %v940 = vsub.s32 0, %v939
        %v941 = vrot.slane %v927, %v940
        %v942 = vlaneseq
        %v943 = vshrl.u32 %v942, 7
        %v944 = vsub.s32 0, %v943
        %v945 = vrot.slane %v928, %v944
        %v946 = vlaneseq
        %v947 = vshrl.u32 %v946, 7
        %v948 = vsub.s32 0, %v947
        %v949 = vrot.slane %v929, %v948
        %v958 = vunpack.c.l.b16 %v910
        %v959 = vunpack.c.l.b16 %v911
        %v960 = vunpack.c.l.b16 %v912
        %v961 = vunpack.c.l.b16 %v913
        %v962 = vpack.c.b16 %v959, %v958
        %v963 = vpack.c.b16 %v961, %v960
        %v967 = vsel %vm879, %v909, 0
        %969 = vmatprep.subr.bf16.mxu0 0
        %970 = vmatpush1.bf16.msra.mxu0 %v962
        %971 = vmatprep.subr.bf16.mxu0 0
        %972 = vmatpush1.bf16.msra.mxu0 %v963
        %973 = vmatprep.subr.bf16.mxu0 0
        %974 = vmatpush1.bf16.msra.mxu0 0
        %975 = vmatprep.subr.bf16.mxu0 0
        %976 = vmatpush1.bf16.msra.mxu0 0
        %977 = vmatprep.subr.bf16.mxu0 0
        %978 = vmatpush1.bf16.msra.mxu0 0
        %979 = vmatprep.subr.bf16.mxu0 0
        %980 = vmatpush1.bf16.msra.mxu0 0
        %981 = vmatprep.subr.bf16.mxu0 0
        %982 = vmatpush1.bf16.msra.mxu0 0
        %983 = vmatprep.subr.bf16.mxu0 0
        %984 = vmatpush1.bf16.msra.mxu0 0
        %985 = vmatprep.subr.bf16.mxu0 0
        %986 = vmatpush1.bf16.msra.mxu0 0
        %987 = vmatprep.subr.bf16.mxu0 0
        %988 = vmatpush1.bf16.msra.mxu0 0
        %989 = vmatprep.subr.bf16.mxu0 0
        %990 = vmatpush1.bf16.msra.mxu0 0
        %991 = vmatprep.subr.bf16.mxu0 0
        %992 = vmatpush1.bf16.msra.mxu0 0
        %993 = vmatprep.subr.bf16.mxu0 0
        %994 = vmatpush1.bf16.msra.mxu0 0
        %995 = vmatprep.subr.bf16.mxu0 0
        %996 = vmatpush1.bf16.msra.mxu0 0
        %997 = vmatprep.subr.bf16.mxu0 0
        %998 = vmatpush1.bf16.msra.mxu0 0
        %999 = vmatprep.subr.bf16.mxu0 0
        %1000 = vmatpush1.bf16.msra.mxu0 0
        %1001 = vmatprep.mubr.bf16.mxu0 0
        %1002 = vmatmul.mubr.bf16.gmra.mrb[0].mxu0 %v967
        %v1003 = vpop.f32.mrb[0].mxu0
        %v1004 = vadd.f32 %v937, %v1003
        %v1005 = vpop.f32.mrb[0].mxu0
        %v1006 = vpop.f32.mrb[0].mxu0
        %v1007 = vpop.f32.mrb[0].mxu0
        %1008 = vdwg.mxu0
        %v1013 = vunpack.c.l.b16 %v914
        %v1014 = vunpack.c.l.b16 %v915
        %v1015 = vunpack.c.l.b16 %v916
        %v1016 = vunpack.c.l.b16 %v917
        %v1017 = vpack.c.b16 %v1014, %v1013
        %v1018 = vpack.c.b16 %v1016, %v1015
        %1021 = vmatprep.subr.bf16.mxu0 0
        %1022 = vmatpush1.bf16.msra.mxu0 %v1017
        %1023 = vmatprep.subr.bf16.mxu0 0
        %1024 = vmatpush1.bf16.msra.mxu0 %v1018
        %1025 = vmatprep.subr.bf16.mxu0 0
        %1026 = vmatpush1.bf16.msra.mxu0 0
        %1027 = vmatprep.subr.bf16.mxu0 0
        %1028 = vmatpush1.bf16.msra.mxu0 0
        %1029 = vmatprep.subr.bf16.mxu0 0
        %1030 = vmatpush1.bf16.msra.mxu0 0
        %1031 = vmatprep.subr.bf16.mxu0 0
        %1032 = vmatpush1.bf16.msra.mxu0 0
        %1033 = vmatprep.subr.bf16.mxu0 0
        %1034 = vmatpush1.bf16.msra.mxu0 0
        %1035 = vmatprep.subr.bf16.mxu0 0
        %1036 = vmatpush1.bf16.msra.mxu0 0
        %1037 = vmatprep.subr.bf16.mxu0 0
        %1038 = vmatpush1.bf16.msra.mxu0 0
        %1039 = vmatprep.subr.bf16.mxu0 0
        %1040 = vmatpush1.bf16.msra.mxu0 0
        %1041 = vmatprep.subr.bf16.mxu0 0
        %1042 = vmatpush1.bf16.msra.mxu0 0
        %1043 = vmatprep.subr.bf16.mxu0 0
        %1044 = vmatpush1.bf16.msra.mxu0 0
        %1045 = vmatprep.subr.bf16.mxu0 0
        %1046 = vmatpush1.bf16.msra.mxu0 0
        %1047 = vmatprep.subr.bf16.mxu0 0
        %1048 = vmatpush1.bf16.msra.mxu0 0
        %1049 = vmatprep.subr.bf16.mxu0 0
        %1050 = vmatpush1.bf16.msra.mxu0 0
        %1051 = vmatprep.subr.bf16.mxu0 0
        %1052 = vmatpush1.bf16.msra.mxu0 0
        %1053 = vmatprep.mubr.bf16.mxu0 0
        %1054 = vmatmul.mubr.bf16.gmra.mrb[0].mxu0 %v967
        %v1055 = vpop.f32.mrb[0].mxu0
        %v1056 = vadd.f32 %v941, %v1055
        %v1057 = vpop.f32.mrb[0].mxu0
        %v1058 = vpop.f32.mrb[0].mxu0
        %v1059 = vpop.f32.mrb[0].mxu0
        %1060 = vdwg.mxu0
        %v1065 = vunpack.c.l.b16 %v918
        %v1066 = vunpack.c.l.b16 %v919
        %v1067 = vunpack.c.l.b16 %v920
        %v1068 = vunpack.c.l.b16 %v921
        %v1069 = vpack.c.b16 %v1066, %v1065
        %v1070 = vpack.c.b16 %v1068, %v1067
        %1073 = vmatprep.subr.bf16.mxu0 0
        %1074 = vmatpush1.bf16.msra.mxu0 %v1069
        %1075 = vmatprep.subr.bf16.mxu0 0
        %1076 = vmatpush1.bf16.msra.mxu0 %v1070
        %1077 = vmatprep.subr.bf16.mxu0 0
        %1078 = vmatpush1.bf16.msra.mxu0 0
        %1079 = vmatprep.subr.bf16.mxu0 0
        %1080 = vmatpush1.bf16.msra.mxu0 0
        %1081 = vmatprep.subr.bf16.mxu0 0
        %1082 = vmatpush1.bf16.msra.mxu0 0
        %1083 = vmatprep.subr.bf16.mxu0 0
        %1084 = vmatpush1.bf16.msra.mxu0 0
        %1085 = vmatprep.subr.bf16.mxu0 0
        %1086 = vmatpush1.bf16.msra.mxu0 0
        %1087 = vmatprep.subr.bf16.mxu0 0
        %1088 = vmatpush1.bf16.msra.mxu0 0
        %1089 = vmatprep.subr.bf16.mxu0 0
        %1090 = vmatpush1.bf16.msra.mxu0 0
        %1091 = vmatprep.subr.bf16.mxu0 0
        %1092 = vmatpush1.bf16.msra.mxu0 0
        %1093 = vmatprep.subr.bf16.mxu0 0
        %1094 = vmatpush1.bf16.msra.mxu0 0
        %1095 = vmatprep.subr.bf16.mxu0 0
        %1096 = vmatpush1.bf16.msra.mxu0 0
        %1097 = vmatprep.subr.bf16.mxu0 0
        %1098 = vmatpush1.bf16.msra.mxu0 0
        %1099 = vmatprep.subr.bf16.mxu0 0
        %1100 = vmatpush1.bf16.msra.mxu0 0
        %1101 = vmatprep.subr.bf16.mxu0 0
        %1102 = vmatpush1.bf16.msra.mxu0 0
        %1103 = vmatprep.subr.bf16.mxu0 0
        %1104 = vmatpush1.bf16.msra.mxu0 0
        %1105 = vmatprep.mubr.bf16.mxu0 0
        %1106 = vmatmul.mubr.bf16.gmra.mrb[0].mxu0 %v967
        %v1107 = vpop.f32.mrb[0].mxu0
        %v1108 = vadd.f32 %v945, %v1107
        %v1109 = vpop.f32.mrb[0].mxu0
        %v1110 = vpop.f32.mrb[0].mxu0
        %v1111 = vpop.f32.mrb[0].mxu0
        %1112 = vdwg.mxu0
        %v1117 = vunpack.c.l.b16 %v922
        %v1118 = vunpack.c.l.b16 %v923
        %v1119 = vunpack.c.l.b16 %v924
        %v1120 = vunpack.c.l.b16 %v925
        %v1121 = vpack.c.b16 %v1118, %v1117
        %v1122 = vpack.c.b16 %v1120, %v1119
        %1125 = vmatprep.subr.bf16.mxu0 0
        %1126 = vmatpush1.bf16.msra.mxu0 %v1121
        %1127 = vmatprep.subr.bf16.mxu0 0
        %1128 = vmatpush1.bf16.msra.mxu0 %v1122
        %1129 = vmatprep.subr.bf16.mxu0 0
        %1130 = vmatpush1.bf16.msra.mxu0 0
        %1131 = vmatprep.subr.bf16.mxu0 0
        %1132 = vmatpush1.bf16.msra.mxu0 0
        %1133 = vmatprep.subr.bf16.mxu0 0
        %1134 = vmatpush1.bf16.msra.mxu0 0
        %1135 = vmatprep.subr.bf16.mxu0 0
        %1136 = vmatpush1.bf16.msra.mxu0 0
        %1137 = vmatprep.subr.bf16.mxu0 0
        %1138 = vmatpush1.bf16.msra.mxu0 0
        %1139 = vmatprep.subr.bf16.mxu0 0
        %1140 = vmatpush1.bf16.msra.mxu0 0
        %1141 = vmatprep.subr.bf16.mxu0 0
        %1142 = vmatpush1.bf16.msra.mxu0 0
        %1143 = vmatprep.subr.bf16.mxu0 0
        %1144 = vmatpush1.bf16.msra.mxu0 0
        %1145 = vmatprep.subr.bf16.mxu0 0
        %1146 = vmatpush1.bf16.msra.mxu0 0
        %1147 = vmatprep.subr.bf16.mxu0 0
        %1148 = vmatpush1.bf16.msra.mxu0 0
        %1149 = vmatprep.subr.bf16.mxu0 0
        %1150 = vmatpush1.bf16.msra.mxu0 0
        %1151 = vmatprep.subr.bf16.mxu0 0
        %1152 = vmatpush1.bf16.msra.mxu0 0
        %1153 = vmatprep.subr.bf16.mxu0 0
        %1154 = vmatpush1.bf16.msra.mxu0 0
        %1155 = vmatprep.subr.bf16.mxu0 0
        %1156 = vmatpush1.bf16.msra.mxu0 0
        %1157 = vmatprep.mubr.bf16.mxu0 0
        %1158 = vmatmul.mubr.bf16.gmra.mrb[0].mxu0 %v967
        %v1159 = vpop.f32.mrb[0].mxu0
        %v1160 = vadd.f32 %v949, %v1159
        %v1161 = vpop.f32.mrb[0].mxu0
        %v1162 = vpop.f32.mrb[0].mxu0
        %v1163 = vpop.f32.mrb[0].mxu0
        %1164 = vdwg.mxu0
        %v1165 = vld [vmem:[%s8] sm:$0xf]
        %v1166 = vld [vmem:[%s8 + $0x4] sm:$0xf]
        %v1167 = vld [vmem:[%s8 + $0x8] sm:$0xf]
        %v1168 = vld [vmem:[%s8 + $0xc] sm:$0xf]
        %v1169 = vld [vmem:[%s8 + $0x10] sm:$0xf]
        %v1170 = vld [vmem:[%s8 + $0x14] sm:$0xf]
        %v1171 = vld [vmem:[%s8 + $0x18] sm:$0xf]
        %v1172 = vld [vmem:[%s8 + $0x1c] sm:$0xf]
        %v1173 = vld [vmem:[%s8 + $0x20] sm:$0xf]
        %v1174 = vld [vmem:[%s8 + $0x24] sm:$0xf]
        %v1175 = vld [vmem:[%s8 + $0x28] sm:$0xf]
        %v1176 = vld [vmem:[%s8 + $0x2c] sm:$0xf]
        %v1177 = vld [vmem:[%s8 + $0x30] sm:$0xf]
        %v1178 = vld [vmem:[%s8 + $0x34] sm:$0xf]
        %v1179 = vld [vmem:[%s8 + $0x38] sm:$0xf]
        %v1180 = vld [vmem:[%s8 + $0x3c] sm:$0xf]
        %v1181 = vld [vmem:[%s11] sm:$0x1]
        %v1182 = vld [vmem:[%s11 + $0x1] sm:$0x1]
        %v1183 = vld [vmem:[%s11 + $0x2] sm:$0x1]
        %v1184 = vld [vmem:[%s11 + $0x3] sm:$0x1]
        %v1189 = vlaneseq
        %v1190 = vshrl.u32 %v1189, 7
        %v1191 = vsub.s32 0, %v1190
        %v1192 = vrot.slane %v1181, %v1191
        %v1193 = vlaneseq
        %v1194 = vshrl.u32 %v1193, 7
        %v1195 = vsub.s32 0, %v1194
        %v1196 = vrot.slane %v1182, %v1195
        %v1197 = vlaneseq
        %v1198 = vshrl.u32 %v1197, 7
        %v1199 = vsub.s32 0, %v1198
        %v1200 = vrot.slane %v1183, %v1199
        %v1201 = vlaneseq
        %v1202 = vshrl.u32 %v1201, 7
        %v1203 = vsub.s32 0, %v1202
        %v1204 = vrot.slane %v1184, %v1203
        %v1213 = vunpack.c.l.b16 %v1165
        %v1214 = vunpack.c.l.b16 %v1166
        %v1215 = vunpack.c.l.b16 %v1167
        %v1216 = vunpack.c.l.b16 %v1168
        %v1217 = vpack.c.b16 %v1214, %v1213
        %v1218 = vpack.c.b16 %v1216, %v1215
        %1221 = vmatprep.subr.bf16.mxu0 0
        %1222 = vmatpush1.bf16.msra.mxu0 %v1217
        %1223 = vmatprep.subr.bf16.mxu0 0
        %1224 = vmatpush1.bf16.msra.mxu0 %v1218
        %1225 = vmatprep.subr.bf16.mxu0 0
        %1226 = vmatpush1.bf16.msra.mxu0 0
        %1227 = vmatprep.subr.bf16.mxu0 0
        %1228 = vmatpush1.bf16.msra.mxu0 0
        %1229 = vmatprep.subr.bf16.mxu0 0
        %1230 = vmatpush1.bf16.msra.mxu0 0
        %1231 = vmatprep.subr.bf16.mxu0 0
        %1232 = vmatpush1.bf16.msra.mxu0 0
        %1233 = vmatprep.subr.bf16.mxu0 0
        %1234 = vmatpush1.bf16.msra.mxu0 0
        %1235 = vmatprep.subr.bf16.mxu0 0
        %1236 = vmatpush1.bf16.msra.mxu0 0
        %1237 = vmatprep.subr.bf16.mxu0 0
        %1238 = vmatpush1.bf16.msra.mxu0 0
        %1239 = vmatprep.subr.bf16.mxu0 0
        %1240 = vmatpush1.bf16.msra.mxu0 0
        %1241 = vmatprep.subr.bf16.mxu0 0
        %1242 = vmatpush1.bf16.msra.mxu0 0
        %1243 = vmatprep.subr.bf16.mxu0 0
        %1244 = vmatpush1.bf16.msra.mxu0 0
        %1245 = vmatprep.subr.bf16.mxu0 0
        %1246 = vmatpush1.bf16.msra.mxu0 0
        %1247 = vmatprep.subr.bf16.mxu0 0
        %1248 = vmatpush1.bf16.msra.mxu0 0
        %1249 = vmatprep.subr.bf16.mxu0 0
        %1250 = vmatpush1.bf16.msra.mxu0 0
        %1251 = vmatprep.subr.bf16.mxu0 0
        %1252 = vmatpush1.bf16.msra.mxu0 0
        %1253 = vmatprep.mubr.bf16.mxu0 0
        %1254 = vmatmul.mubr.bf16.gmra.mrb[0].mxu0 %v967
        %v1255 = vpop.f32.mrb[0].mxu0
        %v1256 = vadd.f32 %v1192, %v1255
        %v1257 = vpop.f32.mrb[0].mxu0
        %v1258 = vpop.f32.mrb[0].mxu0
        %v1259 = vpop.f32.mrb[0].mxu0
        %1260 = vdwg.mxu0
        %v1265 = vunpack.c.l.b16 %v1169
        %v1266 = vunpack.c.l.b16 %v1170
        %v1267 = vunpack.c.l.b16 %v1171
        %v1268 = vunpack.c.l.b16 %v1172
        %v1269 = vpack.c.b16 %v1266, %v1265
        %v1270 = vpack.c.b16 %v1268, %v1267
        %1273 = vmatprep.subr.bf16.mxu0 0
        %1274 = vmatpush1.bf16.msra.mxu0 %v1269
        %1275 = vmatprep.subr.bf16.mxu0 0
        %1276 = vmatpush1.bf16.msra.mxu0 %v1270
        %1277 = vmatprep.subr.bf16.mxu0 0
        %1278 = vmatpush1.bf16.msra.mxu0 0
        %1279 = vmatprep.subr.bf16.mxu0 0
        %1280 = vmatpush1.bf16.msra.mxu0 0
        %1281 = vmatprep.subr.bf16.mxu0 0
        %1282 = vmatpush1.bf16.msra.mxu0 0
        %1283 = vmatprep.subr.bf16.mxu0 0
        %1284 = vmatpush1.bf16.msra.mxu0 0
        %1285 = vmatprep.subr.bf16.mxu0 0
        %1286 = vmatpush1.bf16.msra.mxu0 0
        %1287 = vmatprep.subr.bf16.mxu0 0
        %1288 = vmatpush1.bf16.msra.mxu0 0
        %1289 = vmatprep.subr.bf16.mxu0 0
        %1290 = vmatpush1.bf16.msra.mxu0 0
        %1291 = vmatprep.subr.bf16.mxu0 0
        %1292 = vmatpush1.bf16.msra.mxu0 0
        %1293 = vmatprep.subr.bf16.mxu0 0
        %1294 = vmatpush1.bf16.msra.mxu0 0
        %1295 = vmatprep.subr.bf16.mxu0 0
        %1296 = vmatpush1.bf16.msra.mxu0 0
        %1297 = vmatprep.subr.bf16.mxu0 0
        %1298 = vmatpush1.bf16.msra.mxu0 0
        %1299 = vmatprep.subr.bf16.mxu0 0
        %1300 = vmatpush1.bf16.msra.mxu0 0
        %1301 = vmatprep.subr.bf16.mxu0 0
        %1302 = vmatpush1.bf16.msra.mxu0 0
        %1303 = vmatprep.subr.bf16.mxu0 0
        %1304 = vmatpush1.bf16.msra.mxu0 0
        %1305 = vmatprep.mubr.bf16.mxu0 0
        %1306 = vmatmul.mubr.bf16.gmra.mrb[0].mxu0 %v967
        %v1307 = vpop.f32.mrb[0].mxu0
        %v1308 = vadd.f32 %v1196, %v1307
        %v1309 = vpop.f32.mrb[0].mxu0
        %v1310 = vpop.f32.mrb[0].mxu0
        %v1311 = vpop.f32.mrb[0].mxu0
        %1312 = vdwg.mxu0
        %v1317 = vunpack.c.l.b16 %v1173
        %v1318 = vunpack.c.l.b16 %v1174
        %v1319 = vunpack.c.l.b16 %v1175
        %v1320 = vunpack.c.l.b16 %v1176
        %v1321 = vpack.c.b16 %v1318, %v1317
        %v1322 = vpack.c.b16 %v1320, %v1319
        %1325 = vmatprep.subr.bf16.mxu0 0
        %1326 = vmatpush1.bf16.msra.mxu0 %v1321
        %1327 = vmatprep.subr.bf16.mxu0 0
        %1328 = vmatpush1.bf16.msra.mxu0 %v1322
        %1329 = vmatprep.subr.bf16.mxu0 0
        %1330 = vmatpush1.bf16.msra.mxu0 0
        %1331 = vmatprep.subr.bf16.mxu0 0
        %1332 = vmatpush1.bf16.msra.mxu0 0
        %1333 = vmatprep.subr.bf16.mxu0 0
        %1334 = vmatpush1.bf16.msra.mxu0 0
        %1335 = vmatprep.subr.bf16.mxu0 0
        %1336 = vmatpush1.bf16.msra.mxu0 0
        %1337 = vmatprep.subr.bf16.mxu0 0
        %1338 = vmatpush1.bf16.msra.mxu0 0
        %1339 = vmatprep.subr.bf16.mxu0 0
        %1340 = vmatpush1.bf16.msra.mxu0 0
        %1341 = vmatprep.subr.bf16.mxu0 0
        %1342 = vmatpush1.bf16.msra.mxu0 0
        %1343 = vmatprep.subr.bf16.mxu0 0
        %1344 = vmatpush1.bf16.msra.mxu0 0
        %1345 = vmatprep.subr.bf16.mxu0 0
        %1346 = vmatpush1.bf16.msra.mxu0 0
        %1347 = vmatprep.subr.bf16.mxu0 0
        %1348 = vmatpush1.bf16.msra.mxu0 0
        %1349 = vmatprep.subr.bf16.mxu0 0
        %1350 = vmatpush1.bf16.msra.mxu0 0
        %1351 = vmatprep.subr.bf16.mxu0 0
        %1352 = vmatpush1.bf16.msra.mxu0 0
        %1353 = vmatprep.subr.bf16.mxu0 0
        %1354 = vmatpush1.bf16.msra.mxu0 0
        %1355 = vmatprep.subr.bf16.mxu0 0
        %1356 = vmatpush1.bf16.msra.mxu0 0
        %1357 = vmatprep.mubr.bf16.mxu0 0
        %1358 = vmatmul.mubr.bf16.gmra.mrb[0].mxu0 %v967
        %v1359 = vpop.f32.mrb[0].mxu0
        %v1360 = vadd.f32 %v1200, %v1359
        %v1361 = vpop.f32.mrb[0].mxu0
        %v1362 = vpop.f32.mrb[0].mxu0
        %v1363 = vpop.f32.mrb[0].mxu0
        %1364 = vdwg.mxu0
        %v1369 = vunpack.c.l.b16 %v1177
        %v1370 = vunpack.c.l.b16 %v1178
        %v1371 = vunpack.c.l.b16 %v1179
        %v1372 = vunpack.c.l.b16 %v1180
        %v1373 = vpack.c.b16 %v1370, %v1369
        %v1374 = vpack.c.b16 %v1372, %v1371
        %1377 = vmatprep.subr.bf16.mxu0 0
        %1378 = vmatpush1.bf16.msra.mxu0 %v1373
        %1379 = vmatprep.subr.bf16.mxu0 0
        %1380 = vmatpush1.bf16.msra.mxu0 %v1374
        %1381 = vmatprep.subr.bf16.mxu0 0
        %1382 = vmatpush1.bf16.msra.mxu0 0
        %1383 = vmatprep.subr.bf16.mxu0 0
        %1384 = vmatpush1.bf16.msra.mxu0 0
        %1385 = vmatprep.subr.bf16.mxu0 0
        %1386 = vmatpush1.bf16.msra.mxu0 0
        %1387 = vmatprep.subr.bf16.mxu0 0
        %1388 = vmatpush1.bf16.msra.mxu0 0
        %1389 = vmatprep.subr.bf16.mxu0 0
        %1390 = vmatpush1.bf16.msra.mxu0 0
        %1391 = vmatprep.subr.bf16.mxu0 0
        %1392 = vmatpush1.bf16.msra.mxu0 0
        %1393 = vmatprep.subr.bf16.mxu0 0
        %1394 = vmatpush1.bf16.msra.mxu0 0
        %1395 = vmatprep.subr.bf16.mxu0 0
        %1396 = vmatpush1.bf16.msra.mxu0 0
        %1397 = vmatprep.subr.bf16.mxu0 0
        %1398 = vmatpush1.bf16.msra.mxu0 0
        %1399 = vmatprep.subr.bf16.mxu0 0
        %1400 = vmatpush1.bf16.msra.mxu0 0
        %1401 = vmatprep.subr.bf16.mxu0 0
        %1402 = vmatpush1.bf16.msra.mxu0 0
        %1403 = vmatprep.subr.bf16.mxu0 0
        %1404 = vmatpush1.bf16.msra.mxu0 0
        %1405 = vmatprep.subr.bf16.mxu0 0
        %1406 = vmatpush1.bf16.msra.mxu0 0
        %1407 = vmatprep.subr.bf16.mxu0 0
        %1408 = vmatpush1.bf16.msra.mxu0 0
        %1409 = vmatprep.mubr.bf16.mxu0 0
        %1410 = vmatmul.mubr.bf16.gmra.mrb[0].mxu0 %v967
        %v1411 = vpop.f32.mrb[0].mxu0
        %v1412 = vadd.f32 %v1204, %v1411
        %v1413 = vpop.f32.mrb[0].mxu0
        %v1414 = vpop.f32.mrb[0].mxu0
        %v1415 = vpop.f32.mrb[0].mxu0
        %1416 = vdwg.mxu0
        %v1417 = vld [vmem:[%s9] sm:$0xf]
        %v1418 = vld [vmem:[%s9 + $0x4] sm:$0xf]
        %v1419 = vld [vmem:[%s9 + $0x8] sm:$0xf]
        %v1420 = vld [vmem:[%s9 + $0xc] sm:$0xf]
        %v1421 = vld [vmem:[%s9 + $0x10] sm:$0xf]
        %v1422 = vld [vmem:[%s9 + $0x14] sm:$0xf]
        %v1423 = vld [vmem:[%s9 + $0x18] sm:$0xf]
        %v1424 = vld [vmem:[%s9 + $0x1c] sm:$0xf]
        %v1425 = vld [vmem:[%s9 + $0x20] sm:$0xf]
        %v1426 = vld [vmem:[%s9 + $0x24] sm:$0xf]
        %v1427 = vld [vmem:[%s9 + $0x28] sm:$0xf]
        %v1428 = vld [vmem:[%s9 + $0x2c] sm:$0xf]
        %v1429 = vld [vmem:[%s9 + $0x30] sm:$0xf]
        %v1430 = vld [vmem:[%s9 + $0x34] sm:$0xf]
        %v1431 = vld [vmem:[%s9 + $0x38] sm:$0xf]
        %v1432 = vld [vmem:[%s9 + $0x3c] sm:$0xf]
        %v1433 = vld [vmem:[%s12] sm:$0x1]
        %v1434 = vld [vmem:[%s12 + $0x1] sm:$0x1]
        %v1435 = vld [vmem:[%s12 + $0x2] sm:$0x1]
        %v1436 = vld [vmem:[%s12 + $0x3] sm:$0x1]
        %v1441 = vlaneseq
        %v1442 = vshrl.u32 %v1441, 7
        %v1443 = vsub.s32 0, %v1442
        %v1444 = vrot.slane %v1433, %v1443
        %v1445 = vlaneseq
        %v1446 = vshrl.u32 %v1445, 7
        %v1447 = vsub.s32 0, %v1446
        %v1448 = vrot.slane %v1434, %v1447
        %v1449 = vlaneseq
        %v1450 = vshrl.u32 %v1449, 7
        %v1451 = vsub.s32 0, %v1450
        %v1452 = vrot.slane %v1435, %v1451
        %v1453 = vlaneseq
        %v1454 = vshrl.u32 %v1453, 7
        %v1455 = vsub.s32 0, %v1454
        %v1456 = vrot.slane %v1436, %v1455
        %v1465 = vunpack.c.l.b16 %v1417
        %v1466 = vunpack.c.l.b16 %v1418
        %v1467 = vunpack.c.l.b16 %v1419
        %v1468 = vunpack.c.l.b16 %v1420
        %v1469 = vpack.c.b16 %v1466, %v1465
        %v1470 = vpack.c.b16 %v1468, %v1467
        %1473 = vmatprep.subr.bf16.mxu0 0
        %1474 = vmatpush1.bf16.msra.mxu0 %v1469
        %1475 = vmatprep.subr.bf16.mxu0 0
        %1476 = vmatpush1.bf16.msra.mxu0 %v1470
        %1477 = vmatprep.subr.bf16.mxu0 0
        %1478 = vmatpush1.bf16.msra.mxu0 0
        %1479 = vmatprep.subr.bf16.mxu0 0
        %1480 = vmatpush1.bf16.msra.mxu0 0
        %1481 = vmatprep.subr.bf16.mxu0 0
        %1482 = vmatpush1.bf16.msra.mxu0 0
        %1483 = vmatprep.subr.bf16.mxu0 0
        %1484 = vmatpush1.bf16.msra.mxu0 0
        %1485 = vmatprep.subr.bf16.mxu0 0
        %1486 = vmatpush1.bf16.msra.mxu0 0
        %1487 = vmatprep.subr.bf16.mxu0 0
        %1488 = vmatpush1.bf16.msra.mxu0 0
        %1489 = vmatprep.subr.bf16.mxu0 0
        %1490 = vmatpush1.bf16.msra.mxu0 0
        %1491 = vmatprep.subr.bf16.mxu0 0
        %1492 = vmatpush1.bf16.msra.mxu0 0
        %1493 = vmatprep.subr.bf16.mxu0 0
        %1494 = vmatpush1.bf16.msra.mxu0 0
        %1495 = vmatprep.subr.bf16.mxu0 0
        %1496 = vmatpush1.bf16.msra.mxu0 0
        %1497 = vmatprep.subr.bf16.mxu0 0
        %1498 = vmatpush1.bf16.msra.mxu0 0
        %1499 = vmatprep.subr.bf16.mxu0 0
        %1500 = vmatpush1.bf16.msra.mxu0 0
        %1501 = vmatprep.subr.bf16.mxu0 0
        %1502 = vmatpush1.bf16.msra.mxu0 0
        %1503 = vmatprep.subr.bf16.mxu0 0
        %1504 = vmatpush1.bf16.msra.mxu0 0
        %1505 = vmatprep.mubr.bf16.mxu0 0
        %1506 = vmatmul.mubr.bf16.gmra.mrb[0].mxu0 %v967
        %v1507 = vpop.f32.mrb[0].mxu0
        %v1508 = vadd.f32 %v1444, %v1507
        %v1509 = vpop.f32.mrb[0].mxu0
        %v1510 = vpop.f32.mrb[0].mxu0
        %v1511 = vpop.f32.mrb[0].mxu0
        %1512 = vdwg.mxu0
        %v1517 = vunpack.c.l.b16 %v1421
        %v1518 = vunpack.c.l.b16 %v1422
        %v1519 = vunpack.c.l.b16 %v1423
        %v1520 = vunpack.c.l.b16 %v1424
        %v1521 = vpack.c.b16 %v1518, %v1517
        %v1522 = vpack.c.b16 %v1520, %v1519
        %1525 = vmatprep.subr.bf16.mxu0 0
        %1526 = vmatpush1.bf16.msra.mxu0 %v1521
        %1527 = vmatprep.subr.bf16.mxu0 0
        %1528 = vmatpush1.bf16.msra.mxu0 %v1522
        %1529 = vmatprep.subr.bf16.mxu0 0
        %1530 = vmatpush1.bf16.msra.mxu0 0
        %1531 = vmatprep.subr.bf16.mxu0 0
        %1532 = vmatpush1.bf16.msra.mxu0 0
        %1533 = vmatprep.subr.bf16.mxu0 0
        %1534 = vmatpush1.bf16.msra.mxu0 0
        %1535 = vmatprep.subr.bf16.mxu0 0
        %1536 = vmatpush1.bf16.msra.mxu0 0
        %1537 = vmatprep.subr.bf16.mxu0 0
        %1538 = vmatpush1.bf16.msra.mxu0 0
        %1539 = vmatprep.subr.bf16.mxu0 0
        %1540 = vmatpush1.bf16.msra.mxu0 0
        %1541 = vmatprep.subr.bf16.mxu0 0
        %1542 = vmatpush1.bf16.msra.mxu0 0
        %1543 = vmatprep.subr.bf16.mxu0 0
        %1544 = vmatpush1.bf16.msra.mxu0 0
        %1545 = vmatprep.subr.bf16.mxu0 0
        %1546 = vmatpush1.bf16.msra.mxu0 0
        %1547 = vmatprep.subr.bf16.mxu0 0
        %1548 = vmatpush1.bf16.msra.mxu0 0
        %1549 = vmatprep.subr.bf16.mxu0 0
        %1550 = vmatpush1.bf16.msra.mxu0 0
        %1551 = vmatprep.subr.bf16.mxu0 0
        %1552 = vmatpush1.bf16.msra.mxu0 0
        %1553 = vmatprep.subr.bf16.mxu0 0
        %1554 = vmatpush1.bf16.msra.mxu0 0
        %1555 = vmatprep.subr.bf16.mxu0 0
        %1556 = vmatpush1.bf16.msra.mxu0 0
        %1557 = vmatprep.mubr.bf16.mxu0 0
        %1558 = vmatmul.mubr.bf16.gmra.mrb[0].mxu0 %v967
        %v1559 = vpop.f32.mrb[0].mxu0
        %v1560 = vadd.f32 %v1448, %v1559
        %v1561 = vpop.f32.mrb[0].mxu0
        %v1562 = vpop.f32.mrb[0].mxu0
        %v1563 = vpop.f32.mrb[0].mxu0
        %1564 = vdwg.mxu0
        %v1569 = vunpack.c.l.b16 %v1425
        %v1570 = vunpack.c.l.b16 %v1426
        %v1571 = vunpack.c.l.b16 %v1427
        %v1572 = vunpack.c.l.b16 %v1428
        %v1573 = vpack.c.b16 %v1570, %v1569
        %v1574 = vpack.c.b16 %v1572, %v1571
        %1577 = vmatprep.subr.bf16.mxu0 0
        %1578 = vmatpush1.bf16.msra.mxu0 %v1573
        %1579 = vmatprep.subr.bf16.mxu0 0
        %1580 = vmatpush1.bf16.msra.mxu0 %v1574
        %1581 = vmatprep.subr.bf16.mxu0 0
        %1582 = vmatpush1.bf16.msra.mxu0 0
        %1583 = vmatprep.subr.bf16.mxu0 0
        %1584 = vmatpush1.bf16.msra.mxu0 0
        %1585 = vmatprep.subr.bf16.mxu0 0
        %1586 = vmatpush1.bf16.msra.mxu0 0
        %1587 = vmatprep.subr.bf16.mxu0 0
        %1588 = vmatpush1.bf16.msra.mxu0 0
        %1589 = vmatprep.subr.bf16.mxu0 0
        %1590 = vmatpush1.bf16.msra.mxu0 0
        %1591 = vmatprep.subr.bf16.mxu0 0
        %1592 = vmatpush1.bf16.msra.mxu0 0
        %1593 = vmatprep.subr.bf16.mxu0 0
        %1594 = vmatpush1.bf16.msra.mxu0 0
        %1595 = vmatprep.subr.bf16.mxu0 0
        %1596 = vmatpush1.bf16.msra.mxu0 0
        %1597 = vmatprep.subr.bf16.mxu0 0
        %1598 = vmatpush1.bf16.msra.mxu0 0
        %1599 = vmatprep.subr.bf16.mxu0 0
        %1600 = vmatpush1.bf16.msra.mxu0 0
        %1601 = vmatprep.subr.bf16.mxu0 0
        %1602 = vmatpush1.bf16.msra.mxu0 0
        %1603 = vmatprep.subr.bf16.mxu0 0
        %1604 = vmatpush1.bf16.msra.mxu0 0
        %1605 = vmatprep.subr.bf16.mxu0 0
        %1606 = vmatpush1.bf16.msra.mxu0 0
        %1607 = vmatprep.subr.bf16.mxu0 0
        %1608 = vmatpush1.bf16.msra.mxu0 0
        %1609 = vmatprep.mubr.bf16.mxu0 0
        %1610 = vmatmul.mubr.bf16.gmra.mrb[0].mxu0 %v967
        %v1611 = vpop.f32.mrb[0].mxu0
        %v1612 = vadd.f32 %v1452, %v1611
        %v1613 = vpop.f32.mrb[0].mxu0
        %v1614 = vpop.f32.mrb[0].mxu0
        %v1615 = vpop.f32.mrb[0].mxu0
        %1616 = vdwg.mxu0
        %v1621 = vunpack.c.l.b16 %v1429
        %v1622 = vunpack.c.l.b16 %v1430
        %v1623 = vunpack.c.l.b16 %v1431
        %v1624 = vunpack.c.l.b16 %v1432
        %v1625 = vpack.c.b16 %v1622, %v1621
        %v1626 = vpack.c.b16 %v1624, %v1623
        %1629 = vmatprep.subr.bf16.mxu0 0
        %1630 = vmatpush1.bf16.msra.mxu0 %v1625
        %1631 = vmatprep.subr.bf16.mxu0 0
        %1632 = vmatpush1.bf16.msra.mxu0 %v1626
        %1633 = vmatprep.subr.bf16.mxu0 0
        %1634 = vmatpush1.bf16.msra.mxu0 0
        %1635 = vmatprep.subr.bf16.mxu0 0
        %1636 = vmatpush1.bf16.msra.mxu0 0
        %1637 = vmatprep.subr.bf16.mxu0 0
        %1638 = vmatpush1.bf16.msra.mxu0 0
        %1639 = vmatprep.subr.bf16.mxu0 0
        %1640 = vmatpush1.bf16.msra.mxu0 0
        %1641 = vmatprep.subr.bf16.mxu0 0
        %1642 = vmatpush1.bf16.msra.mxu0 0
        %1643 = vmatprep.subr.bf16.mxu0 0
        %1644 = vmatpush1.bf16.msra.mxu0 0
        %1645 = vmatprep.subr.bf16.mxu0 0
        %1646 = vmatpush1.bf16.msra.mxu0 0
        %1647 = vmatprep.subr.bf16.mxu0 0
        %1648 = vmatpush1.bf16.msra.mxu0 0
        %1649 = vmatprep.subr.bf16.mxu0 0
        %1650 = vmatpush1.bf16.msra.mxu0 0
        %1651 = vmatprep.subr.bf16.mxu0 0
        %1652 = vmatpush1.bf16.msra.mxu0 0
        %1653 = vmatprep.subr.bf16.mxu0 0
        %1654 = vmatpush1.bf16.msra.mxu0 0
        %1655 = vmatprep.subr.bf16.mxu0 0
        %1656 = vmatpush1.bf16.msra.mxu0 0
        %1657 = vmatprep.subr.bf16.mxu0 0
        %1658 = vmatpush1.bf16.msra.mxu0 0
        %1659 = vmatprep.subr.bf16.mxu0 0
        %1660 = vmatpush1.bf16.msra.mxu0 0
        %1661 = vmatprep.mubr.bf16.mxu0 0
        %1662 = vmatmul.mubr.bf16.gmra.mrb[0].mxu0 %v967
        %v1663 = vpop.f32.mrb[0].mxu0
        %v1664 = vadd.f32 %v1456, %v1663
        %v1665 = vpop.f32.mrb[0].mxu0
        %v1666 = vpop.f32.mrb[0].mxu0
        %v1667 = vpop.f32.mrb[0].mxu0
        %1668 = vdwg.mxu0
        %v1669 = vpack.c.bf16 %v1004, %v1004
        %v1670 = vpack.c.bf16 %v1056, %v1056
        %v1671 = vpack.c.bf16 %v1108, %v1108
        %v1672 = vpack.c.bf16 %v1160, %v1160
        %v1673 = vpack.c.bf16 %v1256, %v1256
        %v1674 = vpack.c.bf16 %v1308, %v1308
        %v1675 = vpack.c.bf16 %v1360, %v1360
        %v1676 = vpack.c.bf16 %v1412, %v1412
        %vm1677 = vcmask 64512
        %v1679 = vsel %vm1677, %v1669, 0
        %v1682 = vsel %vm1677, %v1673, 0
        %1684 = vmatprep.subr.bf16.mxu0 0
        %1685 = vmatpush1.bf16.xpose.msra.mxu0 %v1682
        %1686 = vmatprep.subr.bf16.mxu0 0
        %1687 = vmatpush1.bf16.xpose.msra.mxu0 0
        %1688 = vmatprep.subr.bf16.mxu0 0
        %1689 = vmatpush1.bf16.xpose.msra.mxu0 0
        %1690 = vmatprep.subr.bf16.mxu0 0
        %1691 = vmatpush1.bf16.xpose.msra.mxu0 0
        %1692 = vmatprep.subr.bf16.mxu0 0
        %1693 = vmatpush1.bf16.xpose.msra.mxu0 0
        %1694 = vmatprep.subr.bf16.mxu0 0
        %1695 = vmatpush1.bf16.xpose.msra.mxu0 0
        %1696 = vmatprep.subr.bf16.mxu0 0
        %1697 = vmatpush1.bf16.xpose.msra.mxu0 0
        %1698 = vmatprep.subr.bf16.mxu0 0
        %1699 = vmatpush1.bf16.xpose.msra.mxu0 0
        %1700 = vmatprep.subr.bf16.mxu0 0
        %1701 = vmatpush1.bf16.xpose.msra.mxu0 0
        %1702 = vmatprep.subr.bf16.mxu0 0
        %1703 = vmatpush1.bf16.xpose.msra.mxu0 0
        %1704 = vmatprep.subr.bf16.mxu0 0
        %1705 = vmatpush1.bf16.xpose.msra.mxu0 0
        %1706 = vmatprep.subr.bf16.mxu0 0
        %1707 = vmatpush1.bf16.xpose.msra.mxu0 0
        %1708 = vmatprep.subr.bf16.mxu0 0
        %1709 = vmatpush1.bf16.xpose.msra.mxu0 0
        %1710 = vmatprep.subr.bf16.mxu0 0
        %1711 = vmatpush1.bf16.xpose.msra.mxu0 0
        %1712 = vmatprep.subr.bf16.mxu0 0
        %1713 = vmatpush1.bf16.xpose.msra.mxu0 0
        %1714 = vmatprep.subr.bf16.mxu0 0
        %1715 = vmatpush1.bf16.xpose.msra.mxu0 0
        %1716 = vmatprep.mubr.bf16.mxu0 0
        %1717 = vmatmul.mubr.bf16.gmra.mrb[0].mxu0 %v1679
        %v1718 = vpop.f32.mrb[0].mxu0
        %v1719 = vadd.f32 0.0, %v1718
        %v1720 = vpop.f32.mrb[0].mxu0
        %v1721 = vpop.f32.mrb[0].mxu0
        %v1722 = vpop.f32.mrb[0].mxu0
        %1723 = vdwg.mxu0
        %v1725 = vsel %vm1677, %v1670, 0
        %v1728 = vsel %vm1677, %v1674, 0
        %1730 = vmatprep.subr.bf16.mxu0 0
        %1731 = vmatpush1.bf16.xpose.msra.mxu0 %v1728
        %1732 = vmatprep.subr.bf16.mxu0 0
        %1733 = vmatpush1.bf16.xpose.msra.mxu0 0
        %1734 = vmatprep.subr.bf16.mxu0 0
        %1735 = vmatpush1.bf16.xpose.msra.mxu0 0
        %1736 = vmatprep.subr.bf16.mxu0 0
        %1737 = vmatpush1.bf16.xpose.msra.mxu0 0
        %1738 = vmatprep.subr.bf16.mxu0 0
        %1739 = vmatpush1.bf16.xpose.msra.mxu0 0
        %1740 = vmatprep.subr.bf16.mxu0 0
        %1741 = vmatpush1.bf16.xpose.msra.mxu0 0
        %1742 = vmatprep.subr.bf16.mxu0 0
        %1743 = vmatpush1.bf16.xpose.msra.mxu0 0
        %1744 = vmatprep.subr.bf16.mxu0 0
        %1745 = vmatpush1.bf16.xpose.msra.mxu0 0
        %1746 = vmatprep.subr.bf16.mxu0 0
        %1747 = vmatpush1.bf16.xpose.msra.mxu0 0
        %1748 = vmatprep.subr.bf16.mxu0 0
        %1749 = vmatpush1.bf16.xpose.msra.mxu0 0
        %1750 = vmatprep.subr.bf16.mxu0 0
        %1751 = vmatpush1.bf16.xpose.msra.mxu0 0
        %1752 = vmatprep.subr.bf16.mxu0 0
        %1753 = vmatpush1.bf16.xpose.msra.mxu0 0
        %1754 = vmatprep.subr.bf16.mxu0 0
        %1755 = vmatpush1.bf16.xpose.msra.mxu0 0
        %1756 = vmatprep.subr.bf16.mxu0 0
        %1757 = vmatpush1.bf16.xpose.msra.mxu0 0
        %1758 = vmatprep.subr.bf16.mxu0 0
        %1759 = vmatpush1.bf16.xpose.msra.mxu0 0
        %1760 = vmatprep.subr.bf16.mxu0 0
        %1761 = vmatpush1.bf16.xpose.msra.mxu0 0
        %1762 = vmatprep.mubr.bf16.mxu0 0
        %1763 = vmatmul.mubr.bf16.gmra.mrb[0].mxu0 %v1725
        %v1764 = vpop.f32.mrb[0].mxu0
        %v1765 = vadd.f32 0.0, %v1764
        %v1766 = vpop.f32.mrb[0].mxu0
        %v1767 = vpop.f32.mrb[0].mxu0
        %v1768 = vpop.f32.mrb[0].mxu0
        %1769 = vdwg.mxu0
        %v1771 = vsel %vm1677, %v1671, 0
        %v1774 = vsel %vm1677, %v1675, 0
        %1776 = vmatprep.subr.bf16.mxu0 0
        %1777 = vmatpush1.bf16.xpose.msra.mxu0 %v1774
        %1778 = vmatprep.subr.bf16.mxu0 0
        %1779 = vmatpush1.bf16.xpose.msra.mxu0 0
        %1780 = vmatprep.subr.bf16.mxu0 0
        %1781 = vmatpush1.bf16.xpose.msra.mxu0 0
        %1782 = vmatprep.subr.bf16.mxu0 0
        %1783 = vmatpush1.bf16.xpose.msra.mxu0 0
        %1784 = vmatprep.subr.bf16.mxu0 0
        %1785 = vmatpush1.bf16.xpose.msra.mxu0 0
        %1786 = vmatprep.subr.bf16.mxu0 0
        %1787 = vmatpush1.bf16.xpose.msra.mxu0 0
        %1788 = vmatprep.subr.bf16.mxu0 0
        %1789 = vmatpush1.bf16.xpose.msra.mxu0 0
        %1790 = vmatprep.subr.bf16.mxu0 0
        %1791 = vmatpush1.bf16.xpose.msra.mxu0 0
        %1792 = vmatprep.subr.bf16.mxu0 0
        %1793 = vmatpush1.bf16.xpose.msra.mxu0 0
        %1794 = vmatprep.subr.bf16.mxu0 0
        %1795 = vmatpush1.bf16.xpose.msra.mxu0 0
        %1796 = vmatprep.subr.bf16.mxu0 0
        %1797 = vmatpush1.bf16.xpose.msra.mxu0 0
        %1798 = vmatprep.subr.bf16.mxu0 0
        %1799 = vmatpush1.bf16.xpose.msra.mxu0 0
        %1800 = vmatprep.subr.bf16.mxu0 0
        %1801 = vmatpush1.bf16.xpose.msra.mxu0 0
        %1802 = vmatprep.subr.bf16.mxu0 0
        %1803 = vmatpush1.bf16.xpose.msra.mxu0 0
        %1804 = vmatprep.subr.bf16.mxu0 0
        %1805 = vmatpush1.bf16.xpose.msra.mxu0 0
        %1806 = vmatprep.subr.bf16.mxu0 0
        %1807 = vmatpush1.bf16.xpose.msra.mxu0 0
        %1808 = vmatprep.mubr.bf16.mxu0 0
        %1809 = vmatmul.mubr.bf16.gmra.mrb[0].mxu0 %v1771
        %v1810 = vpop.f32.mrb[0].mxu0
        %v1811 = vadd.f32 0.0, %v1810
        %v1812 = vpop.f32.mrb[0].mxu0
        %v1813 = vpop.f32.mrb[0].mxu0
        %v1814 = vpop.f32.mrb[0].mxu0
        %1815 = vdwg.mxu0
        %v1817 = vsel %vm1677, %v1672, 0
        %v1820 = vsel %vm1677, %v1676, 0
        %1822 = vmatprep.subr.bf16.mxu0 0
        %1823 = vmatpush1.bf16.xpose.msra.mxu0 %v1820
        %1824 = vmatprep.subr.bf16.mxu0 0
        %1825 = vmatpush1.bf16.xpose.msra.mxu0 0
        %1826 = vmatprep.subr.bf16.mxu0 0
        %1827 = vmatpush1.bf16.xpose.msra.mxu0 0
        %1828 = vmatprep.subr.bf16.mxu0 0
        %1829 = vmatpush1.bf16.xpose.msra.mxu0 0
        %1830 = vmatprep.subr.bf16.mxu0 0
        %1831 = vmatpush1.bf16.xpose.msra.mxu0 0
        %1832 = vmatprep.subr.bf16.mxu0 0
        %1833 = vmatpush1.bf16.xpose.msra.mxu0 0
        %1834 = vmatprep.subr.bf16.mxu0 0
        %1835 = vmatpush1.bf16.xpose.msra.mxu0 0
        %1836 = vmatprep.subr.bf16.mxu0 0
        %1837 = vmatpush1.bf16.xpose.msra.mxu0 0
        %1838 = vmatprep.subr.bf16.mxu0 0
        %1839 = vmatpush1.bf16.xpose.msra.mxu0 0
        %1840 = vmatprep.subr.bf16.mxu0 0
        %1841 = vmatpush1.bf16.xpose.msra.mxu0 0
        %1842 = vmatprep.subr.bf16.mxu0 0
        %1843 = vmatpush1.bf16.xpose.msra.mxu0 0
        %1844 = vmatprep.subr.bf16.mxu0 0
        %1845 = vmatpush1.bf16.xpose.msra.mxu0 0
        %1846 = vmatprep.subr.bf16.mxu0 0
        %1847 = vmatpush1.bf16.xpose.msra.mxu0 0
        %1848 = vmatprep.subr.bf16.mxu0 0
        %1849 = vmatpush1.bf16.xpose.msra.mxu0 0
        %1850 = vmatprep.subr.bf16.mxu0 0
        %1851 = vmatpush1.bf16.xpose.msra.mxu0 0
        %1852 = vmatprep.subr.bf16.mxu0 0
        %1853 = vmatpush1.bf16.xpose.msra.mxu0 0
        %1854 = vmatprep.mubr.bf16.mxu0 0
        %1855 = vmatmul.mubr.bf16.gmra.mrb[0].mxu0 %v1817
        %v1856 = vpop.f32.mrb[0].mxu0
        %v1857 = vadd.f32 0.0, %v1856
        %v1858 = vpop.f32.mrb[0].mxu0
        %v1859 = vpop.f32.mrb[0].mxu0
        %v1860 = vpop.f32.mrb[0].mxu0
        %1861 = vdwg.mxu0
        %v1862 = vmul.f32 %v1719, 0.35355338
        %v1863 = vmul.f32 %v1765, 0.35355338
        %v1864 = vmul.f32 %v1811, 0.35355338
        %v1865 = vmul.f32 %v1857, 0.35355338
        %v1867 = vlaneseq
        %v1868 = vshrl.u32 %v1867, 7
        %v1869 = vsub.s32 0, %v1868
        %v1870 = vrot.slane %v908, %v1869
        %v1872 = vadd.f32 %v1862, %v1870
        %v1873 = vadd.f32 %v1863, %v1870
        %v1874 = vadd.f32 %v1864, %v1870
        %v1875 = vadd.f32 %v1865, %v1870
        %v1876 = vsel %vm1677, %v1872, -inf
        %1877 = vmax.xlane.f32.xlu0 %v1876
        %v1878 = vpop.xlane.xlu0 %1877
        %v1879 = vsel %vm1677, %v1873, -inf
        %1880 = vmax.xlane.f32.xlu0 %v1879
        %v1881 = vpop.xlane.xlu0 %1880
        %v1882 = vsel %vm1677, %v1874, -inf
        %1883 = vmax.xlane.f32.xlu0 %v1882
        %v1884 = vpop.xlane.xlu0 %1883
        %v1885 = vsel %vm1677, %v1875, -inf
        %1886 = vmax.xlane.f32.xlu0 %v1885
        %v1887 = vpop.xlane.xlu0 %1886
        %v1888 = vsub.f32 %v1872, %v1878
        %v1889 = vsub.f32 %v1873, %v1881
        %v1890 = vsub.f32 %v1874, %v1884
        %v1891 = vsub.f32 %v1875, %v1887
        %v1892 = vmul.f32 %v1888, 1.442695
        %v1893 = vpow.pop %v1892
        %v1894 = vmul.f32 %v1889, 1.442695
        %v1895 = vpow.pop %v1894
        %v1896 = vmul.f32 %v1890, 1.442695
        %v1897 = vpow.pop %v1896
        %v1898 = vmul.f32 %v1891, 1.442695
        %v1899 = vpow.pop %v1898
        %v1900 = vsel %vm1677, %v1893, 0.0
        %1901 = vadd.xlane.f32.xlu0 %v1900
        %v1902 = vpop.xlane.xlu0 %1901
        %v1903 = vsel %vm1677, %v1895, 0.0
        %1904 = vadd.xlane.f32.xlu0 %v1903
        %v1905 = vpop.xlane.xlu0 %1904
        %v1906 = vsel %vm1677, %v1897, 0.0
        %1907 = vadd.xlane.f32.xlu0 %v1906
        %v1908 = vpop.xlane.xlu0 %1907
        %v1909 = vsel %vm1677, %v1899, 0.0
        %1910 = vadd.xlane.f32.xlu0 %v1909
        %v1911 = vpop.xlane.xlu0 %1910
        %v1912 = vrcp.pop %v1902
        %v1913 = vrcp.pop %v1905
        %v1914 = vrcp.pop %v1908
        %v1915 = vrcp.pop %v1911
        %v1916 = vmul.f32 %v1893, %v1912
        %v1917 = vmul.f32 %v1895, %v1913
        %v1918 = vmul.f32 %v1897, %v1914
        %v1919 = vmul.f32 %v1899, %v1915
        %v1920 = vpack.c.bf16 %v1916, %v1916
        %v1921 = vpack.c.bf16 %v1917, %v1917
        %v1922 = vpack.c.bf16 %v1918, %v1918
        %v1923 = vpack.c.bf16 %v1919, %v1919
        %v1924 = vpack.c.bf16 %v1508, %v1508
        %v1925 = vpack.c.bf16 %v1560, %v1560
        %v1926 = vpack.c.bf16 %v1612, %v1612
        %v1927 = vpack.c.bf16 %v1664, %v1664
        %v1929 = vsel %vm1677, %v1920, 0
        %vm1931 = vcmask 1043456
        %v1933 = vsel %vm1931, %v1924, 0
        %1935 = vmatprep.subr.bf16.mxu0 0
        %1936 = vmatpush1.bf16.msra.mxu0 %v1933
        %1937 = vmatprep.subr.bf16.mxu0 0
        %1938 = vmatpush1.bf16.msra.mxu0 0
        %1939 = vmatprep.subr.bf16.mxu0 0
        %1940 = vmatpush1.bf16.msra.mxu0 0
        %1941 = vmatprep.subr.bf16.mxu0 0
        %1942 = vmatpush1.bf16.msra.mxu0 0
        %1943 = vmatprep.subr.bf16.mxu0 0
        %1944 = vmatpush1.bf16.msra.mxu0 0
        %1945 = vmatprep.subr.bf16.mxu0 0
        %1946 = vmatpush1.bf16.msra.mxu0 0
        %1947 = vmatprep.subr.bf16.mxu0 0
        %1948 = vmatpush1.bf16.msra.mxu0 0
        %1949 = vmatprep.subr.bf16.mxu0 0
        %1950 = vmatpush1.bf16.msra.mxu0 0
        %1951 = vmatprep.subr.bf16.mxu0 0
        %1952 = vmatpush1.bf16.msra.mxu0 0
        %1953 = vmatprep.subr.bf16.mxu0 0
        %1954 = vmatpush1.bf16.msra.mxu0 0
        %1955 = vmatprep.subr.bf16.mxu0 0
        %1956 = vmatpush1.bf16.msra.mxu0 0
        %1957 = vmatprep.subr.bf16.mxu0 0
        %1958 = vmatpush1.bf16.msra.mxu0 0
        %1959 = vmatprep.subr.bf16.mxu0 0
        %1960 = vmatpush1.bf16.msra.mxu0 0
        %1961 = vmatprep.subr.bf16.mxu0 0
        %1962 = vmatpush1.bf16.msra.mxu0 0
        %1963 = vmatprep.subr.bf16.mxu0 0
        %1964 = vmatpush1.bf16.msra.mxu0 0
        %1965 = vmatprep.subr.bf16.mxu0 0
        %1966 = vmatpush1.bf16.msra.mxu0 0
        %1967 = vmatprep.mubr.bf16.mxu0 0
        %1968 = vmatmul.mubr.bf16.gmra.mrb[0].mxu0 %v1929
        %v1969 = vpop.f32.mrb[0].mxu0
        %v1970 = vadd.f32 0.0, %v1969
        %v1971 = vpop.f32.mrb[0].mxu0
        %v1972 = vpop.f32.mrb[0].mxu0
        %v1973 = vpop.f32.mrb[0].mxu0
        %1974 = vdwg.mxu0
        %v1976 = vsel %vm1677, %v1921, 0
        %v1979 = vsel %vm1931, %v1925, 0
        %1981 = vmatprep.subr.bf16.mxu0 0
        %1982 = vmatpush1.bf16.msra.mxu0 %v1979
        %1983 = vmatprep.subr.bf16.mxu0 0
        %1984 = vmatpush1.bf16.msra.mxu0 0
        %1985 = vmatprep.subr.bf16.mxu0 0
        %1986 = vmatpush1.bf16.msra.mxu0 0
        %1987 = vmatprep.subr.bf16.mxu0 0
        %1988 = vmatpush1.bf16.msra.mxu0 0
        %1989 = vmatprep.subr.bf16.mxu0 0
        %1990 = vmatpush1.bf16.msra.mxu0 0
        %1991 = vmatprep.subr.bf16.mxu0 0
        %1992 = vmatpush1.bf16.msra.mxu0 0
        %1993 = vmatprep.subr.bf16.mxu0 0
        %1994 = vmatpush1.bf16.msra.mxu0 0
        %1995 = vmatprep.subr.bf16.mxu0 0
        %1996 = vmatpush1.bf16.msra.mxu0 0
        %1997 = vmatprep.subr.bf16.mxu0 0
        %1998 = vmatpush1.bf16.msra.mxu0 0
        %1999 = vmatprep.subr.bf16.mxu0 0
        %2000 = vmatpush1.bf16.msra.mxu0 0
        %2001 = vmatprep.subr.bf16.mxu0 0
        %2002 = vmatpush1.bf16.msra.mxu0 0
        %2003 = vmatprep.subr.bf16.mxu0 0
        %2004 = vmatpush1.bf16.msra.mxu0 0
        %2005 = vmatprep.subr.bf16.mxu0 0
        %2006 = vmatpush1.bf16.msra.mxu0 0
        %2007 = vmatprep.subr.bf16.mxu0 0
        %2008 = vmatpush1.bf16.msra.mxu0 0
        %2009 = vmatprep.subr.bf16.mxu0 0
        %2010 = vmatpush1.bf16.msra.mxu0 0
        %2011 = vmatprep.subr.bf16.mxu0 0
        %2012 = vmatpush1.bf16.msra.mxu0 0
        %2013 = vmatprep.mubr.bf16.mxu0 0
        %2014 = vmatmul.mubr.bf16.gmra.mrb[0].mxu0 %v1976
        %v2015 = vpop.f32.mrb[0].mxu0
        %v2016 = vadd.f32 0.0, %v2015
        %v2017 = vpop.f32.mrb[0].mxu0
        %v2018 = vpop.f32.mrb[0].mxu0
        %v2019 = vpop.f32.mrb[0].mxu0
        %2020 = vdwg.mxu0
        %v2022 = vsel %vm1677, %v1922, 0
        %v2025 = vsel %vm1931, %v1926, 0
        %2027 = vmatprep.subr.bf16.mxu0 0
        %2028 = vmatpush1.bf16.msra.mxu0 %v2025
        %2029 = vmatprep.subr.bf16.mxu0 0
        %2030 = vmatpush1.bf16.msra.mxu0 0
        %2031 = vmatprep.subr.bf16.mxu0 0
        %2032 = vmatpush1.bf16.msra.mxu0 0
        %2033 = vmatprep.subr.bf16.mxu0 0
        %2034 = vmatpush1.bf16.msra.mxu0 0
        %2035 = vmatprep.subr.bf16.mxu0 0
        %2036 = vmatpush1.bf16.msra.mxu0 0
        %2037 = vmatprep.subr.bf16.mxu0 0
        %2038 = vmatpush1.bf16.msra.mxu0 0
        %2039 = vmatprep.subr.bf16.mxu0 0
        %2040 = vmatpush1.bf16.msra.mxu0 0
        %2041 = vmatprep.subr.bf16.mxu0 0
        %2042 = vmatpush1.bf16.msra.mxu0 0
        %2043 = vmatprep.subr.bf16.mxu0 0
        %2044 = vmatpush1.bf16.msra.mxu0 0
        %2045 = vmatprep.subr.bf16.mxu0 0
        %2046 = vmatpush1.bf16.msra.mxu0 0
        %2047 = vmatprep.subr.bf16.mxu0 0
        %2048 = vmatpush1.bf16.msra.mxu0 0
        %2049 = vmatprep.subr.bf16.mxu0 0
        %2050 = vmatpush1.bf16.msra.mxu0 0
        %2051 = vmatprep.subr.bf16.mxu0 0
        %2052 = vmatpush1.bf16.msra.mxu0 0
        %2053 = vmatprep.subr.bf16.mxu0 0
        %2054 = vmatpush1.bf16.msra.mxu0 0
        %2055 = vmatprep.subr.bf16.mxu0 0
        %2056 = vmatpush1.bf16.msra.mxu0 0
        %2057 = vmatprep.subr.bf16.mxu0 0
        %2058 = vmatpush1.bf16.msra.mxu0 0
        %2059 = vmatprep.mubr.bf16.mxu0 0
        %2060 = vmatmul.mubr.bf16.gmra.mrb[0].mxu0 %v2022
        %v2061 = vpop.f32.mrb[0].mxu0
        %v2062 = vadd.f32 0.0, %v2061
        %v2063 = vpop.f32.mrb[0].mxu0
        %v2064 = vpop.f32.mrb[0].mxu0
        %v2065 = vpop.f32.mrb[0].mxu0
        %2066 = vdwg.mxu0
        %v2068 = vsel %vm1677, %v1923, 0
        %v2071 = vsel %vm1931, %v1927, 0
        %2073 = vmatprep.subr.bf16.mxu0 0
        %2074 = vmatpush1.bf16.msra.mxu0 %v2071
        %2075 = vmatprep.subr.bf16.mxu0 0
        %2076 = vmatpush1.bf16.msra.mxu0 0
        %2077 = vmatprep.subr.bf16.mxu0 0
        %2078 = vmatpush1.bf16.msra.mxu0 0
        %2079 = vmatprep.subr.bf16.mxu0 0
        %2080 = vmatpush1.bf16.msra.mxu0 0
        %2081 = vmatprep.subr.bf16.mxu0 0
        %2082 = vmatpush1.bf16.msra.mxu0 0
        %2083 = vmatprep.subr.bf16.mxu0 0
        %2084 = vmatpush1.bf16.msra.mxu0 0
        %2085 = vmatprep.subr.bf16.mxu0 0
        %2086 = vmatpush1.bf16.msra.mxu0 0
        %2087 = vmatprep.subr.bf16.mxu0 0
        %2088 = vmatpush1.bf16.msra.mxu0 0
        %2089 = vmatprep.subr.bf16.mxu0 0
        %2090 = vmatpush1.bf16.msra.mxu0 0
        %2091 = vmatprep.subr.bf16.mxu0 0
        %2092 = vmatpush1.bf16.msra.mxu0 0
        %2093 = vmatprep.subr.bf16.mxu0 0
        %2094 = vmatpush1.bf16.msra.mxu0 0
        %2095 = vmatprep.subr.bf16.mxu0 0
        %2096 = vmatpush1.bf16.msra.mxu0 0
        %2097 = vmatprep.subr.bf16.mxu0 0
        %2098 = vmatpush1.bf16.msra.mxu0 0
        %2099 = vmatprep.subr.bf16.mxu0 0
        %2100 = vmatpush1.bf16.msra.mxu0 0
        %2101 = vmatprep.subr.bf16.mxu0 0
        %2102 = vmatpush1.bf16.msra.mxu0 0
        %2103 = vmatprep.subr.bf16.mxu0 0
        %2104 = vmatpush1.bf16.msra.mxu0 0
        %2105 = vmatprep.mubr.bf16.mxu0 0
        %2106 = vmatmul.mubr.bf16.gmra.mrb[0].mxu0 %v2068
        %v2107 = vpop.f32.mrb[0].mxu0
        %v2108 = vadd.f32 0.0, %v2107
        %v2109 = vpop.f32.mrb[0].mxu0
        %v2110 = vpop.f32.mrb[0].mxu0
        %v2111 = vpop.f32.mrb[0].mxu0
        %2112 = vdwg.mxu0
        %v2113 = vpack.c.bf16 %v1970, %v1970
        %v2114 = vpack.c.bf16 %v2016, %v2016
        %v2115 = vpack.c.bf16 %v2062, %v2062
        %v2116 = vpack.c.bf16 %v2108, %v2108
        %v2117 = vld [vmem:[%s13] sm:$0xf]
        %v2118 = vld [vmem:[%s13 + $0x4] sm:$0xf]
        %v2119 = vld [vmem:[%s13 + $0x8] sm:$0xf]
        %v2120 = vld [vmem:[%s13 + $0xc] sm:$0xf]
        %v2122 = vsel %vm1677, %v2113, 0
        %v2125 = vsel %vm1931, %v2117, 0
        %2127 = vmatprep.subr.bf16.mxu0 0
        %2128 = vmatpush1.bf16.msra.mxu0 %v2125
        %2129 = vmatprep.subr.bf16.mxu0 0
        %2130 = vmatpush1.bf16.msra.mxu0 0
        %2131 = vmatprep.subr.bf16.mxu0 0
        %2132 = vmatpush1.bf16.msra.mxu0 0
        %2133 = vmatprep.subr.bf16.mxu0 0
        %2134 = vmatpush1.bf16.msra.mxu0 0
        %2135 = vmatprep.subr.bf16.mxu0 0
        %2136 = vmatpush1.bf16.msra.mxu0 0
        %2137 = vmatprep.subr.bf16.mxu0 0
        %2138 = vmatpush1.bf16.msra.mxu0 0
        %2139 = vmatprep.subr.bf16.mxu0 0
        %2140 = vmatpush1.bf16.msra.mxu0 0
        %2141 = vmatprep.subr.bf16.mxu0 0
        %2142 = vmatpush1.bf16.msra.mxu0 0
        %2143 = vmatprep.subr.bf16.mxu0 0
        %2144 = vmatpush1.bf16.msra.mxu0 0
        %2145 = vmatprep.subr.bf16.mxu0 0
        %2146 = vmatpush1.bf16.msra.mxu0 0
        %2147 = vmatprep.subr.bf16.mxu0 0
        %2148 = vmatpush1.bf16.msra.mxu0 0
        %2149 = vmatprep.subr.bf16.mxu0 0
        %2150 = vmatpush1.bf16.msra.mxu0 0
        %2151 = vmatprep.subr.bf16.mxu0 0
        %2152 = vmatpush1.bf16.msra.mxu0 0
        %2153 = vmatprep.subr.bf16.mxu0 0
        %2154 = vmatpush1.bf16.msra.mxu0 0
        %2155 = vmatprep.subr.bf16.mxu0 0
        %2156 = vmatpush1.bf16.msra.mxu0 0
        %2157 = vmatprep.subr.bf16.mxu0 0
        %2158 = vmatpush1.bf16.msra.mxu0 0
        %2159 = vmatprep.mubr.bf16.mxu0 0
        %2160 = vmatmul.mubr.bf16.gmra.mrb[0].mxu0 %v2122
        %v2161 = vpop.f32.mrb[0].mxu0
        %v2162 = vadd.f32 0.0, %v2161
        %v2163 = vpop.f32.mrb[0].mxu0
        %v2164 = vpop.f32.mrb[0].mxu0
        %v2165 = vpop.f32.mrb[0].mxu0
        %2166 = vdwg.mxu0
        %v2168 = vsel %vm1677, %v2114, 0
        %v2171 = vsel %vm1931, %v2118, 0
        %2173 = vmatprep.subr.bf16.mxu0 0
        %2174 = vmatpush1.bf16.msra.mxu0 %v2171
        %2175 = vmatprep.subr.bf16.mxu0 0
        %2176 = vmatpush1.bf16.msra.mxu0 0
        %2177 = vmatprep.subr.bf16.mxu0 0
        %2178 = vmatpush1.bf16.msra.mxu0 0
        %2179 = vmatprep.subr.bf16.mxu0 0
        %2180 = vmatpush1.bf16.msra.mxu0 0
        %2181 = vmatprep.subr.bf16.mxu0 0
        %2182 = vmatpush1.bf16.msra.mxu0 0
        %2183 = vmatprep.subr.bf16.mxu0 0
        %2184 = vmatpush1.bf16.msra.mxu0 0
        %2185 = vmatprep.subr.bf16.mxu0 0
        %2186 = vmatpush1.bf16.msra.mxu0 0
        %2187 = vmatprep.subr.bf16.mxu0 0
        %2188 = vmatpush1.bf16.msra.mxu0 0
        %2189 = vmatprep.subr.bf16.mxu0 0
        %2190 = vmatpush1.bf16.msra.mxu0 0
        %2191 = vmatprep.subr.bf16.mxu0 0
        %2192 = vmatpush1.bf16.msra.mxu0 0
        %2193 = vmatprep.subr.bf16.mxu0 0
        %2194 = vmatpush1.bf16.msra.mxu0 0
        %2195 = vmatprep.subr.bf16.mxu0 0
        %2196 = vmatpush1.bf16.msra.mxu0 0
        %2197 = vmatprep.subr.bf16.mxu0 0
        %2198 = vmatpush1.bf16.msra.mxu0 0
        %2199 = vmatprep.subr.bf16.mxu0 0
        %2200 = vmatpush1.bf16.msra.mxu0 0
        %2201 = vmatprep.subr.bf16.mxu0 0
        %2202 = vmatpush1.bf16.msra.mxu0 0
        %2203 = vmatprep.subr.bf16.mxu0 0
        %2204 = vmatpush1.bf16.msra.mxu0 0
        %2205 = vmatprep.mubr.bf16.mxu0 0
        %2206 = vmatmul.mubr.bf16.gmra.mrb[0].mxu0 %v2168
        %v2207 = vpop.f32.mrb[0].mxu0
        %v2208 = vadd.f32 0.0, %v2207
        %v2209 = vpop.f32.mrb[0].mxu0
        %v2210 = vpop.f32.mrb[0].mxu0
        %v2211 = vpop.f32.mrb[0].mxu0
        %2212 = vdwg.mxu0
        %v2214 = vsel %vm1677, %v2115, 0
        %v2217 = vsel %vm1931, %v2119, 0
        %2219 = vmatprep.subr.bf16.mxu0 0
        %2220 = vmatpush1.bf16.msra.mxu0 %v2217
        %2221 = vmatprep.subr.bf16.mxu0 0
        %2222 = vmatpush1.bf16.msra.mxu0 0
        %2223 = vmatprep.subr.bf16.mxu0 0
        %2224 = vmatpush1.bf16.msra.mxu0 0
        %2225 = vmatprep.subr.bf16.mxu0 0
        %2226 = vmatpush1.bf16.msra.mxu0 0
        %2227 = vmatprep.subr.bf16.mxu0 0
        %2228 = vmatpush1.bf16.msra.mxu0 0
        %2229 = vmatprep.subr.bf16.mxu0 0
        %2230 = vmatpush1.bf16.msra.mxu0 0
        %2231 = vmatprep.subr.bf16.mxu0 0
        %2232 = vmatpush1.bf16.msra.mxu0 0
        %2233 = vmatprep.subr.bf16.mxu0 0
        %2234 = vmatpush1.bf16.msra.mxu0 0
        %2235 = vmatprep.subr.bf16.mxu0 0
        %2236 = vmatpush1.bf16.msra.mxu0 0
        %2237 = vmatprep.subr.bf16.mxu0 0
        %2238 = vmatpush1.bf16.msra.mxu0 0
        %2239 = vmatprep.subr.bf16.mxu0 0
        %2240 = vmatpush1.bf16.msra.mxu0 0
        %2241 = vmatprep.subr.bf16.mxu0 0
        %2242 = vmatpush1.bf16.msra.mxu0 0
        %2243 = vmatprep.subr.bf16.mxu0 0
        %2244 = vmatpush1.bf16.msra.mxu0 0
        %2245 = vmatprep.subr.bf16.mxu0 0
        %2246 = vmatpush1.bf16.msra.mxu0 0
        %2247 = vmatprep.subr.bf16.mxu0 0
        %2248 = vmatpush1.bf16.msra.mxu0 0
        %2249 = vmatprep.subr.bf16.mxu0 0
        %2250 = vmatpush1.bf16.msra.mxu0 0
        %2251 = vmatprep.mubr.bf16.mxu0 0
        %2252 = vmatmul.mubr.bf16.gmra.mrb[0].mxu0 %v2214
        %v2253 = vpop.f32.mrb[0].mxu0
        %v2254 = vadd.f32 0.0, %v2253
        %v2255 = vpop.f32.mrb[0].mxu0
        %v2256 = vpop.f32.mrb[0].mxu0
        %v2257 = vpop.f32.mrb[0].mxu0
        %2258 = vdwg.mxu0
        %v2260 = vsel %vm1677, %v2116, 0
        %v2263 = vsel %vm1931, %v2120, 0
        %2265 = vmatprep.subr.bf16.mxu0 0
        %2266 = vmatpush1.bf16.msra.mxu0 %v2263
        %2267 = vmatprep.subr.bf16.mxu0 0
        %2268 = vmatpush1.bf16.msra.mxu0 0
        %2269 = vmatprep.subr.bf16.mxu0 0
        %2270 = vmatpush1.bf16.msra.mxu0 0
        %2271 = vmatprep.subr.bf16.mxu0 0
        %2272 = vmatpush1.bf16.msra.mxu0 0
        %2273 = vmatprep.subr.bf16.mxu0 0
        %2274 = vmatpush1.bf16.msra.mxu0 0
        %2275 = vmatprep.subr.bf16.mxu0 0
        %2276 = vmatpush1.bf16.msra.mxu0 0
        %2277 = vmatprep.subr.bf16.mxu0 0
        %2278 = vmatpush1.bf16.msra.mxu0 0
        %2279 = vmatprep.subr.bf16.mxu0 0
        %2280 = vmatpush1.bf16.msra.mxu0 0
        %2281 = vmatprep.subr.bf16.mxu0 0
        %2282 = vmatpush1.bf16.msra.mxu0 0
        %2283 = vmatprep.subr.bf16.mxu0 0
        %2284 = vmatpush1.bf16.msra.mxu0 0
        %2285 = vmatprep.subr.bf16.mxu0 0
        %2286 = vmatpush1.bf16.msra.mxu0 0
        %2287 = vmatprep.subr.bf16.mxu0 0
        %2288 = vmatpush1.bf16.msra.mxu0 0
        %2289 = vmatprep.subr.bf16.mxu0 0
        %2290 = vmatpush1.bf16.msra.mxu0 0
        %2291 = vmatprep.subr.bf16.mxu0 0
        %2292 = vmatpush1.bf16.msra.mxu0 0
        %2293 = vmatprep.subr.bf16.mxu0 0
        %2294 = vmatpush1.bf16.msra.mxu0 0
        %2295 = vmatprep.subr.bf16.mxu0 0
        %2296 = vmatpush1.bf16.msra.mxu0 0
        %2297 = vmatprep.mubr.bf16.mxu0 0
        %2298 = vmatmul.mubr.bf16.gmra.mrb[0].mxu0 %v2260
        %v2299 = vpop.f32.mrb[0].mxu0
        %v2300 = vadd.f32 0.0, %v2299
        %v2301 = vpop.f32.mrb[0].mxu0
        %v2302 = vpop.f32.mrb[0].mxu0
        %v2303 = vpop.f32.mrb[0].mxu0
        %2304 = vdwg.mxu0
        %v2305 = vsel %vm879, %v2162, 0.0
        %v2306 = vsel %vm879, %v2208, 0.0
        %v2307 = vadd.f32 %v2305, %v2306
        %v2308 = vsel %vm879, %v2254, 0.0
        %v2309 = vadd.f32 %v2307, %v2308
        %v2310 = vsel %vm879, %v2300, 0.0
        %v2311 = vadd.f32 %v2309, %v2310
        %v2312 = vld [vmem:[%s14] sm:$0x1]
        %v2314 = vlaneseq
        %v2315 = vshrl.u32 %v2314, 7
        %v2316 = vsub.s32 0, %v2315
        %v2317 = vrot.slane %v2312, %v2316
        %v2319 = vadd.f32 %v2311, %v2317
        %v2320 = vadd.f32 %v2319, %v907
        %v2321 = vld [vmem:[%s15] sm:$0x1]
        %v2322 = vld [vmem:[%s16] sm:$0x1]
        %v2323 = vsel %vm879, %v2320, 0.0
        %2324 = vadd.xlane.f32.xlu0 %v2323
        %v2325 = vpop.xlane.xlu0 %2324
        %v2326 = vmul.f32 %v2325, %v883
        %v2327 = vsub.f32 %v2320, %v2326
        %v2328 = vmul.f32 %v2327, %v2327
        %v2329 = vsel %vm879, %v2328, 0.0
        %2330 = vadd.xlane.f32.xlu0 %v2329
        %v2331 = vpop.xlane.xlu0 %2330
        %v2332 = vmul.f32 %v2331, %v883
        %v2333 = vadd.f32 %v2332, 1e-12
        %v2334 = vrsqrt.pop %v2333
        %v2335 = vmul.f32 %v2327, %v2334
        %v2337 = vlaneseq
        %v2338 = vshrl.u32 %v2337, 7
        %v2339 = vsub.s32 0, %v2338
        %v2340 = vrot.slane %v2321, %v2339
        %v2342 = vmul.f32 %v2335, %v2340
        %v2344 = vlaneseq
        %v2345 = vshrl.u32 %v2344, 7
        %v2346 = vsub.s32 0, %v2345
        %v2347 = vrot.slane %v2322, %v2346
        %v2349 = vadd.f32 %v2342, %v2347
        %v2350 = vpack.c.bf16 %v2349, %v2349
        %v2351 = vld [vmem:[%s17] sm:$0xf]
        %v2352 = vld [vmem:[%s17 + $0x4] sm:$0xf]
        %v2353 = vld [vmem:[%s17 + $0x8] sm:$0xf]
        %v2354 = vld [vmem:[%s17 + $0xc] sm:$0xf]
        %v2355 = vld [vmem:[%s18] sm:$0x1]
        %v2357 = vlaneseq
        %v2358 = vshrl.u32 %v2357, 7
        %v2359 = vsub.s32 0, %v2358
        %v2360 = vrot.slane %v2355, %v2359
        %v2366 = vunpack.c.l.b16 %v2351
        %v2367 = vunpack.c.l.b16 %v2352
        %v2368 = vunpack.c.l.b16 %v2353
        %v2369 = vunpack.c.l.b16 %v2354
        %v2370 = vpack.c.b16 %v2367, %v2366
        %v2371 = vpack.c.b16 %v2369, %v2368
        %v2375 = vsel %vm879, %v2350, 0
        %2377 = vmatprep.subr.bf16.mxu0 0
        %2378 = vmatpush1.bf16.msra.mxu0 %v2370
        %2379 = vmatprep.subr.bf16.mxu0 0
        %2380 = vmatpush1.bf16.msra.mxu0 %v2371
        %2381 = vmatprep.subr.bf16.mxu0 0
        %2382 = vmatpush1.bf16.msra.mxu0 0
        %2383 = vmatprep.subr.bf16.mxu0 0
        %2384 = vmatpush1.bf16.msra.mxu0 0
        %2385 = vmatprep.subr.bf16.mxu0 0
        %2386 = vmatpush1.bf16.msra.mxu0 0
        %2387 = vmatprep.subr.bf16.mxu0 0
        %2388 = vmatpush1.bf16.msra.mxu0 0
        %2389 = vmatprep.subr.bf16.mxu0 0
        %2390 = vmatpush1.bf16.msra.mxu0 0
        %2391 = vmatprep.subr.bf16.mxu0 0
        %2392 = vmatpush1.bf16.msra.mxu0 0
        %2393 = vmatprep.subr.bf16.mxu0 0
        %2394 = vmatpush1.bf16.msra.mxu0 0
        %2395 = vmatprep.subr.bf16.mxu0 0
        %2396 = vmatpush1.bf16.msra.mxu0 0
        %2397 = vmatprep.subr.bf16.mxu0 0
        %2398 = vmatpush1.bf16.msra.mxu0 0
        %2399 = vmatprep.subr.bf16.mxu0 0
        %2400 = vmatpush1.bf16.msra.mxu0 0
        %2401 = vmatprep.subr.bf16.mxu0 0
        %2402 = vmatpush1.bf16.msra.mxu0 0
        %2403 = vmatprep.subr.bf16.mxu0 0
        %2404 = vmatpush1.bf16.msra.mxu0 0
        %2405 = vmatprep.subr.bf16.mxu0 0
        %2406 = vmatpush1.bf16.msra.mxu0 0
        %2407 = vmatprep.subr.bf16.mxu0 0
        %2408 = vmatpush1.bf16.msra.mxu0 0
        %2409 = vmatprep.mubr.bf16.mxu0 0
        %2410 = vmatmul.mubr.bf16.gmra.mrb[0].mxu0 %v2375
        %v2411 = vpop.f32.mrb[0].mxu0
        %v2412 = vadd.f32 %v2360, %v2411
        %v2413 = vpop.f32.mrb[0].mxu0
        %v2414 = vpop.f32.mrb[0].mxu0
        %v2415 = vpop.f32.mrb[0].mxu0
        %2416 = vdwg.mxu0
        %v2417 = vmul.f32 %v2412, 0.5
        %v2418 = vmul.f32 %v2412, 0.044715
        %v2419 = vmul.f32 %v2418, %v2412
        %v2420 = vmul.f32 %v2419, %v2412
        %v2421 = vadd.f32 %v2412, %v2420
        %v2422 = vmul.f32 %v2421, 0.7978846
        %v2423 = vtanh.pop %v2422
        %v2424 = vadd.f32 %v2423, 1.0
        %v2425 = vmul.f32 %v2417, %v2424
        %v2426 = vpack.c.bf16 %v2425, %v2425
        %v2427 = vld [vmem:[%s19] sm:$0xf]
        %v2428 = vld [vmem:[%s19 + $0x4] sm:$0xf]
        %v2429 = vld [vmem:[%s19 + $0x8] sm:$0xf]
        %v2430 = vld [vmem:[%s19 + $0xc] sm:$0xf]
        %v2431 = vld [vmem:[%s19 + $0x10] sm:$0xf]
        %v2432 = vld [vmem:[%s19 + $0x14] sm:$0xf]
        %v2433 = vld [vmem:[%s19 + $0x18] sm:$0xf]
        %v2434 = vld [vmem:[%s19 + $0x1c] sm:$0xf]
        %v2435 = vld [vmem:[%s20] sm:$0x1]
        %v2437 = vlaneseq
        %v2438 = vshrl.u32 %v2437, 7
        %v2439 = vsub.s32 0, %v2438
        %v2440 = vrot.slane %v2435, %v2439
        %v2450 = vunpack.c.l.b16 %v2427
        %v2451 = vunpack.c.l.b16 %v2428
        %v2452 = vunpack.c.l.b16 %v2429
        %v2453 = vunpack.c.l.b16 %v2430
        %v2454 = vunpack.c.l.b16 %v2431
        %v2455 = vunpack.c.l.b16 %v2432
        %v2456 = vunpack.c.l.b16 %v2433
        %v2457 = vunpack.c.l.b16 %v2434
        %v2458 = vpack.c.b16 %v2451, %v2450
        %v2459 = vpack.c.b16 %v2453, %v2452
        %v2460 = vpack.c.b16 %v2455, %v2454
        %v2461 = vpack.c.b16 %v2457, %v2456
        %vm2466 = vcmask 523264
        %v2468 = vsel %vm2466, %v2426, 0
        %2470 = vmatprep.subr.bf16.mxu0 0
        %2471 = vmatpush1.bf16.msra.mxu0 %v2458
        %2472 = vmatprep.subr.bf16.mxu0 0
        %2473 = vmatpush1.bf16.msra.mxu0 %v2459
        %2474 = vmatprep.subr.bf16.mxu0 0
        %2475 = vmatpush1.bf16.msra.mxu0 %v2460
        %2476 = vmatprep.subr.bf16.mxu0 0
        %2477 = vmatpush1.bf16.msra.mxu0 %v2461
        %2478 = vmatprep.subr.bf16.mxu0 0
        %2479 = vmatpush1.bf16.msra.mxu0 0
        %2480 = vmatprep.subr.bf16.mxu0 0
        %2481 = vmatpush1.bf16.msra.mxu0 0
        %2482 = vmatprep.subr.bf16.mxu0 0
        %2483 = vmatpush1.bf16.msra.mxu0 0
        %2484 = vmatprep.subr.bf16.mxu0 0
        %2485 = vmatpush1.bf16.msra.mxu0 0
        %2486 = vmatprep.subr.bf16.mxu0 0
        %2487 = vmatpush1.bf16.msra.mxu0 0
        %2488 = vmatprep.subr.bf16.mxu0 0
        %2489 = vmatpush1.bf16.msra.mxu0 0
        %2490 = vmatprep.subr.bf16.mxu0 0
        %2491 = vmatpush1.bf16.msra.mxu0 0
        %2492 = vmatprep.subr.bf16.mxu0 0
        %2493 = vmatpush1.bf16.msra.mxu0 0
        %2494 = vmatprep.subr.bf16.mxu0 0
        %2495 = vmatpush1.bf16.msra.mxu0 0
        %2496 = vmatprep.subr.bf16.mxu0 0
        %2497 = vmatpush1.bf16.msra.mxu0 0
        %2498 = vmatprep.subr.bf16.mxu0 0
        %2499 = vmatpush1.bf16.msra.mxu0 0
        %2500 = vmatprep.subr.bf16.mxu0 0
        %2501 = vmatpush1.bf16.msra.mxu0 0
        %2502 = vmatprep.mubr.bf16.mxu0 0
        %2503 = vmatmul.mubr.bf16.gmra.mrb[0].mxu0 %v2468
        %v2504 = vpop.f32.mrb[0].mxu0
        %v2505 = vadd.f32 %v2440, %v2504
        %v2506 = vpop.f32.mrb[0].mxu0
        %v2507 = vpop.f32.mrb[0].mxu0
        %v2508 = vpop.f32.mrb[0].mxu0
        %2509 = vdwg.mxu0
        %v2510 = vadd.f32 %v2505, %v2349
        %v2511 = vld [vmem:[%s21] sm:$0x1]
        %v2512 = vld [vmem:[%s22] sm:$0x1]
        %v2513 = vsel %vm879, %v2510, 0.0
        %2514 = vadd.xlane.f32.xlu0 %v2513
        %v2515 = vpop.xlane.xlu0 %2514
        %v2516 = vmul.f32 %v2515, %v883
        %v2517 = vsub.f32 %v2510, %v2516
        %v2518 = vmul.f32 %v2517, %v2517
        %v2519 = vsel %vm879, %v2518, 0.0
        %2520 = vadd.xlane.f32.xlu0 %v2519
        %v2521 = vpop.xlane.xlu0 %2520
        %v2522 = vmul.f32 %v2521, %v883
        %v2523 = vadd.f32 %v2522, 1e-12
        %v2524 = vrsqrt.pop %v2523
        %v2525 = vmul.f32 %v2517, %v2524
        %v2527 = vlaneseq
        %v2528 = vshrl.u32 %v2527, 7
        %v2529 = vsub.s32 0, %v2528
        %v2530 = vrot.slane %v2511, %v2529
        %v2532 = vmul.f32 %v2525, %v2530
        %v2534 = vlaneseq
        %v2535 = vshrl.u32 %v2534, 7
        %v2536 = vsub.s32 0, %v2535
        %v2537 = vrot.slane %v2512, %v2536
        %v2539 = vadd.f32 %v2532, %v2537
        %v2540 = vpack.c.bf16 %v2539, %v2539
        %s2541 = scalar_lea.vmem %s7, 64
        %v2542 = vld [vmem:[%s2541] sm:$0xf]
        %v2543 = vld [vmem:[%s2541 + $0x4] sm:$0xf]
        %v2544 = vld [vmem:[%s2541 + $0x8] sm:$0xf]
        %v2545 = vld [vmem:[%s2541 + $0xc] sm:$0xf]
        %v2546 = vld [vmem:[%s2541 + $0x10] sm:$0xf]
        %v2547 = vld [vmem:[%s2541 + $0x14] sm:$0xf]
        %v2548 = vld [vmem:[%s2541 + $0x18] sm:$0xf]
        %v2549 = vld [vmem:[%s2541 + $0x1c] sm:$0xf]
        %v2550 = vld [vmem:[%s2541 + $0x20] sm:$0xf]
        %v2551 = vld [vmem:[%s2541 + $0x24] sm:$0xf]
        %v2552 = vld [vmem:[%s2541 + $0x28] sm:$0xf]
        %v2553 = vld [vmem:[%s2541 + $0x2c] sm:$0xf]
        %v2554 = vld [vmem:[%s2541 + $0x30] sm:$0xf]
        %v2555 = vld [vmem:[%s2541 + $0x34] sm:$0xf]
        %v2556 = vld [vmem:[%s2541 + $0x38] sm:$0xf]
        %v2557 = vld [vmem:[%s2541 + $0x3c] sm:$0xf]
        %s2558 = scalar_lea.vmem %s10, 4
        %v2559 = vld [vmem:[%s2558] sm:$0x1]
        %v2560 = vld [vmem:[%s2558 + $0x1] sm:$0x1]
        %v2561 = vld [vmem:[%s2558 + $0x2] sm:$0x1]
        %v2562 = vld [vmem:[%s2558 + $0x3] sm:$0x1]
        %v2567 = vlaneseq
        %v2568 = vshrl.u32 %v2567, 7
        %v2569 = vsub.s32 0, %v2568
        %v2570 = vrot.slane %v2559, %v2569
        %v2571 = vlaneseq
        %v2572 = vshrl.u32 %v2571, 7
        %v2573 = vsub.s32 0, %v2572
        %v2574 = vrot.slane %v2560, %v2573
        %v2575 = vlaneseq
        %v2576 = vshrl.u32 %v2575, 7
        %v2577 = vsub.s32 0, %v2576
        %v2578 = vrot.slane %v2561, %v2577
        %v2579 = vlaneseq
        %v2580 = vshrl.u32 %v2579, 7
        %v2581 = vsub.s32 0, %v2580
        %v2582 = vrot.slane %v2562, %v2581
        %v2591 = vunpack.c.l.b16 %v2542
        %v2592 = vunpack.c.l.b16 %v2543
        %v2593 = vunpack.c.l.b16 %v2544
        %v2594 = vunpack.c.l.b16 %v2545
        %v2595 = vpack.c.b16 %v2592, %v2591
        %v2596 = vpack.c.b16 %v2594, %v2593
        %v2600 = vsel %vm879, %v2540, 0
        %2602 = vmatprep.subr.bf16.mxu0 0
        %2603 = vmatpush1.bf16.msra.mxu0 %v2595
        %2604 = vmatprep.subr.bf16.mxu0 0
        %2605 = vmatpush1.bf16.msra.mxu0 %v2596
        %2606 = vmatprep.subr.bf16.mxu0 0
        %2607 = vmatpush1.bf16.msra.mxu0 0
        %2608 = vmatprep.subr.bf16.mxu0 0
        %2609 = vmatpush1.bf16.msra.mxu0 0
        %2610 = vmatprep.subr.bf16.mxu0 0
        %2611 = vmatpush1.bf16.msra.mxu0 0
        %2612 = vmatprep.subr.bf16.mxu0 0
        %2613 = vmatpush1.bf16.msra.mxu0 0
        %2614 = vmatprep.subr.bf16.mxu0 0
        %2615 = vmatpush1.bf16.msra.mxu0 0
        %2616 = vmatprep.subr.bf16.mxu0 0
        %2617 = vmatpush1.bf16.msra.mxu0 0
        %2618 = vmatprep.subr.bf16.mxu0 0
        %2619 = vmatpush1.bf16.msra.mxu0 0
        %2620 = vmatprep.subr.bf16.mxu0 0
        %2621 = vmatpush1.bf16.msra.mxu0 0
        %2622 = vmatprep.subr.bf16.mxu0 0
        %2623 = vmatpush1.bf16.msra.mxu0 0
        %2624 = vmatprep.subr.bf16.mxu0 0
        %2625 = vmatpush1.bf16.msra.mxu0 0
        %2626 = vmatprep.subr.bf16.mxu0 0
        %2627 = vmatpush1.bf16.msra.mxu0 0
        %2628 = vmatprep.subr.bf16.mxu0 0
        %2629 = vmatpush1.bf16.msra.mxu0 0
        %2630 = vmatprep.subr.bf16.mxu0 0
        %2631 = vmatpush1.bf16.msra.mxu0 0
        %2632 = vmatprep.subr.bf16.mxu0 0
        %2633 = vmatpush1.bf16.msra.mxu0 0
        %2634 = vmatprep.mubr.bf16.mxu0 0
        %2635 = vmatmul.mubr.bf16.gmra.mrb[0].mxu0 %v2600
        %v2636 = vpop.f32.mrb[0].mxu0
        %v2637 = vadd.f32 %v2570, %v2636
        %v2638 = vpop.f32.mrb[0].mxu0
        %v2639 = vpop.f32.mrb[0].mxu0
        %v2640 = vpop.f32.mrb[0].mxu0
        %2641 = vdwg.mxu0
        %v2646 = vunpack.c.l.b16 %v2546
        %v2647 = vunpack.c.l.b16 %v2547
        %v2648 = vunpack.c.l.b16 %v2548
        %v2649 = vunpack.c.l.b16 %v2549
        %v2650 = vpack.c.b16 %v2647, %v2646
        %v2651 = vpack.c.b16 %v2649, %v2648
        %2654 = vmatprep.subr.bf16.mxu0 0
        %2655 = vmatpush1.bf16.msra.mxu0 %v2650
        %2656 = vmatprep.subr.bf16.mxu0 0
        %2657 = vmatpush1.bf16.msra.mxu0 %v2651
        %2658 = vmatprep.subr.bf16.mxu0 0
        %2659 = vmatpush1.bf16.msra.mxu0 0
        %2660 = vmatprep.subr.bf16.mxu0 0
        %2661 = vmatpush1.bf16.msra.mxu0 0
        %2662 = vmatprep.subr.bf16.mxu0 0
        %2663 = vmatpush1.bf16.msra.mxu0 0
        %2664 = vmatprep.subr.bf16.mxu0 0
        %2665 = vmatpush1.bf16.msra.mxu0 0
        %2666 = vmatprep.subr.bf16.mxu0 0
        %2667 = vmatpush1.bf16.msra.mxu0 0
        %2668 = vmatprep.subr.bf16.mxu0 0
        %2669 = vmatpush1.bf16.msra.mxu0 0
        %2670 = vmatprep.subr.bf16.mxu0 0
        %2671 = vmatpush1.bf16.msra.mxu0 0
        %2672 = vmatprep.subr.bf16.mxu0 0
        %2673 = vmatpush1.bf16.msra.mxu0 0
        %2674 = vmatprep.subr.bf16.mxu0 0
        %2675 = vmatpush1.bf16.msra.mxu0 0
        %2676 = vmatprep.subr.bf16.mxu0 0
        %2677 = vmatpush1.bf16.msra.mxu0 0
        %2678 = vmatprep.subr.bf16.mxu0 0
        %2679 = vmatpush1.bf16.msra.mxu0 0
        %2680 = vmatprep.subr.bf16.mxu0 0
        %2681 = vmatpush1.bf16.msra.mxu0 0
        %2682 = vmatprep.subr.bf16.mxu0 0
        %2683 = vmatpush1.bf16.msra.mxu0 0
        %2684 = vmatprep.subr.bf16.mxu0 0
        %2685 = vmatpush1.bf16.msra.mxu0 0
        %2686 = vmatprep.mubr.bf16.mxu0 0
        %2687 = vmatmul.mubr.bf16.gmra.mrb[0].mxu0 %v2600
        %v2688 = vpop.f32.mrb[0].mxu0
        %v2689 = vadd.f32 %v2574, %v2688
        %v2690 = vpop.f32.mrb[0].mxu0
        %v2691 = vpop.f32.mrb[0].mxu0
        %v2692 = vpop.f32.mrb[0].mxu0
        %2693 = vdwg.mxu0
        %v2698 = vunpack.c.l.b16 %v2550
        %v2699 = vunpack.c.l.b16 %v2551
        %v2700 = vunpack.c.l.b16 %v2552
        %v2701 = vunpack.c.l.b16 %v2553
        %v2702 = vpack.c.b16 %v2699, %v2698
        %v2703 = vpack.c.b16 %v2701, %v2700
        %2706 = vmatprep.subr.bf16.mxu0 0
        %2707 = vmatpush1.bf16.msra.mxu0 %v2702
        %2708 = vmatprep.subr.bf16.mxu0 0
        %2709 = vmatpush1.bf16.msra.mxu0 %v2703
        %2710 = vmatprep.subr.bf16.mxu0 0
        %2711 = vmatpush1.bf16.msra.mxu0 0
        %2712 = vmatprep.subr.bf16.mxu0 0
        %2713 = vmatpush1.bf16.msra.mxu0 0
        %2714 = vmatprep.subr.bf16.mxu0 0
        %2715 = vmatpush1.bf16.msra.mxu0 0
        %2716 = vmatprep.subr.bf16.mxu0 0
        %2717 = vmatpush1.bf16.msra.mxu0 0
        %2718 = vmatprep.subr.bf16.mxu0 0
        %2719 = vmatpush1.bf16.msra.mxu0 0
        %2720 = vmatprep.subr.bf16.mxu0 0
        %2721 = vmatpush1.bf16.msra.mxu0 0
        %2722 = vmatprep.subr.bf16.mxu0 0
        %2723 = vmatpush1.bf16.msra.mxu0 0
        %2724 = vmatprep.subr.bf16.mxu0 0
        %2725 = vmatpush1.bf16.msra.mxu0 0
        %2726 = vmatprep.subr.bf16.mxu0 0
        %2727 = vmatpush1.bf16.msra.mxu0 0
        %2728 = vmatprep.subr.bf16.mxu0 0
        %2729 = vmatpush1.bf16.msra.mxu0 0
        %2730 = vmatprep.subr.bf16.mxu0 0
        %2731 = vmatpush1.bf16.msra.mxu0 0
        %2732 = vmatprep.subr.bf16.mxu0 0
        %2733 = vmatpush1.bf16.msra.mxu0 0
        %2734 = vmatprep.subr.bf16.mxu0 0
        %2735 = vmatpush1.bf16.msra.mxu0 0
        %2736 = vmatprep.subr.bf16.mxu0 0
        %2737 = vmatpush1.bf16.msra.mxu0 0
        %2738 = vmatprep.mubr.bf16.mxu0 0
        %2739 = vmatmul.mubr.bf16.gmra.mrb[0].mxu0 %v2600
        %v2740 = vpop.f32.mrb[0].mxu0
        %v2741 = vadd.f32 %v2578, %v2740
        %v2742 = vpop.f32.mrb[0].mxu0
        %v2743 = vpop.f32.mrb[0].mxu0
        %v2744 = vpop.f32.mrb[0].mxu0
        %2745 = vdwg.mxu0
        %v2750 = vunpack.c.l.b16 %v2554
        %v2751 = vunpack.c.l.b16 %v2555
        %v2752 = vunpack.c.l.b16 %v2556
        %v2753 = vunpack.c.l.b16 %v2557
        %v2754 = vpack.c.b16 %v2751, %v2750
        %v2755 = vpack.c.b16 %v2753, %v2752
        %2758 = vmatprep.subr.bf16.mxu0 0
        %2759 = vmatpush1.bf16.msra.mxu0 %v2754
        %2760 = vmatprep.subr.bf16.mxu0 0
        %2761 = vmatpush1.bf16.msra.mxu0 %v2755
        %2762 = vmatprep.subr.bf16.mxu0 0
        %2763 = vmatpush1.bf16.msra.mxu0 0
        %2764 = vmatprep.subr.bf16.mxu0 0
        %2765 = vmatpush1.bf16.msra.mxu0 0
        %2766 = vmatprep.subr.bf16.mxu0 0
        %2767 = vmatpush1.bf16.msra.mxu0 0
        %2768 = vmatprep.subr.bf16.mxu0 0
        %2769 = vmatpush1.bf16.msra.mxu0 0
        %2770 = vmatprep.subr.bf16.mxu0 0
        %2771 = vmatpush1.bf16.msra.mxu0 0
        %2772 = vmatprep.subr.bf16.mxu0 0
        %2773 = vmatpush1.bf16.msra.mxu0 0
        %2774 = vmatprep.subr.bf16.mxu0 0
        %2775 = vmatpush1.bf16.msra.mxu0 0
        %2776 = vmatprep.subr.bf16.mxu0 0
        %2777 = vmatpush1.bf16.msra.mxu0 0
        %2778 = vmatprep.subr.bf16.mxu0 0
        %2779 = vmatpush1.bf16.msra.mxu0 0
        %2780 = vmatprep.subr.bf16.mxu0 0
        %2781 = vmatpush1.bf16.msra.mxu0 0
        %2782 = vmatprep.subr.bf16.mxu0 0
        %2783 = vmatpush1.bf16.msra.mxu0 0
        %2784 = vmatprep.subr.bf16.mxu0 0
        %2785 = vmatpush1.bf16.msra.mxu0 0
        %2786 = vmatprep.subr.bf16.mxu0 0
        %2787 = vmatpush1.bf16.msra.mxu0 0
        %2788 = vmatprep.subr.bf16.mxu0 0
        %2789 = vmatpush1.bf16.msra.mxu0 0
        %2790 = vmatprep.mubr.bf16.mxu0 0
        %2791 = vmatmul.mubr.bf16.gmra.mrb[0].mxu0 %v2600
        %v2792 = vpop.f32.mrb[0].mxu0
        %v2793 = vadd.f32 %v2582, %v2792
        %v2794 = vpop.f32.mrb[0].mxu0
        %v2795 = vpop.f32.mrb[0].mxu0
        %v2796 = vpop.f32.mrb[0].mxu0
        %2797 = vdwg.mxu0
        %s2798 = scalar_lea.vmem %s8, 64
        %v2799 = vld [vmem:[%s2798] sm:$0xf]
        %v2800 = vld [vmem:[%s2798 + $0x4] sm:$0xf]
        %v2801 = vld [vmem:[%s2798 + $0x8] sm:$0xf]
        %v2802 = vld [vmem:[%s2798 + $0xc] sm:$0xf]
        %v2803 = vld [vmem:[%s2798 + $0x10] sm:$0xf]
        %v2804 = vld [vmem:[%s2798 + $0x14] sm:$0xf]
        %v2805 = vld [vmem:[%s2798 + $0x18] sm:$0xf]
        %v2806 = vld [vmem:[%s2798 + $0x1c] sm:$0xf]
        %v2807 = vld [vmem:[%s2798 + $0x20] sm:$0xf]
        %v2808 = vld [vmem:[%s2798 + $0x24] sm:$0xf]
        %v2809 = vld [vmem:[%s2798 + $0x28] sm:$0xf]
        %v2810 = vld [vmem:[%s2798 + $0x2c] sm:$0xf]
        %v2811 = vld [vmem:[%s2798 + $0x30] sm:$0xf]
        %v2812 = vld [vmem:[%s2798 + $0x34] sm:$0xf]
        %v2813 = vld [vmem:[%s2798 + $0x38] sm:$0xf]
        %v2814 = vld [vmem:[%s2798 + $0x3c] sm:$0xf]
        %s2815 = scalar_lea.vmem %s11, 4
        %v2816 = vld [vmem:[%s2815] sm:$0x1]
        %v2817 = vld [vmem:[%s2815 + $0x1] sm:$0x1]
        %v2818 = vld [vmem:[%s2815 + $0x2] sm:$0x1]
        %v2819 = vld [vmem:[%s2815 + $0x3] sm:$0x1]
        %v2824 = vlaneseq
        %v2825 = vshrl.u32 %v2824, 7
        %v2826 = vsub.s32 0, %v2825
        %v2827 = vrot.slane %v2816, %v2826
        %v2828 = vlaneseq
        %v2829 = vshrl.u32 %v2828, 7
        %v2830 = vsub.s32 0, %v2829
        %v2831 = vrot.slane %v2817, %v2830
        %v2832 = vlaneseq
        %v2833 = vshrl.u32 %v2832, 7
        %v2834 = vsub.s32 0, %v2833
        %v2835 = vrot.slane %v2818, %v2834
        %v2836 = vlaneseq
        %v2837 = vshrl.u32 %v2836, 7
        %v2838 = vsub.s32 0, %v2837
        %v2839 = vrot.slane %v2819, %v2838
        %v2848 = vunpack.c.l.b16 %v2799
        %v2849 = vunpack.c.l.b16 %v2800
        %v2850 = vunpack.c.l.b16 %v2801
        %v2851 = vunpack.c.l.b16 %v2802
        %v2852 = vpack.c.b16 %v2849, %v2848
        %v2853 = vpack.c.b16 %v2851, %v2850
        %2856 = vmatprep.subr.bf16.mxu0 0
        %2857 = vmatpush1.bf16.msra.mxu0 %v2852
        %2858 = vmatprep.subr.bf16.mxu0 0
        %2859 = vmatpush1.bf16.msra.mxu0 %v2853
        %2860 = vmatprep.subr.bf16.mxu0 0
        %2861 = vmatpush1.bf16.msra.mxu0 0
        %2862 = vmatprep.subr.bf16.mxu0 0
        %2863 = vmatpush1.bf16.msra.mxu0 0
        %2864 = vmatprep.subr.bf16.mxu0 0
        %2865 = vmatpush1.bf16.msra.mxu0 0
        %2866 = vmatprep.subr.bf16.mxu0 0
        %2867 = vmatpush1.bf16.msra.mxu0 0
        %2868 = vmatprep.subr.bf16.mxu0 0
        %2869 = vmatpush1.bf16.msra.mxu0 0
        %2870 = vmatprep.subr.bf16.mxu0 0
        %2871 = vmatpush1.bf16.msra.mxu0 0
        %2872 = vmatprep.subr.bf16.mxu0 0
        %2873 = vmatpush1.bf16.msra.mxu0 0
        %2874 = vmatprep.subr.bf16.mxu0 0
        %2875 = vmatpush1.bf16.msra.mxu0 0
        %2876 = vmatprep.subr.bf16.mxu0 0
        %2877 = vmatpush1.bf16.msra.mxu0 0
        %2878 = vmatprep.subr.bf16.mxu0 0
        %2879 = vmatpush1.bf16.msra.mxu0 0
        %2880 = vmatprep.subr.bf16.mxu0 0
        %2881 = vmatpush1.bf16.msra.mxu0 0
        %2882 = vmatprep.subr.bf16.mxu0 0
        %2883 = vmatpush1.bf16.msra.mxu0 0
        %2884 = vmatprep.subr.bf16.mxu0 0
        %2885 = vmatpush1.bf16.msra.mxu0 0
        %2886 = vmatprep.subr.bf16.mxu0 0
        %2887 = vmatpush1.bf16.msra.mxu0 0
        %2888 = vmatprep.mubr.bf16.mxu0 0
        %2889 = vmatmul.mubr.bf16.gmra.mrb[0].mxu0 %v2600
        %v2890 = vpop.f32.mrb[0].mxu0
        %v2891 = vadd.f32 %v2827, %v2890
        %v2892 = vpop.f32.mrb[0].mxu0
        %v2893 = vpop.f32.mrb[0].mxu0
        %v2894 = vpop.f32.mrb[0].mxu0
        %2895 = vdwg.mxu0
        %v2900 = vunpack.c.l.b16 %v2803
        %v2901 = vunpack.c.l.b16 %v2804
        %v2902 = vunpack.c.l.b16 %v2805
        %v2903 = vunpack.c.l.b16 %v2806
        %v2904 = vpack.c.b16 %v2901, %v2900
        %v2905 = vpack.c.b16 %v2903, %v2902
        %2908 = vmatprep.subr.bf16.mxu0 0
        %2909 = vmatpush1.bf16.msra.mxu0 %v2904
        %2910 = vmatprep.subr.bf16.mxu0 0
        %2911 = vmatpush1.bf16.msra.mxu0 %v2905
        %2912 = vmatprep.subr.bf16.mxu0 0
        %2913 = vmatpush1.bf16.msra.mxu0 0
        %2914 = vmatprep.subr.bf16.mxu0 0
        %2915 = vmatpush1.bf16.msra.mxu0 0
        %2916 = vmatprep.subr.bf16.mxu0 0
        %2917 = vmatpush1.bf16.msra.mxu0 0
        %2918 = vmatprep.subr.bf16.mxu0 0
        %2919 = vmatpush1.bf16.msra.mxu0 0
        %2920 = vmatprep.subr.bf16.mxu0 0
        %2921 = vmatpush1.bf16.msra.mxu0 0
        %2922 = vmatprep.subr.bf16.mxu0 0
        %2923 = vmatpush1.bf16.msra.mxu0 0
        %2924 = vmatprep.subr.bf16.mxu0 0
        %2925 = vmatpush1.bf16.msra.mxu0 0
        %2926 = vmatprep.subr.bf16.mxu0 0
        %2927 = vmatpush1.bf16.msra.mxu0 0
        %2928 = vmatprep.subr.bf16.mxu0 0
        %2929 = vmatpush1.bf16.msra.mxu0 0
        %2930 = vmatprep.subr.bf16.mxu0 0
        %2931 = vmatpush1.bf16.msra.mxu0 0
        %2932 = vmatprep.subr.bf16.mxu0 0
        %2933 = vmatpush1.bf16.msra.mxu0 0
        %2934 = vmatprep.subr.bf16.mxu0 0
        %2935 = vmatpush1.bf16.msra.mxu0 0
        %2936 = vmatprep.subr.bf16.mxu0 0
        %2937 = vmatpush1.bf16.msra.mxu0 0
        %2938 = vmatprep.subr.bf16.mxu0 0
        %2939 = vmatpush1.bf16.msra.mxu0 0
        %2940 = vmatprep.mubr.bf16.mxu0 0
        %2941 = vmatmul.mubr.bf16.gmra.mrb[0].mxu0 %v2600
        %v2942 = vpop.f32.mrb[0].mxu0
        %v2943 = vadd.f32 %v2831, %v2942
        %v2944 = vpop.f32.mrb[0].mxu0
        %v2945 = vpop.f32.mrb[0].mxu0
        %v2946 = vpop.f32.mrb[0].mxu0
        %2947 = vdwg.mxu0
        %v2952 = vunpack.c.l.b16 %v2807
        %v2953 = vunpack.c.l.b16 %v2808
        %v2954 = vunpack.c.l.b16 %v2809
        %v2955 = vunpack.c.l.b16 %v2810
        %v2956 = vpack.c.b16 %v2953, %v2952
        %v2957 = vpack.c.b16 %v2955, %v2954
        %2960 = vmatprep.subr.bf16.mxu0 0
        %2961 = vmatpush1.bf16.msra.mxu0 %v2956
        %2962 = vmatprep.subr.bf16.mxu0 0
        %2963 = vmatpush1.bf16.msra.mxu0 %v2957
        %2964 = vmatprep.subr.bf16.mxu0 0
        %2965 = vmatpush1.bf16.msra.mxu0 0
        %2966 = vmatprep.subr.bf16.mxu0 0
        %2967 = vmatpush1.bf16.msra.mxu0 0
        %2968 = vmatprep.subr.bf16.mxu0 0
        %2969 = vmatpush1.bf16.msra.mxu0 0
        %2970 = vmatprep.subr.bf16.mxu0 0
        %2971 = vmatpush1.bf16.msra.mxu0 0
        %2972 = vmatprep.subr.bf16.mxu0 0
        %2973 = vmatpush1.bf16.msra.mxu0 0
        %2974 = vmatprep.subr.bf16.mxu0 0
        %2975 = vmatpush1.bf16.msra.mxu0 0
        %2976 = vmatprep.subr.bf16.mxu0 0
        %2977 = vmatpush1.bf16.msra.mxu0 0
        %2978 = vmatprep.subr.bf16.mxu0 0
        %2979 = vmatpush1.bf16.msra.mxu0 0
        %2980 = vmatprep.subr.bf16.mxu0 0
        %2981 = vmatpush1.bf16.msra.mxu0 0
        %2982 = vmatprep.subr.bf16.mxu0 0
        %2983 = vmatpush1.bf16.msra.mxu0 0
        %2984 = vmatprep.subr.bf16.mxu0 0
        %2985 = vmatpush1.bf16.msra.mxu0 0
        %2986 = vmatprep.subr.bf16.mxu0 0
        %2987 = vmatpush1.bf16.msra.mxu0 0
        %2988 = vmatprep.subr.bf16.mxu0 0
        %2989 = vmatpush1.bf16.msra.mxu0 0
        %2990 = vmatprep.subr.bf16.mxu0 0
        %2991 = vmatpush1.bf16.msra.mxu0 0
        %2992 = vmatprep.mubr.bf16.mxu0 0
        %2993 = vmatmul.mubr.bf16.gmra.mrb[0].mxu0 %v2600
        %v2994 = vpop.f32.mrb[0].mxu0
        %v2995 = vadd.f32 %v2835, %v2994
        %v2996 = vpop.f32.mrb[0].mxu0
        %v2997 = vpop.f32.mrb[0].mxu0
        %v2998 = vpop.f32.mrb[0].mxu0
        %2999 = vdwg.mxu0
        %v3004 = vunpack.c.l.b16 %v2811
        %v3005 = vunpack.c.l.b16 %v2812
        %v3006 = vunpack.c.l.b16 %v2813
        %v3007 = vunpack.c.l.b16 %v2814
        %v3008 = vpack.c.b16 %v3005, %v3004
        %v3009 = vpack.c.b16 %v3007, %v3006
        %3012 = vmatprep.subr.bf16.mxu0 0
        %3013 = vmatpush1.bf16.msra.mxu0 %v3008
        %3014 = vmatprep.subr.bf16.mxu0 0
        %3015 = vmatpush1.bf16.msra.mxu0 %v3009
        %3016 = vmatprep.subr.bf16.mxu0 0
        %3017 = vmatpush1.bf16.msra.mxu0 0
        %3018 = vmatprep.subr.bf16.mxu0 0
        %3019 = vmatpush1.bf16.msra.mxu0 0
        %3020 = vmatprep.subr.bf16.mxu0 0
        %3021 = vmatpush1.bf16.msra.mxu0 0
        %3022 = vmatprep.subr.bf16.mxu0 0
        %3023 = vmatpush1.bf16.msra.mxu0 0
        %3024 = vmatprep.subr.bf16.mxu0 0
        %3025 = vmatpush1.bf16.msra.mxu0 0
        %3026 = vmatprep.subr.bf16.mxu0 0
        %3027 = vmatpush1.bf16.msra.mxu0 0
        %3028 = vmatprep.subr.bf16.mxu0 0
        %3029 = vmatpush1.bf16.msra.mxu0 0
        %3030 = vmatprep.subr.bf16.mxu0 0
        %3031 = vmatpush1.bf16.msra.mxu0 0
        %3032 = vmatprep.subr.bf16.mxu0 0
        %3033 = vmatpush1.bf16.msra.mxu0 0
        %3034 = vmatprep.subr.bf16.mxu0 0
        %3035 = vmatpush1.bf16.msra.mxu0 0
        %3036 = vmatprep.subr.bf16.mxu0 0
        %3037 = vmatpush1.bf16.msra.mxu0 0
        %3038 = vmatprep.subr.bf16.mxu0 0
        %3039 = vmatpush1.bf16.msra.mxu0 0
        %3040 = vmatprep.subr.bf16.mxu0 0
        %3041 = vmatpush1.bf16.msra.mxu0 0
        %3042 = vmatprep.subr.bf16.mxu0 0
        %3043 = vmatpush1.bf16.msra.mxu0 0
        %3044 = vmatprep.mubr.bf16.mxu0 0
        %3045 = vmatmul.mubr.bf16.gmra.mrb[0].mxu0 %v2600
        %v3046 = vpop.f32.mrb[0].mxu0
        %v3047 = vadd.f32 %v2839, %v3046
        %v3048 = vpop.f32.mrb[0].mxu0
        %v3049 = vpop.f32.mrb[0].mxu0
        %v3050 = vpop.f32.mrb[0].mxu0
        %3051 = vdwg.mxu0
        %s3052 = scalar_lea.vmem %s9, 64
        %v3053 = vld [vmem:[%s3052] sm:$0xf]
        %v3054 = vld [vmem:[%s3052 + $0x4] sm:$0xf]
        %v3055 = vld [vmem:[%s3052 + $0x8] sm:$0xf]
        %v3056 = vld [vmem:[%s3052 + $0xc] sm:$0xf]
        %v3057 = vld [vmem:[%s3052 + $0x10] sm:$0xf]
        %v3058 = vld [vmem:[%s3052 + $0x14] sm:$0xf]
        %v3059 = vld [vmem:[%s3052 + $0x18] sm:$0xf]
        %v3060 = vld [vmem:[%s3052 + $0x1c] sm:$0xf]
        %v3061 = vld [vmem:[%s3052 + $0x20] sm:$0xf]
        %v3062 = vld [vmem:[%s3052 + $0x24] sm:$0xf]
        %v3063 = vld [vmem:[%s3052 + $0x28] sm:$0xf]
        %v3064 = vld [vmem:[%s3052 + $0x2c] sm:$0xf]
        %v3065 = vld [vmem:[%s3052 + $0x30] sm:$0xf]
        %v3066 = vld [vmem:[%s3052 + $0x34] sm:$0xf]
        %v3067 = vld [vmem:[%s3052 + $0x38] sm:$0xf]
        %v3068 = vld [vmem:[%s3052 + $0x3c] sm:$0xf]
        %s3069 = scalar_lea.vmem %s12, 4
        %v3070 = vld [vmem:[%s3069] sm:$0x1]
        %v3071 = vld [vmem:[%s3069 + $0x1] sm:$0x1]
        %v3072 = vld [vmem:[%s3069 + $0x2] sm:$0x1]
        %v3073 = vld [vmem:[%s3069 + $0x3] sm:$0x1]
        %v3078 = vlaneseq
        %v3079 = vshrl.u32 %v3078, 7
        %v3080 = vsub.s32 0, %v3079
        %v3081 = vrot.slane %v3070, %v3080
        %v3082 = vlaneseq
        %v3083 = vshrl.u32 %v3082, 7
        %v3084 = vsub.s32 0, %v3083
        %v3085 = vrot.slane %v3071, %v3084
        %v3086 = vlaneseq
        %v3087 = vshrl.u32 %v3086, 7
        %v3088 = vsub.s32 0, %v3087
        %v3089 = vrot.slane %v3072, %v3088
        %v3090 = vlaneseq
        %v3091 = vshrl.u32 %v3090, 7
        %v3092 = vsub.s32 0, %v3091
        %v3093 = vrot.slane %v3073, %v3092
        %v3102 = vunpack.c.l.b16 %v3053
        %v3103 = vunpack.c.l.b16 %v3054
        %v3104 = vunpack.c.l.b16 %v3055
        %v3105 = vunpack.c.l.b16 %v3056
        %v3106 = vpack.c.b16 %v3103, %v3102
        %v3107 = vpack.c.b16 %v3105, %v3104
        %3110 = vmatprep.subr.bf16.mxu0 0
        %3111 = vmatpush1.bf16.msra.mxu0 %v3106
        %3112 = vmatprep.subr.bf16.mxu0 0
        %3113 = vmatpush1.bf16.msra.mxu0 %v3107
        %3114 = vmatprep.subr.bf16.mxu0 0
        %3115 = vmatpush1.bf16.msra.mxu0 0
        %3116 = vmatprep.subr.bf16.mxu0 0
        %3117 = vmatpush1.bf16.msra.mxu0 0
        %3118 = vmatprep.subr.bf16.mxu0 0
        %3119 = vmatpush1.bf16.msra.mxu0 0
        %3120 = vmatprep.subr.bf16.mxu0 0
        %3121 = vmatpush1.bf16.msra.mxu0 0
        %3122 = vmatprep.subr.bf16.mxu0 0
        %3123 = vmatpush1.bf16.msra.mxu0 0
        %3124 = vmatprep.subr.bf16.mxu0 0
        %3125 = vmatpush1.bf16.msra.mxu0 0
        %3126 = vmatprep.subr.bf16.mxu0 0
        %3127 = vmatpush1.bf16.msra.mxu0 0
        %3128 = vmatprep.subr.bf16.mxu0 0
        %3129 = vmatpush1.bf16.msra.mxu0 0
        %3130 = vmatprep.subr.bf16.mxu0 0
        %3131 = vmatpush1.bf16.msra.mxu0 0
        %3132 = vmatprep.subr.bf16.mxu0 0
        %3133 = vmatpush1.bf16.msra.mxu0 0
        %3134 = vmatprep.subr.bf16.mxu0 0
        %3135 = vmatpush1.bf16.msra.mxu0 0
        %3136 = vmatprep.subr.bf16.mxu0 0
        %3137 = vmatpush1.bf16.msra.mxu0 0
        %3138 = vmatprep.subr.bf16.mxu0 0
        %3139 = vmatpush1.bf16.msra.mxu0 0
        %3140 = vmatprep.subr.bf16.mxu0 0
        %3141 = vmatpush1.bf16.msra.mxu0 0
        %3142 = vmatprep.mubr.bf16.mxu0 0
        %3143 = vmatmul.mubr.bf16.gmra.mrb[0].mxu0 %v2600
        %v3144 = vpop.f32.mrb[0].mxu0
        %v3145 = vadd.f32 %v3081, %v3144
        %v3146 = vpop.f32.mrb[0].mxu0
        %v3147 = vpop.f32.mrb[0].mxu0
        %v3148 = vpop.f32.mrb[0].mxu0
        %3149 = vdwg.mxu0
        %v3154 = vunpack.c.l.b16 %v3057
        %v3155 = vunpack.c.l.b16 %v3058
        %v3156 = vunpack.c.l.b16 %v3059
        %v3157 = vunpack.c.l.b16 %v3060
        %v3158 = vpack.c.b16 %v3155, %v3154
        %v3159 = vpack.c.b16 %v3157, %v3156
        %3162 = vmatprep.subr.bf16.mxu0 0
        %3163 = vmatpush1.bf16.msra.mxu0 %v3158
        %3164 = vmatprep.subr.bf16.mxu0 0
        %3165 = vmatpush1.bf16.msra.mxu0 %v3159
        %3166 = vmatprep.subr.bf16.mxu0 0
        %3167 = vmatpush1.bf16.msra.mxu0 0
        %3168 = vmatprep.subr.bf16.mxu0 0
        %3169 = vmatpush1.bf16.msra.mxu0 0
        %3170 = vmatprep.subr.bf16.mxu0 0
        %3171 = vmatpush1.bf16.msra.mxu0 0
        %3172 = vmatprep.subr.bf16.mxu0 0
        %3173 = vmatpush1.bf16.msra.mxu0 0
        %3174 = vmatprep.subr.bf16.mxu0 0
        %3175 = vmatpush1.bf16.msra.mxu0 0
        %3176 = vmatprep.subr.bf16.mxu0 0
        %3177 = vmatpush1.bf16.msra.mxu0 0
        %3178 = vmatprep.subr.bf16.mxu0 0
        %3179 = vmatpush1.bf16.msra.mxu0 0
        %3180 = vmatprep.subr.bf16.mxu0 0
        %3181 = vmatpush1.bf16.msra.mxu0 0
        %3182 = vmatprep.subr.bf16.mxu0 0
        %3183 = vmatpush1.bf16.msra.mxu0 0
        %3184 = vmatprep.subr.bf16.mxu0 0
        %3185 = vmatpush1.bf16.msra.mxu0 0
        %3186 = vmatprep.subr.bf16.mxu0 0
        %3187 = vmatpush1.bf16.msra.mxu0 0
        %3188 = vmatprep.subr.bf16.mxu0 0
        %3189 = vmatpush1.bf16.msra.mxu0 0
        %3190 = vmatprep.subr.bf16.mxu0 0
        %3191 = vmatpush1.bf16.msra.mxu0 0
        %3192 = vmatprep.subr.bf16.mxu0 0
        %3193 = vmatpush1.bf16.msra.mxu0 0
        %3194 = vmatprep.mubr.bf16.mxu0 0
        %3195 = vmatmul.mubr.bf16.gmra.mrb[0].mxu0 %v2600
        %v3196 = vpop.f32.mrb[0].mxu0
        %v3197 = vadd.f32 %v3085, %v3196
        %v3198 = vpop.f32.mrb[0].mxu0
        %v3199 = vpop.f32.mrb[0].mxu0
        %v3200 = vpop.f32.mrb[0].mxu0
        %3201 = vdwg.mxu0
        %v3206 = vunpack.c.l.b16 %v3061
        %v3207 = vunpack.c.l.b16 %v3062
        %v3208 = vunpack.c.l.b16 %v3063
        %v3209 = vunpack.c.l.b16 %v3064
        %v3210 = vpack.c.b16 %v3207, %v3206
        %v3211 = vpack.c.b16 %v3209, %v3208
        %3214 = vmatprep.subr.bf16.mxu0 0
        %3215 = vmatpush1.bf16.msra.mxu0 %v3210
        %3216 = vmatprep.subr.bf16.mxu0 0
        %3217 = vmatpush1.bf16.msra.mxu0 %v3211
        %3218 = vmatprep.subr.bf16.mxu0 0
        %3219 = vmatpush1.bf16.msra.mxu0 0
        %3220 = vmatprep.subr.bf16.mxu0 0
        %3221 = vmatpush1.bf16.msra.mxu0 0
        %3222 = vmatprep.subr.bf16.mxu0 0
        %3223 = vmatpush1.bf16.msra.mxu0 0
        %3224 = vmatprep.subr.bf16.mxu0 0
        %3225 = vmatpush1.bf16.msra.mxu0 0
        %3226 = vmatprep.subr.bf16.mxu0 0
        %3227 = vmatpush1.bf16.msra.mxu0 0
        %3228 = vmatprep.subr.bf16.mxu0 0
        %3229 = vmatpush1.bf16.msra.mxu0 0
        %3230 = vmatprep.subr.bf16.mxu0 0
        %3231 = vmatpush1.bf16.msra.mxu0 0
        %3232 = vmatprep.subr.bf16.mxu0 0
        %3233 = vmatpush1.bf16.msra.mxu0 0
        %3234 = vmatprep.subr.bf16.mxu0 0
        %3235 = vmatpush1.bf16.msra.mxu0 0
        %3236 = vmatprep.subr.bf16.mxu0 0
        %3237 = vmatpush1.bf16.msra.mxu0 0
        %3238 = vmatprep.subr.bf16.mxu0 0
        %3239 = vmatpush1.bf16.msra.mxu0 0
        %3240 = vmatprep.subr.bf16.mxu0 0
        %3241 = vmatpush1.bf16.msra.mxu0 0
        %3242 = vmatprep.subr.bf16.mxu0 0
        %3243 = vmatpush1.bf16.msra.mxu0 0
        %3244 = vmatprep.subr.bf16.mxu0 0
        %3245 = vmatpush1.bf16.msra.mxu0 0
        %3246 = vmatprep.mubr.bf16.mxu0 0
        %3247 = vmatmul.mubr.bf16.gmra.mrb[0].mxu0 %v2600
        %v3248 = vpop.f32.mrb[0].mxu0
        %v3249 = vadd.f32 %v3089, %v3248
        %v3250 = vpop.f32.mrb[0].mxu0
        %v3251 = vpop.f32.mrb[0].mxu0
        %v3252 = vpop.f32.mrb[0].mxu0
        %3253 = vdwg.mxu0
        %v3258 = vunpack.c.l.b16 %v3065
        %v3259 = vunpack.c.l.b16 %v3066
        %v3260 = vunpack.c.l.b16 %v3067
        %v3261 = vunpack.c.l.b16 %v3068
        %v3262 = vpack.c.b16 %v3259, %v3258
        %v3263 = vpack.c.b16 %v3261, %v3260
        %3266 = vmatprep.subr.bf16.mxu0 0
        %3267 = vmatpush1.bf16.msra.mxu0 %v3262
        %3268 = vmatprep.subr.bf16.mxu0 0
        %3269 = vmatpush1.bf16.msra.mxu0 %v3263
        %3270 = vmatprep.subr.bf16.mxu0 0
        %3271 = vmatpush1.bf16.msra.mxu0 0
        %3272 = vmatprep.subr.bf16.mxu0 0
        %3273 = vmatpush1.bf16.msra.mxu0 0
        %3274 = vmatprep.subr.bf16.mxu0 0
        %3275 = vmatpush1.bf16.msra.mxu0 0
        %3276 = vmatprep.subr.bf16.mxu0 0
        %3277 = vmatpush1.bf16.msra.mxu0 0
        %3278 = vmatprep.subr.bf16.mxu0 0
        %3279 = vmatpush1.bf16.msra.mxu0 0
        %3280 = vmatprep.subr.bf16.mxu0 0
        %3281 = vmatpush1.bf16.msra.mxu0 0
        %3282 = vmatprep.subr.bf16.mxu0 0
        %3283 = vmatpush1.bf16.msra.mxu0 0
        %3284 = vmatprep.subr.bf16.mxu0 0
        %3285 = vmatpush1.bf16.msra.mxu0 0
        %3286 = vmatprep.subr.bf16.mxu0 0
        %3287 = vmatpush1.bf16.msra.mxu0 0
        %3288 = vmatprep.subr.bf16.mxu0 0
        %3289 = vmatpush1.bf16.msra.mxu0 0
        %3290 = vmatprep.subr.bf16.mxu0 0
        %3291 = vmatpush1.bf16.msra.mxu0 0
        %3292 = vmatprep.subr.bf16.mxu0 0
        %3293 = vmatpush1.bf16.msra.mxu0 0
        %3294 = vmatprep.subr.bf16.mxu0 0
        %3295 = vmatpush1.bf16.msra.mxu0 0
        %3296 = vmatprep.subr.bf16.mxu0 0
        %3297 = vmatpush1.bf16.msra.mxu0 0
        %3298 = vmatprep.mubr.bf16.mxu0 0
        %3299 = vmatmul.mubr.bf16.gmra.mrb[0].mxu0 %v2600
        %v3300 = vpop.f32.mrb[0].mxu0
        %v3301 = vadd.f32 %v3093, %v3300
        %v3302 = vpop.f32.mrb[0].mxu0
        %v3303 = vpop.f32.mrb[0].mxu0
        %v3304 = vpop.f32.mrb[0].mxu0
        %3305 = vdwg.mxu0
        %v3306 = vpack.c.bf16 %v2637, %v2637
        %v3307 = vpack.c.bf16 %v2689, %v2689
        %v3308 = vpack.c.bf16 %v2741, %v2741
        %v3309 = vpack.c.bf16 %v2793, %v2793
        %v3310 = vpack.c.bf16 %v2891, %v2891
        %v3311 = vpack.c.bf16 %v2943, %v2943
        %v3312 = vpack.c.bf16 %v2995, %v2995
        %v3313 = vpack.c.bf16 %v3047, %v3047
        %v3315 = vsel %vm1677, %v3306, 0
        %v3318 = vsel %vm1677, %v3310, 0
        %3320 = vmatprep.subr.bf16.mxu0 0
        %3321 = vmatpush1.bf16.xpose.msra.mxu0 %v3318
        %3322 = vmatprep.subr.bf16.mxu0 0
        %3323 = vmatpush1.bf16.xpose.msra.mxu0 0
        %3324 = vmatprep.subr.bf16.mxu0 0
        %3325 = vmatpush1.bf16.xpose.msra.mxu0 0
        %3326 = vmatprep.subr.bf16.mxu0 0
        %3327 = vmatpush1.bf16.xpose.msra.mxu0 0
        %3328 = vmatprep.subr.bf16.mxu0 0
        %3329 = vmatpush1.bf16.xpose.msra.mxu0 0
        %3330 = vmatprep.subr.bf16.mxu0 0
        %3331 = vmatpush1.bf16.xpose.msra.mxu0 0
        %3332 = vmatprep.subr.bf16.mxu0 0
        %3333 = vmatpush1.bf16.xpose.msra.mxu0 0
        %3334 = vmatprep.subr.bf16.mxu0 0
        %3335 = vmatpush1.bf16.xpose.msra.mxu0 0
        %3336 = vmatprep.subr.bf16.mxu0 0
        %3337 = vmatpush1.bf16.xpose.msra.mxu0 0
        %3338 = vmatprep.subr.bf16.mxu0 0
        %3339 = vmatpush1.bf16.xpose.msra.mxu0 0
        %3340 = vmatprep.subr.bf16.mxu0 0
        %3341 = vmatpush1.bf16.xpose.msra.mxu0 0
        %3342 = vmatprep.subr.bf16.mxu0 0
        %3343 = vmatpush1.bf16.xpose.msra.mxu0 0
        %3344 = vmatprep.subr.bf16.mxu0 0
        %3345 = vmatpush1.bf16.xpose.msra.mxu0 0
        %3346 = vmatprep.subr.bf16.mxu0 0
        %3347 = vmatpush1.bf16.xpose.msra.mxu0 0
        %3348 = vmatprep.subr.bf16.mxu0 0
        %3349 = vmatpush1.bf16.xpose.msra.mxu0 0
        %3350 = vmatprep.subr.bf16.mxu0 0
        %3351 = vmatpush1.bf16.xpose.msra.mxu0 0
        %3352 = vmatprep.mubr.bf16.mxu0 0
        %3353 = vmatmul.mubr.bf16.gmra.mrb[0].mxu0 %v3315
        %v3354 = vpop.f32.mrb[0].mxu0
        %v3355 = vadd.f32 0.0, %v3354
        %v3356 = vpop.f32.mrb[0].mxu0
        %v3357 = vpop.f32.mrb[0].mxu0
        %v3358 = vpop.f32.mrb[0].mxu0
        %3359 = vdwg.mxu0
        %v3361 = vsel %vm1677, %v3307, 0
        %v3364 = vsel %vm1677, %v3311, 0
        %3366 = vmatprep.subr.bf16.mxu0 0
        %3367 = vmatpush1.bf16.xpose.msra.mxu0 %v3364
        %3368 = vmatprep.subr.bf16.mxu0 0
        %3369 = vmatpush1.bf16.xpose.msra.mxu0 0
        %3370 = vmatprep.subr.bf16.mxu0 0
        %3371 = vmatpush1.bf16.xpose.msra.mxu0 0
        %3372 = vmatprep.subr.bf16.mxu0 0
        %3373 = vmatpush1.bf16.xpose.msra.mxu0 0
        %3374 = vmatprep.subr.bf16.mxu0 0
        %3375 = vmatpush1.bf16.xpose.msra.mxu0 0
        %3376 = vmatprep.subr.bf16.mxu0 0
        %3377 = vmatpush1.bf16.xpose.msra.mxu0 0
        %3378 = vmatprep.subr.bf16.mxu0 0
        %3379 = vmatpush1.bf16.xpose.msra.mxu0 0
        %3380 = vmatprep.subr.bf16.mxu0 0
        %3381 = vmatpush1.bf16.xpose.msra.mxu0 0
        %3382 = vmatprep.subr.bf16.mxu0 0
        %3383 = vmatpush1.bf16.xpose.msra.mxu0 0
        %3384 = vmatprep.subr.bf16.mxu0 0
        %3385 = vmatpush1.bf16.xpose.msra.mxu0 0
        %3386 = vmatprep.subr.bf16.mxu0 0
        %3387 = vmatpush1.bf16.xpose.msra.mxu0 0
        %3388 = vmatprep.subr.bf16.mxu0 0
        %3389 = vmatpush1.bf16.xpose.msra.mxu0 0
        %3390 = vmatprep.subr.bf16.mxu0 0
        %3391 = vmatpush1.bf16.xpose.msra.mxu0 0
        %3392 = vmatprep.subr.bf16.mxu0 0
        %3393 = vmatpush1.bf16.xpose.msra.mxu0 0
        %3394 = vmatprep.subr.bf16.mxu0 0
        %3395 = vmatpush1.bf16.xpose.msra.mxu0 0
        %3396 = vmatprep.subr.bf16.mxu0 0
        %3397 = vmatpush1.bf16.xpose.msra.mxu0 0
        %3398 = vmatprep.mubr.bf16.mxu0 0
        %3399 = vmatmul.mubr.bf16.gmra.mrb[0].mxu0 %v3361
        %v3400 = vpop.f32.mrb[0].mxu0
        %v3401 = vadd.f32 0.0, %v3400
        %v3402 = vpop.f32.mrb[0].mxu0
        %v3403 = vpop.f32.mrb[0].mxu0
        %v3404 = vpop.f32.mrb[0].mxu0
        %3405 = vdwg.mxu0
        %v3407 = vsel %vm1677, %v3308, 0
        %v3410 = vsel %vm1677, %v3312, 0
        %3412 = vmatprep.subr.bf16.mxu0 0
        %3413 = vmatpush1.bf16.xpose.msra.mxu0 %v3410
        %3414 = vmatprep.subr.bf16.mxu0 0
        %3415 = vmatpush1.bf16.xpose.msra.mxu0 0
        %3416 = vmatprep.subr.bf16.mxu0 0
        %3417 = vmatpush1.bf16.xpose.msra.mxu0 0
        %3418 = vmatprep.subr.bf16.mxu0 0
        %3419 = vmatpush1.bf16.xpose.msra.mxu0 0
        %3420 = vmatprep.subr.bf16.mxu0 0
        %3421 = vmatpush1.bf16.xpose.msra.mxu0 0
        %3422 = vmatprep.subr.bf16.mxu0 0
        %3423 = vmatpush1.bf16.xpose.msra.mxu0 0
        %3424 = vmatprep.subr.bf16.mxu0 0
        %3425 = vmatpush1.bf16.xpose.msra.mxu0 0
        %3426 = vmatprep.subr.bf16.mxu0 0
        %3427 = vmatpush1.bf16.xpose.msra.mxu0 0
        %3428 = vmatprep.subr.bf16.mxu0 0
        %3429 = vmatpush1.bf16.xpose.msra.mxu0 0
        %3430 = vmatprep.subr.bf16.mxu0 0
        %3431 = vmatpush1.bf16.xpose.msra.mxu0 0
        %3432 = vmatprep.subr.bf16.mxu0 0
        %3433 = vmatpush1.bf16.xpose.msra.mxu0 0
        %3434 = vmatprep.subr.bf16.mxu0 0
        %3435 = vmatpush1.bf16.xpose.msra.mxu0 0
        %3436 = vmatprep.subr.bf16.mxu0 0
        %3437 = vmatpush1.bf16.xpose.msra.mxu0 0
        %3438 = vmatprep.subr.bf16.mxu0 0
        %3439 = vmatpush1.bf16.xpose.msra.mxu0 0
        %3440 = vmatprep.subr.bf16.mxu0 0
        %3441 = vmatpush1.bf16.xpose.msra.mxu0 0
        %3442 = vmatprep.subr.bf16.mxu0 0
        %3443 = vmatpush1.bf16.xpose.msra.mxu0 0
        %3444 = vmatprep.mubr.bf16.mxu0 0
        %3445 = vmatmul.mubr.bf16.gmra.mrb[0].mxu0 %v3407
        %v3446 = vpop.f32.mrb[0].mxu0
        %v3447 = vadd.f32 0.0, %v3446
        %v3448 = vpop.f32.mrb[0].mxu0
        %v3449 = vpop.f32.mrb[0].mxu0
        %v3450 = vpop.f32.mrb[0].mxu0
        %3451 = vdwg.mxu0
        %v3453 = vsel %vm1677, %v3309, 0
        %v3456 = vsel %vm1677, %v3313, 0
        %3458 = vmatprep.subr.bf16.mxu0 0
        %3459 = vmatpush1.bf16.xpose.msra.mxu0 %v3456
        %3460 = vmatprep.subr.bf16.mxu0 0
        %3461 = vmatpush1.bf16.xpose.msra.mxu0 0
        %3462 = vmatprep.subr.bf16.mxu0 0
        %3463 = vmatpush1.bf16.xpose.msra.mxu0 0
        %3464 = vmatprep.subr.bf16.mxu0 0
        %3465 = vmatpush1.bf16.xpose.msra.mxu0 0
        %3466 = vmatprep.subr.bf16.mxu0 0
        %3467 = vmatpush1.bf16.xpose.msra.mxu0 0
        %3468 = vmatprep.subr.bf16.mxu0 0
        %3469 = vmatpush1.bf16.xpose.msra.mxu0 0
        %3470 = vmatprep.subr.bf16.mxu0 0
        %3471 = vmatpush1.bf16.xpose.msra.mxu0 0
        %3472 = vmatprep.subr.bf16.mxu0 0
        %3473 = vmatpush1.bf16.xpose.msra.mxu0 0
        %3474 = vmatprep.subr.bf16.mxu0 0
        %3475 = vmatpush1.bf16.xpose.msra.mxu0 0
        %3476 = vmatprep.subr.bf16.mxu0 0
        %3477 = vmatpush1.bf16.xpose.msra.mxu0 0
        %3478 = vmatprep.subr.bf16.mxu0 0
        %3479 = vmatpush1.bf16.xpose.msra.mxu0 0
        %3480 = vmatprep.subr.bf16.mxu0 0
        %3481 = vmatpush1.bf16.xpose.msra.mxu0 0
        %3482 = vmatprep.subr.bf16.mxu0 0
        %3483 = vmatpush1.bf16.xpose.msra.mxu0 0
        %3484 = vmatprep.subr.bf16.mxu0 0
        %3485 = vmatpush1.bf16.xpose.msra.mxu0 0
        %3486 = vmatprep.subr.bf16.mxu0 0
        %3487 = vmatpush1.bf16.xpose.msra.mxu0 0
        %3488 = vmatprep.subr.bf16.mxu0 0
        %3489 = vmatpush1.bf16.xpose.msra.mxu0 0
        %3490 = vmatprep.mubr.bf16.mxu0 0
        %3491 = vmatmul.mubr.bf16.gmra.mrb[0].mxu0 %v3453
        %v3492 = vpop.f32.mrb[0].mxu0
        %v3493 = vadd.f32 0.0, %v3492
        %v3494 = vpop.f32.mrb[0].mxu0
        %v3495 = vpop.f32.mrb[0].mxu0
        %v3496 = vpop.f32.mrb[0].mxu0
        %3497 = vdwg.mxu0
        %v3498 = vmul.f32 %v3355, 0.35355338
        %v3499 = vmul.f32 %v3401, 0.35355338
        %v3500 = vmul.f32 %v3447, 0.35355338
        %v3501 = vmul.f32 %v3493, 0.35355338
        %v3502 = vadd.f32 %v3498, %v1870
        %v3503 = vadd.f32 %v3499, %v1870
        %v3504 = vadd.f32 %v3500, %v1870
        %v3505 = vadd.f32 %v3501, %v1870
        %v3506 = vsel %vm1677, %v3502, -inf
        %3507 = vmax.xlane.f32.xlu0 %v3506
        %v3508 = vpop.xlane.xlu0 %3507
        %v3509 = vsel %vm1677, %v3503, -inf
        %3510 = vmax.xlane.f32.xlu0 %v3509
        %v3511 = vpop.xlane.xlu0 %3510
        %v3512 = vsel %vm1677, %v3504, -inf
        %3513 = vmax.xlane.f32.xlu0 %v3512
        %v3514 = vpop.xlane.xlu0 %3513
        %v3515 = vsel %vm1677, %v3505, -inf
        %3516 = vmax.xlane.f32.xlu0 %v3515
        %v3517 = vpop.xlane.xlu0 %3516
        %v3518 = vsub.f32 %v3502, %v3508
        %v3519 = vsub.f32 %v3503, %v3511
        %v3520 = vsub.f32 %v3504, %v3514
        %v3521 = vsub.f32 %v3505, %v3517
        %v3522 = vmul.f32 %v3518, 1.442695
        %v3523 = vpow.pop %v3522
        %v3524 = vmul.f32 %v3519, 1.442695
        %v3525 = vpow.pop %v3524
        %v3526 = vmul.f32 %v3520, 1.442695
        %v3527 = vpow.pop %v3526
        %v3528 = vmul.f32 %v3521, 1.442695
        %v3529 = vpow.pop %v3528
        %v3530 = vsel %vm1677, %v3523, 0.0
        %3531 = vadd.xlane.f32.xlu0 %v3530
        %v3532 = vpop.xlane.xlu0 %3531
        %v3533 = vsel %vm1677, %v3525, 0.0
        %3534 = vadd.xlane.f32.xlu0 %v3533
        %v3535 = vpop.xlane.xlu0 %3534
        %v3536 = vsel %vm1677, %v3527, 0.0
        %3537 = vadd.xlane.f32.xlu0 %v3536
        %v3538 = vpop.xlane.xlu0 %3537
        %v3539 = vsel %vm1677, %v3529, 0.0
        %3540 = vadd.xlane.f32.xlu0 %v3539
        %v3541 = vpop.xlane.xlu0 %3540
        %v3542 = vrcp.pop %v3532
        %v3543 = vrcp.pop %v3535
        %v3544 = vrcp.pop %v3538
        %v3545 = vrcp.pop %v3541
        %v3546 = vmul.f32 %v3523, %v3542
        %v3547 = vmul.f32 %v3525, %v3543
        %v3548 = vmul.f32 %v3527, %v3544
        %v3549 = vmul.f32 %v3529, %v3545
        %v3550 = vpack.c.bf16 %v3546, %v3546
        %v3551 = vpack.c.bf16 %v3547, %v3547
        %v3552 = vpack.c.bf16 %v3548, %v3548
        %v3553 = vpack.c.bf16 %v3549, %v3549
        %v3554 = vpack.c.bf16 %v3145, %v3145
        %v3555 = vpack.c.bf16 %v3197, %v3197
        %v3556 = vpack.c.bf16 %v3249, %v3249
        %v3557 = vpack.c.bf16 %v3301, %v3301
        %v3559 = vsel %vm1677, %v3550, 0
        %v3562 = vsel %vm1931, %v3554, 0
        %3564 = vmatprep.subr.bf16.mxu0 0
        %3565 = vmatpush1.bf16.msra.mxu0 %v3562
        %3566 = vmatprep.subr.bf16.mxu0 0
        %3567 = vmatpush1.bf16.msra.mxu0 0
        %3568 = vmatprep.subr.bf16.mxu0 0
        %3569 = vmatpush1.bf16.msra.mxu0 0
        %3570 = vmatprep.subr.bf16.mxu0 0
        %3571 = vmatpush1.bf16.msra.mxu0 0
        %3572 = vmatprep.subr.bf16.mxu0 0
        %3573 = vmatpush1.bf16.msra.mxu0 0
        %3574 = vmatprep.subr.bf16.mxu0 0
        %3575 = vmatpush1.bf16.msra.mxu0 0
        %3576 = vmatprep.subr.bf16.mxu0 0
        %3577 = vmatpush1.bf16.msra.mxu0 0
        %3578 = vmatprep.subr.bf16.mxu0 0
        %3579 = vmatpush1.bf16.msra.mxu0 0
        %3580 = vmatprep.subr.bf16.mxu0 0
        %3581 = vmatpush1.bf16.msra.mxu0 0
        %3582 = vmatprep.subr.bf16.mxu0 0
        %3583 = vmatpush1.bf16.msra.mxu0 0
        %3584 = vmatprep.subr.bf16.mxu0 0
        %3585 = vmatpush1.bf16.msra.mxu0 0
        %3586 = vmatprep.subr.bf16.mxu0 0
        %3587 = vmatpush1.bf16.msra.mxu0 0
        %3588 = vmatprep.subr.bf16.mxu0 0
        %3589 = vmatpush1.bf16.msra.mxu0 0
        %3590 = vmatprep.subr.bf16.mxu0 0
        %3591 = vmatpush1.bf16.msra.mxu0 0
        %3592 = vmatprep.subr.bf16.mxu0 0
        %3593 = vmatpush1.bf16.msra.mxu0 0
        %3594 = vmatprep.subr.bf16.mxu0 0
        %3595 = vmatpush1.bf16.msra.mxu0 0
        %3596 = vmatprep.mubr.bf16.mxu0 0
        %3597 = vmatmul.mubr.bf16.gmra.mrb[0].mxu0 %v3559
        %v3598 = vpop.f32.mrb[0].mxu0
        %v3599 = vadd.f32 0.0, %v3598
        %v3600 = vpop.f32.mrb[0].mxu0
        %v3601 = vpop.f32.mrb[0].mxu0
        %v3602 = vpop.f32.mrb[0].mxu0
        %3603 = vdwg.mxu0
        %v3605 = vsel %vm1677, %v3551, 0
        %v3608 = vsel %vm1931, %v3555, 0
        %3610 = vmatprep.subr.bf16.mxu0 0
        %3611 = vmatpush1.bf16.msra.mxu0 %v3608
        %3612 = vmatprep.subr.bf16.mxu0 0
        %3613 = vmatpush1.bf16.msra.mxu0 0
        %3614 = vmatprep.subr.bf16.mxu0 0
        %3615 = vmatpush1.bf16.msra.mxu0 0
        %3616 = vmatprep.subr.bf16.mxu0 0
        %3617 = vmatpush1.bf16.msra.mxu0 0
        %3618 = vmatprep.subr.bf16.mxu0 0
        %3619 = vmatpush1.bf16.msra.mxu0 0
        %3620 = vmatprep.subr.bf16.mxu0 0
        %3621 = vmatpush1.bf16.msra.mxu0 0
        %3622 = vmatprep.subr.bf16.mxu0 0
        %3623 = vmatpush1.bf16.msra.mxu0 0
        %3624 = vmatprep.subr.bf16.mxu0 0
        %3625 = vmatpush1.bf16.msra.mxu0 0
        %3626 = vmatprep.subr.bf16.mxu0 0
        %3627 = vmatpush1.bf16.msra.mxu0 0
        %3628 = vmatprep.subr.bf16.mxu0 0
        %3629 = vmatpush1.bf16.msra.mxu0 0
        %3630 = vmatprep.subr.bf16.mxu0 0
        %3631 = vmatpush1.bf16.msra.mxu0 0
        %3632 = vmatprep.subr.bf16.mxu0 0
        %3633 = vmatpush1.bf16.msra.mxu0 0
        %3634 = vmatprep.subr.bf16.mxu0 0
        %3635 = vmatpush1.bf16.msra.mxu0 0
        %3636 = vmatprep.subr.bf16.mxu0 0
        %3637 = vmatpush1.bf16.msra.mxu0 0
        %3638 = vmatprep.subr.bf16.mxu0 0
        %3639 = vmatpush1.bf16.msra.mxu0 0
        %3640 = vmatprep.subr.bf16.mxu0 0
        %3641 = vmatpush1.bf16.msra.mxu0 0
        %3642 = vmatprep.mubr.bf16.mxu0 0
        %3643 = vmatmul.mubr.bf16.gmra.mrb[0].mxu0 %v3605
        %v3644 = vpop.f32.mrb[0].mxu0
        %v3645 = vadd.f32 0.0, %v3644
        %v3646 = vpop.f32.mrb[0].mxu0
        %v3647 = vpop.f32.mrb[0].mxu0
        %v3648 = vpop.f32.mrb[0].mxu0
        %3649 = vdwg.mxu0
        %v3651 = vsel %vm1677, %v3552, 0
        %v3654 = vsel %vm1931, %v3556, 0
        %3656 = vmatprep.subr.bf16.mxu0 0
        %3657 = vmatpush1.bf16.msra.mxu0 %v3654
        %3658 = vmatprep.subr.bf16.mxu0 0
        %3659 = vmatpush1.bf16.msra.mxu0 0
        %3660 = vmatprep.subr.bf16.mxu0 0
        %3661 = vmatpush1.bf16.msra.mxu0 0
        %3662 = vmatprep.subr.bf16.mxu0 0
        %3663 = vmatpush1.bf16.msra.mxu0 0
        %3664 = vmatprep.subr.bf16.mxu0 0
        %3665 = vmatpush1.bf16.msra.mxu0 0
        %3666 = vmatprep.subr.bf16.mxu0 0
        %3667 = vmatpush1.bf16.msra.mxu0 0
        %3668 = vmatprep.subr.bf16.mxu0 0
        %3669 = vmatpush1.bf16.msra.mxu0 0
        %3670 = vmatprep.subr.bf16.mxu0 0
        %3671 = vmatpush1.bf16.msra.mxu0 0
        %3672 = vmatprep.subr.bf16.mxu0 0
        %3673 = vmatpush1.bf16.msra.mxu0 0
        %3674 = vmatprep.subr.bf16.mxu0 0
        %3675 = vmatpush1.bf16.msra.mxu0 0
        %3676 = vmatprep.subr.bf16.mxu0 0
        %3677 = vmatpush1.bf16.msra.mxu0 0
        %3678 = vmatprep.subr.bf16.mxu0 0
        %3679 = vmatpush1.bf16.msra.mxu0 0
        %3680 = vmatprep.subr.bf16.mxu0 0
        %3681 = vmatpush1.bf16.msra.mxu0 0
        %3682 = vmatprep.subr.bf16.mxu0 0
        %3683 = vmatpush1.bf16.msra.mxu0 0
        %3684 = vmatprep.subr.bf16.mxu0 0
        %3685 = vmatpush1.bf16.msra.mxu0 0
        %3686 = vmatprep.subr.bf16.mxu0 0
        %3687 = vmatpush1.bf16.msra.mxu0 0
        %3688 = vmatprep.mubr.bf16.mxu0 0
        %3689 = vmatmul.mubr.bf16.gmra.mrb[0].mxu0 %v3651
        %v3690 = vpop.f32.mrb[0].mxu0
        %v3691 = vadd.f32 0.0, %v3690
        %v3692 = vpop.f32.mrb[0].mxu0
        %v3693 = vpop.f32.mrb[0].mxu0
        %v3694 = vpop.f32.mrb[0].mxu0
        %3695 = vdwg.mxu0
        %v3697 = vsel %vm1677, %v3553, 0
        %v3700 = vsel %vm1931, %v3557, 0
        %3702 = vmatprep.subr.bf16.mxu0 0
        %3703 = vmatpush1.bf16.msra.mxu0 %v3700
        %3704 = vmatprep.subr.bf16.mxu0 0
        %3705 = vmatpush1.bf16.msra.mxu0 0
        %3706 = vmatprep.subr.bf16.mxu0 0
        %3707 = vmatpush1.bf16.msra.mxu0 0
        %3708 = vmatprep.subr.bf16.mxu0 0
        %3709 = vmatpush1.bf16.msra.mxu0 0
        %3710 = vmatprep.subr.bf16.mxu0 0
        %3711 = vmatpush1.bf16.msra.mxu0 0
        %3712 = vmatprep.subr.bf16.mxu0 0
        %3713 = vmatpush1.bf16.msra.mxu0 0
        %3714 = vmatprep.subr.bf16.mxu0 0
        %3715 = vmatpush1.bf16.msra.mxu0 0
        %3716 = vmatprep.subr.bf16.mxu0 0
        %3717 = vmatpush1.bf16.msra.mxu0 0
        %3718 = vmatprep.subr.bf16.mxu0 0
        %3719 = vmatpush1.bf16.msra.mxu0 0
        %3720 = vmatprep.subr.bf16.mxu0 0
        %3721 = vmatpush1.bf16.msra.mxu0 0
        %3722 = vmatprep.subr.bf16.mxu0 0
        %3723 = vmatpush1.bf16.msra.mxu0 0
        %3724 = vmatprep.subr.bf16.mxu0 0
        %3725 = vmatpush1.bf16.msra.mxu0 0
        %3726 = vmatprep.subr.bf16.mxu0 0
        %3727 = vmatpush1.bf16.msra.mxu0 0
        %3728 = vmatprep.subr.bf16.mxu0 0
        %3729 = vmatpush1.bf16.msra.mxu0 0
        %3730 = vmatprep.subr.bf16.mxu0 0
        %3731 = vmatpush1.bf16.msra.mxu0 0
        %3732 = vmatprep.subr.bf16.mxu0 0
        %3733 = vmatpush1.bf16.msra.mxu0 0
        %3734 = vmatprep.mubr.bf16.mxu0 0
        %3735 = vmatmul.mubr.bf16.gmra.mrb[0].mxu0 %v3697
        %v3736 = vpop.f32.mrb[0].mxu0
        %v3737 = vadd.f32 0.0, %v3736
        %v3738 = vpop.f32.mrb[0].mxu0
        %v3739 = vpop.f32.mrb[0].mxu0
        %v3740 = vpop.f32.mrb[0].mxu0
        %3741 = vdwg.mxu0
        %v3742 = vpack.c.bf16 %v3599, %v3599
        %v3743 = vpack.c.bf16 %v3645, %v3645
        %v3744 = vpack.c.bf16 %v3691, %v3691
        %v3745 = vpack.c.bf16 %v3737, %v3737
        %s3746 = scalar_lea.vmem %s13, 16
        %v3747 = vld [vmem:[%s3746] sm:$0xf]
        %v3748 = vld [vmem:[%s3746 + $0x4] sm:$0xf]
        %v3749 = vld [vmem:[%s3746 + $0x8] sm:$0xf]
        %v3750 = vld [vmem:[%s3746 + $0xc] sm:$0xf]
        %v3752 = vsel %vm1677, %v3742, 0
        %v3755 = vsel %vm1931, %v3747, 0
        %3757 = vmatprep.subr.bf16.mxu0 0
        %3758 = vmatpush1.bf16.msra.mxu0 %v3755
        %3759 = vmatprep.subr.bf16.mxu0 0
        %3760 = vmatpush1.bf16.msra.mxu0 0
        %3761 = vmatprep.subr.bf16.mxu0 0
        %3762 = vmatpush1.bf16.msra.mxu0 0
        %3763 = vmatprep.subr.bf16.mxu0 0
        %3764 = vmatpush1.bf16.msra.mxu0 0
        %3765 = vmatprep.subr.bf16.mxu0 0
        %3766 = vmatpush1.bf16.msra.mxu0 0
        %3767 = vmatprep.subr.bf16.mxu0 0
        %3768 = vmatpush1.bf16.msra.mxu0 0
        %3769 = vmatprep.subr.bf16.mxu0 0
        %3770 = vmatpush1.bf16.msra.mxu0 0
        %3771 = vmatprep.subr.bf16.mxu0 0
        %3772 = vmatpush1.bf16.msra.mxu0 0
        %3773 = vmatprep.subr.bf16.mxu0 0
        %3774 = vmatpush1.bf16.msra.mxu0 0
        %3775 = vmatprep.subr.bf16.mxu0 0
        %3776 = vmatpush1.bf16.msra.mxu0 0
        %3777 = vmatprep.subr.bf16.mxu0 0
        %3778 = vmatpush1.bf16.msra.mxu0 0
        %3779 = vmatprep.subr.bf16.mxu0 0
        %3780 = vmatpush1.bf16.msra.mxu0 0
        %3781 = vmatprep.subr.bf16.mxu0 0
        %3782 = vmatpush1.bf16.msra.mxu0 0
        %3783 = vmatprep.subr.bf16.mxu0 0
        %3784 = vmatpush1.bf16.msra.mxu0 0
        %3785 = vmatprep.subr.bf16.mxu0 0
        %3786 = vmatpush1.bf16.msra.mxu0 0
        %3787 = vmatprep.subr.bf16.mxu0 0
        %3788 = vmatpush1.bf16.msra.mxu0 0
        %3789 = vmatprep.mubr.bf16.mxu0 0
        %3790 = vmatmul.mubr.bf16.gmra.mrb[0].mxu0 %v3752
        %v3791 = vpop.f32.mrb[0].mxu0
        %v3792 = vadd.f32 0.0, %v3791
        %v3793 = vpop.f32.mrb[0].mxu0
        %v3794 = vpop.f32.mrb[0].mxu0
        %v3795 = vpop.f32.mrb[0].mxu0
        %3796 = vdwg.mxu0
        %v3798 = vsel %vm1677, %v3743, 0
        %v3801 = vsel %vm1931, %v3748, 0
        %3803 = vmatprep.subr.bf16.mxu0 0
        %3804 = vmatpush1.bf16.msra.mxu0 %v3801
        %3805 = vmatprep.subr.bf16.mxu0 0
        %3806 = vmatpush1.bf16.msra.mxu0 0
        %3807 = vmatprep.subr.bf16.mxu0 0
        %3808 = vmatpush1.bf16.msra.mxu0 0
        %3809 = vmatprep.subr.bf16.mxu0 0
        %3810 = vmatpush1.bf16.msra.mxu0 0
        %3811 = vmatprep.subr.bf16.mxu0 0
        %3812 = vmatpush1.bf16.msra.mxu0 0
        %3813 = vmatprep.subr.bf16.mxu0 0
        %3814 = vmatpush1.bf16.msra.mxu0 0
        %3815 = vmatprep.subr.bf16.mxu0 0
        %3816 = vmatpush1.bf16.msra.mxu0 0
        %3817 = vmatprep.subr.bf16.mxu0 0
        %3818 = vmatpush1.bf16.msra.mxu0 0
        %3819 = vmatprep.subr.bf16.mxu0 0
        %3820 = vmatpush1.bf16.msra.mxu0 0
        %3821 = vmatprep.subr.bf16.mxu0 0
        %3822 = vmatpush1.bf16.msra.mxu0 0
        %3823 = vmatprep.subr.bf16.mxu0 0
        %3824 = vmatpush1.bf16.msra.mxu0 0
        %3825 = vmatprep.subr.bf16.mxu0 0
        %3826 = vmatpush1.bf16.msra.mxu0 0
        %3827 = vmatprep.subr.bf16.mxu0 0
        %3828 = vmatpush1.bf16.msra.mxu0 0
        %3829 = vmatprep.subr.bf16.mxu0 0
        %3830 = vmatpush1.bf16.msra.mxu0 0
        %3831 = vmatprep.subr.bf16.mxu0 0
        %3832 = vmatpush1.bf16.msra.mxu0 0
        %3833 = vmatprep.subr.bf16.mxu0 0
        %3834 = vmatpush1.bf16.msra.mxu0 0
        %3835 = vmatprep.mubr.bf16.mxu0 0
        %3836 = vmatmul.mubr.bf16.gmra.mrb[0].mxu0 %v3798
        %v3837 = vpop.f32.mrb[0].mxu0
        %v3838 = vadd.f32 0.0, %v3837
        %v3839 = vpop.f32.mrb[0].mxu0
        %v3840 = vpop.f32.mrb[0].mxu0
        %v3841 = vpop.f32.mrb[0].mxu0
        %3842 = vdwg.mxu0
        %v3844 = vsel %vm1677, %v3744, 0
        %v3847 = vsel %vm1931, %v3749, 0
        %3849 = vmatprep.subr.bf16.mxu0 0
        %3850 = vmatpush1.bf16.msra.mxu0 %v3847
        %3851 = vmatprep.subr.bf16.mxu0 0
        %3852 = vmatpush1.bf16.msra.mxu0 0
        %3853 = vmatprep.subr.bf16.mxu0 0
        %3854 = vmatpush1.bf16.msra.mxu0 0
        %3855 = vmatprep.subr.bf16.mxu0 0
        %3856 = vmatpush1.bf16.msra.mxu0 0
        %3857 = vmatprep.subr.bf16.mxu0 0
        %3858 = vmatpush1.bf16.msra.mxu0 0
        %3859 = vmatprep.subr.bf16.mxu0 0
        %3860 = vmatpush1.bf16.msra.mxu0 0
        %3861 = vmatprep.subr.bf16.mxu0 0
        %3862 = vmatpush1.bf16.msra.mxu0 0
        %3863 = vmatprep.subr.bf16.mxu0 0
        %3864 = vmatpush1.bf16.msra.mxu0 0
        %3865 = vmatprep.subr.bf16.mxu0 0
        %3866 = vmatpush1.bf16.msra.mxu0 0
        %3867 = vmatprep.subr.bf16.mxu0 0
        %3868 = vmatpush1.bf16.msra.mxu0 0
        %3869 = vmatprep.subr.bf16.mxu0 0
        %3870 = vmatpush1.bf16.msra.mxu0 0
        %3871 = vmatprep.subr.bf16.mxu0 0
        %3872 = vmatpush1.bf16.msra.mxu0 0
        %3873 = vmatprep.subr.bf16.mxu0 0
        %3874 = vmatpush1.bf16.msra.mxu0 0
        %3875 = vmatprep.subr.bf16.mxu0 0
        %3876 = vmatpush1.bf16.msra.mxu0 0
        %3877 = vmatprep.subr.bf16.mxu0 0
        %3878 = vmatpush1.bf16.msra.mxu0 0
        %3879 = vmatprep.subr.bf16.mxu0 0
        %3880 = vmatpush1.bf16.msra.mxu0 0
        %3881 = vmatprep.mubr.bf16.mxu0 0
        %3882 = vmatmul.mubr.bf16.gmra.mrb[0].mxu0 %v3844
        %v3883 = vpop.f32.mrb[0].mxu0
        %v3884 = vadd.f32 0.0, %v3883
        %v3885 = vpop.f32.mrb[0].mxu0
        %v3886 = vpop.f32.mrb[0].mxu0
        %v3887 = vpop.f32.mrb[0].mxu0
        %3888 = vdwg.mxu0
        %v3890 = vsel %vm1677, %v3745, 0
        %v3893 = vsel %vm1931, %v3750, 0
        %3895 = vmatprep.subr.bf16.mxu0 0
        %3896 = vmatpush1.bf16.msra.mxu0 %v3893
        %3897 = vmatprep.subr.bf16.mxu0 0
        %3898 = vmatpush1.bf16.msra.mxu0 0
        %3899 = vmatprep.subr.bf16.mxu0 0
        %3900 = vmatpush1.bf16.msra.mxu0 0
        %3901 = vmatprep.subr.bf16.mxu0 0
        %3902 = vmatpush1.bf16.msra.mxu0 0
        %3903 = vmatprep.subr.bf16.mxu0 0
        %3904 = vmatpush1.bf16.msra.mxu0 0
        %3905 = vmatprep.subr.bf16.mxu0 0
        %3906 = vmatpush1.bf16.msra.mxu0 0
        %3907 = vmatprep.subr.bf16.mxu0 0
        %3908 = vmatpush1.bf16.msra.mxu0 0
        %3909 = vmatprep.subr.bf16.mxu0 0
        %3910 = vmatpush1.bf16.msra.mxu0 0
        %3911 = vmatprep.subr.bf16.mxu0 0
        %3912 = vmatpush1.bf16.msra.mxu0 0
        %3913 = vmatprep.subr.bf16.mxu0 0
        %3914 = vmatpush1.bf16.msra.mxu0 0
        %3915 = vmatprep.subr.bf16.mxu0 0
        %3916 = vmatpush1.bf16.msra.mxu0 0
        %3917 = vmatprep.subr.bf16.mxu0 0
        %3918 = vmatpush1.bf16.msra.mxu0 0
        %3919 = vmatprep.subr.bf16.mxu0 0
        %3920 = vmatpush1.bf16.msra.mxu0 0
        %3921 = vmatprep.subr.bf16.mxu0 0
        %3922 = vmatpush1.bf16.msra.mxu0 0
        %3923 = vmatprep.subr.bf16.mxu0 0
        %3924 = vmatpush1.bf16.msra.mxu0 0
        %3925 = vmatprep.subr.bf16.mxu0 0
        %3926 = vmatpush1.bf16.msra.mxu0 0
        %3927 = vmatprep.mubr.bf16.mxu0 0
        %3928 = vmatmul.mubr.bf16.gmra.mrb[0].mxu0 %v3890
        %v3929 = vpop.f32.mrb[0].mxu0
        %v3930 = vadd.f32 0.0, %v3929
        %v3931 = vpop.f32.mrb[0].mxu0
        %v3932 = vpop.f32.mrb[0].mxu0
        %v3933 = vpop.f32.mrb[0].mxu0
        %3934 = vdwg.mxu0
        %v3935 = vsel %vm879, %v3792, 0.0
        %v3936 = vsel %vm879, %v3838, 0.0
        %v3937 = vadd.f32 %v3935, %v3936
        %v3938 = vsel %vm879, %v3884, 0.0
        %v3939 = vadd.f32 %v3937, %v3938
        %v3940 = vsel %vm879, %v3930, 0.0
        %v3941 = vadd.f32 %v3939, %v3940
        %s3942 = scalar_lea.vmem %s14, 1
        %v3943 = vld [vmem:[%s3942] sm:$0x1]
        %v3945 = vlaneseq
        %v3946 = vshrl.u32 %v3945, 7
        %v3947 = vsub.s32 0, %v3946
        %v3948 = vrot.slane %v3943, %v3947
        %v3950 = vadd.f32 %v3941, %v3948
        %v3951 = vadd.f32 %v3950, %v2539
        %s3952 = scalar_lea.vmem %s15, 1
        %v3953 = vld [vmem:[%s3952] sm:$0x1]
        %s3954 = scalar_lea.vmem %s16, 1
        %v3955 = vld [vmem:[%s3954] sm:$0x1]
        %v3956 = vsel %vm879, %v3951, 0.0
        %3957 = vadd.xlane.f32.xlu0 %v3956
        %v3958 = vpop.xlane.xlu0 %3957
        %v3959 = vmul.f32 %v3958, %v883
        %v3960 = vsub.f32 %v3951, %v3959
        %v3961 = vmul.f32 %v3960, %v3960
        %v3962 = vsel %vm879, %v3961, 0.0
        %3963 = vadd.xlane.f32.xlu0 %v3962
        %v3964 = vpop.xlane.xlu0 %3963
        %v3965 = vmul.f32 %v3964, %v883
        %v3966 = vadd.f32 %v3965, 1e-12
        %v3967 = vrsqrt.pop %v3966
        %v3968 = vmul.f32 %v3960, %v3967
        %v3970 = vlaneseq
        %v3971 = vshrl.u32 %v3970, 7
        %v3972 = vsub.s32 0, %v3971
        %v3973 = vrot.slane %v3953, %v3972
        %v3975 = vmul.f32 %v3968, %v3973
        %v3977 = vlaneseq
        %v3978 = vshrl.u32 %v3977, 7
        %v3979 = vsub.s32 0, %v3978
        %v3980 = vrot.slane %v3955, %v3979
        %v3982 = vadd.f32 %v3975, %v3980
        %v3983 = vpack.c.bf16 %v3982, %v3982
        %s3984 = scalar_lea.vmem %s17, 16
        %v3985 = vld [vmem:[%s3984] sm:$0xf]
        %v3986 = vld [vmem:[%s3984 + $0x4] sm:$0xf]
        %v3987 = vld [vmem:[%s3984 + $0x8] sm:$0xf]
        %v3988 = vld [vmem:[%s3984 + $0xc] sm:$0xf]
        %s3989 = scalar_lea.vmem %s18, 1
        %v3990 = vld [vmem:[%s3989] sm:$0x1]
        %v3992 = vlaneseq
        %v3993 = vshrl.u32 %v3992, 7
        %v3994 = vsub.s32 0, %v3993
        %v3995 = vrot.slane %v3990, %v3994
        %v4001 = vunpack.c.l.b16 %v3985
        %v4002 = vunpack.c.l.b16 %v3986
        %v4003 = vunpack.c.l.b16 %v3987
        %v4004 = vunpack.c.l.b16 %v3988
        %v4005 = vpack.c.b16 %v4002, %v4001
        %v4006 = vpack.c.b16 %v4004, %v4003
        %v4010 = vsel %vm879, %v3983, 0
        %4012 = vmatprep.subr.bf16.mxu0 0
        %4013 = vmatpush1.bf16.msra.mxu0 %v4005
        %4014 = vmatprep.subr.bf16.mxu0 0
        %4015 = vmatpush1.bf16.msra.mxu0 %v4006
        %4016 = vmatprep.subr.bf16.mxu0 0
        %4017 = vmatpush1.bf16.msra.mxu0 0
        %4018 = vmatprep.subr.bf16.mxu0 0
        %4019 = vmatpush1.bf16.msra.mxu0 0
        %4020 = vmatprep.subr.bf16.mxu0 0
        %4021 = vmatpush1.bf16.msra.mxu0 0
        %4022 = vmatprep.subr.bf16.mxu0 0
        %4023 = vmatpush1.bf16.msra.mxu0 0
        %4024 = vmatprep.subr.bf16.mxu0 0
        %4025 = vmatpush1.bf16.msra.mxu0 0
        %4026 = vmatprep.subr.bf16.mxu0 0
        %4027 = vmatpush1.bf16.msra.mxu0 0
        %4028 = vmatprep.subr.bf16.mxu0 0
        %4029 = vmatpush1.bf16.msra.mxu0 0
        %4030 = vmatprep.subr.bf16.mxu0 0
        %4031 = vmatpush1.bf16.msra.mxu0 0
        %4032 = vmatprep.subr.bf16.mxu0 0
        %4033 = vmatpush1.bf16.msra.mxu0 0
        %4034 = vmatprep.subr.bf16.mxu0 0
        %4035 = vmatpush1.bf16.msra.mxu0 0
        %4036 = vmatprep.subr.bf16.mxu0 0
        %4037 = vmatpush1.bf16.msra.mxu0 0
        %4038 = vmatprep.subr.bf16.mxu0 0
        %4039 = vmatpush1.bf16.msra.mxu0 0
        %4040 = vmatprep.subr.bf16.mxu0 0
        %4041 = vmatpush1.bf16.msra.mxu0 0
        %4042 = vmatprep.subr.bf16.mxu0 0
        %4043 = vmatpush1.bf16.msra.mxu0 0
        %4044 = vmatprep.mubr.bf16.mxu0 0
        %4045 = vmatmul.mubr.bf16.gmra.mrb[0].mxu0 %v4010
        %v4046 = vpop.f32.mrb[0].mxu0
        %v4047 = vadd.f32 %v3995, %v4046
        %v4048 = vpop.f32.mrb[0].mxu0
        %v4049 = vpop.f32.mrb[0].mxu0
        %v4050 = vpop.f32.mrb[0].mxu0
        %4051 = vdwg.mxu0
        %v4052 = vmul.f32 %v4047, 0.5
        %v4053 = vmul.f32 %v4047, 0.044715
        %v4054 = vmul.f32 %v4053, %v4047
        %v4055 = vmul.f32 %v4054, %v4047
        %v4056 = vadd.f32 %v4047, %v4055
        %v4057 = vmul.f32 %v4056, 0.7978846
        %v4058 = vtanh.pop %v4057
        %v4059 = vadd.f32 %v4058, 1.0
        %v4060 = vmul.f32 %v4052, %v4059
        %v4061 = vpack.c.bf16 %v4060, %v4060
        %s4062 = scalar_lea.vmem %s19, 32
        %v4063 = vld [vmem:[%s4062] sm:$0xf]
        %v4064 = vld [vmem:[%s4062 + $0x4] sm:$0xf]
        %v4065 = vld [vmem:[%s4062 + $0x8] sm:$0xf]
        %v4066 = vld [vmem:[%s4062 + $0xc] sm:$0xf]
        %v4067 = vld [vmem:[%s4062 + $0x10] sm:$0xf]
        %v4068 = vld [vmem:[%s4062 + $0x14] sm:$0xf]
        %v4069 = vld [vmem:[%s4062 + $0x18] sm:$0xf]
        %v4070 = vld [vmem:[%s4062 + $0x1c] sm:$0xf]
        %s4071 = scalar_lea.vmem %s20, 1
        %v4072 = vld [vmem:[%s4071] sm:$0x1]
        %v4074 = vlaneseq
        %v4075 = vshrl.u32 %v4074, 7
        %v4076 = vsub.s32 0, %v4075
        %v4077 = vrot.slane %v4072, %v4076
        %v4087 = vunpack.c.l.b16 %v4063
        %v4088 = vunpack.c.l.b16 %v4064
        %v4089 = vunpack.c.l.b16 %v4065
        %v4090 = vunpack.c.l.b16 %v4066
        %v4091 = vunpack.c.l.b16 %v4067
        %v4092 = vunpack.c.l.b16 %v4068
        %v4093 = vunpack.c.l.b16 %v4069
        %v4094 = vunpack.c.l.b16 %v4070
        %v4095 = vpack.c.b16 %v4088, %v4087
        %v4096 = vpack.c.b16 %v4090, %v4089
        %v4097 = vpack.c.b16 %v4092, %v4091
        %v4098 = vpack.c.b16 %v4094, %v4093
        %v4104 = vsel %vm2466, %v4061, 0
        %4106 = vmatprep.subr.bf16.mxu0 0
        %4107 = vmatpush1.bf16.msra.mxu0 %v4095
        %4108 = vmatprep.subr.bf16.mxu0 0
        %4109 = vmatpush1.bf16.msra.mxu0 %v4096
        %4110 = vmatprep.subr.bf16.mxu0 0
        %4111 = vmatpush1.bf16.msra.mxu0 %v4097
        %4112 = vmatprep.subr.bf16.mxu0 0
        %4113 = vmatpush1.bf16.msra.mxu0 %v4098
        %4114 = vmatprep.subr.bf16.mxu0 0
        %4115 = vmatpush1.bf16.msra.mxu0 0
        %4116 = vmatprep.subr.bf16.mxu0 0
        %4117 = vmatpush1.bf16.msra.mxu0 0
        %4118 = vmatprep.subr.bf16.mxu0 0
        %4119 = vmatpush1.bf16.msra.mxu0 0
        %4120 = vmatprep.subr.bf16.mxu0 0
        %4121 = vmatpush1.bf16.msra.mxu0 0
        %4122 = vmatprep.subr.bf16.mxu0 0
        %4123 = vmatpush1.bf16.msra.mxu0 0
        %4124 = vmatprep.subr.bf16.mxu0 0
        %4125 = vmatpush1.bf16.msra.mxu0 0
        %4126 = vmatprep.subr.bf16.mxu0 0
        %4127 = vmatpush1.bf16.msra.mxu0 0
        %4128 = vmatprep.subr.bf16.mxu0 0
        %4129 = vmatpush1.bf16.msra.mxu0 0
        %4130 = vmatprep.subr.bf16.mxu0 0
        %4131 = vmatpush1.bf16.msra.mxu0 0
        %4132 = vmatprep.subr.bf16.mxu0 0
        %4133 = vmatpush1.bf16.msra.mxu0 0
        %4134 = vmatprep.subr.bf16.mxu0 0
        %4135 = vmatpush1.bf16.msra.mxu0 0
        %4136 = vmatprep.subr.bf16.mxu0 0
        %4137 = vmatpush1.bf16.msra.mxu0 0
        %4138 = vmatprep.mubr.bf16.mxu0 0
        %4139 = vmatmul.mubr.bf16.gmra.mrb[0].mxu0 %v4104
        %v4140 = vpop.f32.mrb[0].mxu0
        %v4141 = vadd.f32 %v4077, %v4140
        %v4142 = vpop.f32.mrb[0].mxu0
        %v4143 = vpop.f32.mrb[0].mxu0
        %v4144 = vpop.f32.mrb[0].mxu0
        %4145 = vdwg.mxu0
        %v4146 = vadd.f32 %v4141, %v3982
        %s4147 = scalar_lea.vmem %s21, 1
        %v4148 = vld [vmem:[%s4147] sm:$0x1]
        %s4149 = scalar_lea.vmem %s22, 1
        %v4150 = vld [vmem:[%s4149] sm:$0x1]
        %v4151 = vsel %vm879, %v4146, 0.0
        %4152 = vadd.xlane.f32.xlu0 %v4151
        %v4153 = vpop.xlane.xlu0 %4152
        %v4154 = vmul.f32 %v4153, %v883
        %v4155 = vsub.f32 %v4146, %v4154
        %v4156 = vmul.f32 %v4155, %v4155
        %v4157 = vsel %vm879, %v4156, 0.0
        %4158 = vadd.xlane.f32.xlu0 %v4157
        %v4159 = vpop.xlane.xlu0 %4158
        %v4160 = vmul.f32 %v4159, %v883
        %v4161 = vadd.f32 %v4160, 1e-12
        %v4162 = vrsqrt.pop %v4161
        %v4163 = vmul.f32 %v4155, %v4162
        %v4165 = vlaneseq
        %v4166 = vshrl.u32 %v4165, 7
        %v4167 = vsub.s32 0, %v4166
        %v4168 = vrot.slane %v4148, %v4167
        %v4170 = vmul.f32 %v4163, %v4168
        %v4172 = vlaneseq
        %v4173 = vshrl.u32 %v4172, 7
        %v4174 = vsub.s32 0, %v4173
        %v4175 = vrot.slane %v4150, %v4174
        %v4177 = vadd.f32 %v4170, %v4175
        %v4178 = vpack.c.bf16 %v4177, %v4177
        %v4179 = vld [vmem:[%s23] sm:$0xf]
        %v4180 = vld [vmem:[%s23 + $0x4] sm:$0xf]
        %v4181 = vld [vmem:[%s23 + $0x8] sm:$0xf]
        %v4182 = vld [vmem:[%s23 + $0xc] sm:$0xf]
        %v4183 = vld [vmem:[%s24] sm:$0x1]
        %v4188 = vunpack.c.l.b16 %v4179
        %v4189 = vunpack.c.l.b16 %v4180
        %v4190 = vunpack.c.l.b16 %v4181
        %v4191 = vunpack.c.l.b16 %v4182
        %v4192 = vpack.c.b16 %v4189, %v4188
        %v4193 = vpack.c.b16 %v4191, %v4190
        %v4197 = vsel %vm879, %v4178, 0
        %4199 = vmatprep.subr.bf16.mxu0 0
        %4200 = vmatpush1.bf16.msra.mxu0 %v4192
        %4201 = vmatprep.subr.bf16.mxu0 0
        %4202 = vmatpush1.bf16.msra.mxu0 %v4193
        %4203 = vmatprep.subr.bf16.mxu0 0
        %4204 = vmatpush1.bf16.msra.mxu0 0
        %4205 = vmatprep.subr.bf16.mxu0 0
        %4206 = vmatpush1.bf16.msra.mxu0 0
        %4207 = vmatprep.subr.bf16.mxu0 0
        %4208 = vmatpush1.bf16.msra.mxu0 0
        %4209 = vmatprep.subr.bf16.mxu0 0
        %4210 = vmatpush1.bf16.msra.mxu0 0
        %4211 = vmatprep.subr.bf16.mxu0 0
        %4212 = vmatpush1.bf16.msra.mxu0 0
        %4213 = vmatprep.subr.bf16.mxu0 0
        %4214 = vmatpush1.bf16.msra.mxu0 0
        %4215 = vmatprep.subr.bf16.mxu0 0
        %4216 = vmatpush1.bf16.msra.mxu0 0
        %4217 = vmatprep.subr.bf16.mxu0 0
        %4218 = vmatpush1.bf16.msra.mxu0 0
        %4219 = vmatprep.subr.bf16.mxu0 0
        %4220 = vmatpush1.bf16.msra.mxu0 0
        %4221 = vmatprep.subr.bf16.mxu0 0
        %4222 = vmatpush1.bf16.msra.mxu0 0
        %4223 = vmatprep.subr.bf16.mxu0 0
        %4224 = vmatpush1.bf16.msra.mxu0 0
        %4225 = vmatprep.subr.bf16.mxu0 0
        %4226 = vmatpush1.bf16.msra.mxu0 0
        %4227 = vmatprep.subr.bf16.mxu0 0
        %4228 = vmatpush1.bf16.msra.mxu0 0
        %4229 = vmatprep.subr.bf16.mxu0 0
        %4230 = vmatpush1.bf16.msra.mxu0 0
        %4231 = vmatprep.mubr.bf16.mxu0 0
        %4232 = vmatmul.mubr.bf16.gmra.mrb[0].mxu0 %v4197
        %v4233 = vpop.f32.mrb[0].mxu0
        %v4234 = vadd.f32 %v4183, %v4233
        %v4235 = vpop.f32.mrb[0].mxu0
        %v4236 = vpop.f32.mrb[0].mxu0
        %v4237 = vpop.f32.mrb[0].mxu0
        %4238 = vdwg.mxu0
        %v4239 = vtanh.pop %v4234
        %v4240 = vpack.c.bf16 %v4239, %v4239
        %v4241 = vld [vmem:[%s25] sm:$0xf]
        %v4242 = vld [vmem:[%s25 + $0x4] sm:$0xf]
        %v4243 = vld [vmem:[%s25 + $0x8] sm:$0xf]
        %v4244 = vld [vmem:[%s25 + $0xc] sm:$0xf]
        %v4245 = vld [vmem:[%s26] sm:$0x1]
        %v4250 = vunpack.c.l.b16 %v4241
        %v4251 = vunpack.c.l.b16 %v4242
        %v4252 = vunpack.c.l.b16 %v4243
        %v4253 = vunpack.c.l.b16 %v4244
        %v4254 = vpack.c.b16 %v4251, %v4250
        %v4255 = vpack.c.b16 %v4253, %v4252
        %v4259 = vsel %vm879, %v4240, 0
        %4261 = vmatprep.subr.bf16.mxu0 0
        %4262 = vmatpush1.bf16.msra.mxu0 %v4254
        %4263 = vmatprep.subr.bf16.mxu0 0
        %4264 = vmatpush1.bf16.msra.mxu0 %v4255
        %4265 = vmatprep.subr.bf16.mxu0 0
        %4266 = vmatpush1.bf16.msra.mxu0 0
        %4267 = vmatprep.subr.bf16.mxu0 0
        %4268 = vmatpush1.bf16.msra.mxu0 0
        %4269 = vmatprep.subr.bf16.mxu0 0
        %4270 = vmatpush1.bf16.msra.mxu0 0
        %4271 = vmatprep.subr.bf16.mxu0 0
        %4272 = vmatpush1.bf16.msra.mxu0 0
        %4273 = vmatprep.subr.bf16.mxu0 0
        %4274 = vmatpush1.bf16.msra.mxu0 0
        %4275 = vmatprep.subr.bf16.mxu0 0
        %4276 = vmatpush1.bf16.msra.mxu0 0
        %4277 = vmatprep.subr.bf16.mxu0 0
        %4278 = vmatpush1.bf16.msra.mxu0 0
        %4279 = vmatprep.subr.bf16.mxu0 0
        %4280 = vmatpush1.bf16.msra.mxu0 0
        %4281 = vmatprep.subr.bf16.mxu0 0
        %4282 = vmatpush1.bf16.msra.mxu0 0
        %4283 = vmatprep.subr.bf16.mxu0 0
        %4284 = vmatpush1.bf16.msra.mxu0 0
        %4285 = vmatprep.subr.bf16.mxu0 0
        %4286 = vmatpush1.bf16.msra.mxu0 0
        %4287 = vmatprep.subr.bf16.mxu0 0
        %4288 = vmatpush1.bf16.msra.mxu0 0
        %4289 = vmatprep.subr.bf16.mxu0 0
        %4290 = vmatpush1.bf16.msra.mxu0 0
        %4291 = vmatprep.subr.bf16.mxu0 0
        %4292 = vmatpush1.bf16.msra.mxu0 0
        %4293 = vmatprep.mubr.bf16.mxu0 0
        %4294 = vmatmul.mubr.bf16.gmra.mrb[0].mxu0 %v4259
        %v4295 = vpop.f32.mrb[0].mxu0
        %v4296 = vadd.f32 %v4245, %v4295
        %v4297 = vpop.f32.mrb[0].mxu0
        %v4298 = vpop.f32.mrb[0].mxu0
        %v4299 = vpop.f32.mrb[0].mxu0
        %4300 = vdwg.mxu0
        %v4301 = vlaneseq
        %v4302 = vand.u32 %v4301, 127
        %vm4303 = vcmp.lt.s32.totalorder %v4302, 8
        %v4304 = vsel %vm4303, %v4296, -1e+30
        %vm4305 = vcmask 1040384
        %v4306 = vsel %vm4305, %v4304, -inf
        %4307 = vmax.xlane.f32.xlu0 %v4306
        %v4308 = vpop.xlane.xlu0 %4307
        %v4309 = vsub.f32 %v4304, %v4308
        %v4310 = vmul.f32 %v4309, 1.442695
        %v4311 = vpow.pop %v4310
        %v4312 = vsel %vm4305, %v4311, 0.0
        %4313 = vadd.xlane.f32.xlu0 %v4312
        %v4314 = vpop.xlane.xlu0 %4313
        %v4315 = vrcp.pop %v4314
        %v4316 = vmul.f32 %v4311, %v4315
        %4317 = vst [vmem:[%s820] sm:$0x1] %v4316
        %s4318 = sand.u32 %s622, 1
        %s4319 = scalar_lea.sflag [#allocation4], %s4318
        %s4320 = sand.u32 %s622, 1
        %s4321 = scalar_lea.vmem [#allocation6], %s4320
        // Predicated region
        $region133: #{ppdpp_forward.1} parent=127 // pred_check
          %p4322 = pneg %p632
        $region134: #{ppdpp_forward.1} parent=127 // pred_check_branch
          %4324 = sbr.rel (%p4322) target = $region136
        $region135: #{ppdpp_forward.1} parent=127 // pred_region
          %s4326 = ssub.s32 16, 16
          %4327 = vsyncadd %s4319, %s4326
          %s4328 = smul.addr %s42, 16
          %s4329 = scalar_lea.hbm %s27, %s4328
          %s4331 = sshll.u32 %s4321, 4
          %s4332 = int_to_ptr.vmem [resolvable:$true] %s4331
          %4334 = dma.vmem_to_hbm [thread:$0]  %s4332, 16, %s4329, %s4319
        $region136: #{ppdpp_forward.1} parent=127 // pred_fallthru
          _
      $region128: #{ppdpp_forward.1} parent=5 // pred_fallthru
        _
      %p4335 = scmp.le.s32.totalorder 2, %s37
      // Predicated region
      $region137: #{ppdpp_forward.1} parent=5 // pred_check
        %p4336 = pneg %p4335
      $region138: #{ppdpp_forward.1} parent=5 // pred_check_branch
        %4338 = sbr.rel (%p4336) target = $region140
      $region139: #{ppdpp_forward.1} parent=5 // pred_region
        %s4339 = ssub.s32 %s37, 2
        // Predicated region
        $region141: #{ppdpp_forward.1} parent=139 // pred_check
          %p4340 = pneg %p638
        $region142: #{ppdpp_forward.1} parent=139 // pred_check_branch
          %4342 = sbr.rel (%p4340) target = $region144
        $region143: #{ppdpp_forward.1} parent=139 // pred_region
          %s4343 = sand.u32 %s623, 1
          %s4344 = scalar_lea.sflag [#allocation4], %s4343
          %s4345 = sand.u32 %s623, 1
          %s4346 = scalar_lea.vmem [#allocation6], %s4345
          %4347 = dma.done %s4344, 16
        $region144: #{ppdpp_forward.1} parent=139 // pred_fallthru
          _
      $region140: #{ppdpp_forward.1} parent=5 // pred_fallthru
        _
    $region6: #{ppdpp_forward.1} parent=1 // loop_footer
      %s41 = sadd.s32 1, %s37
    $region7: #{ppdpp_forward.1} parent=1 // loop_footer_branch
      %36 = sbr.rel target = $region3
    $region8: #{ppdpp_forward.1} parent=1 // loop_exit
      _
    %4348 = vsyncpa [#allocation4], 1
    %s4349 = scalar_lea.sflag [#allocation4], 1
    %4350 = vsyncpa %s4349, 1
    %4351 = vsyncpa [#allocation5], 1
    %s4352 = scalar_lea.sflag [#allocation5], 1
    %4353 = vsyncpa %s4352, 1

</llo_original>
